<compile_context>
chip_gen: v6e
topology: v6e:2x2x1
jax: 0.10.0
libtpu: 0.0.40
codegen_flags: <defaults>
</compile_context>

<pallas_src>
import functools

import numpy as np
import jax
import jax.numpy as jnp
from jax.experimental import pallas as pl
from jax.experimental.pallas import tpu as pltpu


# ----------------------------------------------------------------------------
# Shared forward math (pure jnp; used by the Pallas kernel AND the reference)
# ----------------------------------------------------------------------------
def _forward_math(vals, rep_dim):
    """vals: flat tuple of 44 arrays in the order produced by _flatten_inputs."""
    (a_n2e, a_e2n,
     a_e2c0, a_pool0, a_c2e0,
     a_e2c1, a_pool1, a_c2e1,
     node_x, edge_x, cyc0_x, cyc1_x,
     ee_w0, ee_b0, ee_w1, ee_b1,          # Edge_node.edge_mlp_0   (2 layers)
     nn_w0, nn_b0, nn_w1, nn_b1,          # Edge_node.node_mlp     (2 layers)
     c2_w0, c2_b0, c2_w1, c2_b1,          # Edge_cycle.cycle_mlp_2 (2 layers, final ReLU)
     cm_w0, cm_b0, cm_w1, cm_b1, cm_w2, cm_b2,   # Edge_cycle.cycle_mlp (3 layers)
     ce_w0, ce_b0, ce_w1, ce_b1,          # Edge_cycle.edge_mlp    (2 layers)
     em_w0, em_b0, em_w1, em_b1, em_w2, em_b2,   # ConvLayer.edge_mlp   (3 layers)
     a0_w, a0_b, a1_w, a1_b) = vals       # Autobahn (stacked [w1;w2]) per cycle size

    def dot(a, b):
        return jnp.dot(a, b, preferred_element_type=jnp.float32)

    def relu(x):
        return jnp.maximum(x, 0.0)

    def split_dot(parts, w):
        # concat(parts, -1) @ w  ==  sum_i parts[i] @ w[off_i : off_i + k_i]
        acc, off = None, 0
        for p_ in parts:
            k = p_.shape[-1]
            term = dot(p_, w[off:off + k, :])
            off += k
            acc = term if acc is None else acc + term
        return acc

    # ---------------- Edge_node ----------------
    node2edge = dot(a_n2e, node_x)                                   # gather node -> edge
    h = relu(split_dot([edge_x, node2edge], ee_w0) + ee_b0)
    edge_out = dot(h, ee_w1) + ee_b1                                 # [rows, R]
    edge2node = dot(a_e2n, edge_out)                                 # gather edge -> node
    h = relu(split_dot([node_x, edge2node], nn_w0) + nn_b0)
    node_out = dot(h, nn_w1) + nn_b1                                 # [rows, R]

    # ---------------- Edge_cycle (both cycle sizes, unrolled) ----------------
    def cycle_branch(a_e2c, a_pool, cyc_x, aut_w, aut_b):
        edge2cycle = dot(a_e2c, edge_x)                              # gather edge -> cycle
        h = relu(split_dot([cyc_x, edge2cycle], c2_w0) + c2_b0)
        cycle_new = relu(dot(h, c2_w1) + c2_b1)                      # cycle_mlp_2 ends in ReLU
        pooled = dot(a_pool, cycle_new)                              # within-cycle pool
        # Autobahn: permutation-equivariant linear; stacked weight [w1; w2] (concat along K)
        aut = split_dot([cycle_new, pooled], aut_w) + aut_b          # [rows, C*R]
        # cycle_linmap (= [cycle_new | pooled]) cat aut  -> cycle_mlp, via split-weight dots
        h = relu(split_dot([cycle_new, pooled, aut], cm_w0) + cm_b0)
        h = relu(dot(h, cm_w1) + cm_b1)
        return dot(h, cm_w2) + cm_b2                                 # [rows, R]

    cyc_out0 = cycle_branch(a_e2c0, a_pool0, cyc0_x, a0_w, a0_b)
    cyc_out1 = cycle_branch(a_e2c1, a_pool1, cyc1_x, a1_w, a1_b)

    # cat(*cycles_out) then gather cycle -> edge, split per cycle size
    cycle2edge = dot(a_c2e0, cyc_out0) + dot(a_c2e1, cyc_out1)
    h = relu(split_dot([edge_x, cycle2edge], ce_w0) + ce_b0)
    edge_out2 = dot(h, ce_w1) + ce_b1                                # [rows, R]

    # ---------------- ConvLayer top ----------------
    h = relu(split_dot([edge_out, edge_out2], em_w0) + em_b0)
    h = relu(dot(h, em_w1) + em_b1)
    edge_final = dot(h, em_w2) + em_b2                               # [rows, R]

    return node_out, edge_final, cyc_out0, cyc_out1


# ----------------------------------------------------------------------------
# The single fused Pallas kernel
# ----------------------------------------------------------------------------
def _conv_layer_kernel(*refs, rep_dim):
    in_refs, o_ref = refs[:-1], refs[-1]
    vals = tuple(r[...] for r in in_refs)
    node_out, edge_final, cyc_out0, cyc_out1 = _forward_math(vals, rep_dim)
    # One lane-dense [pad_rows, 4R] = [16, 128] store: node | edge | cyc0 | cyc1.
    o_ref[...] = jnp.concatenate([node_out, edge_final, cyc_out0, cyc_out1], axis=-1)


# ----------------------------------------------------------------------------
# Parameter init (deterministic, in-script)
# ----------------------------------------------------------------------------
def init_linear(key, din, dout):
    kw, kb = jax.random.split(key)
    scale = 1.0 / np.sqrt(din)
    w = jax.random.uniform(kw, (din, dout), jnp.float32, -scale, scale)
    b = jax.random.uniform(kb, (dout,), jnp.float32, -scale, scale)
    return w, b


def init_mlp(key, dims):
    keys = jax.random.split(key, len(dims) - 1)
    return [init_linear(k, dims[i], dims[i + 1]) for i, k in enumerate(keys)]


def init_conv_layer(key, rep_dim, num_channels, cycle_sizes):
    R, H, C = rep_dim, rep_dim * 2, num_channels      # _inner_mlp_mult = 2
    keys = jax.random.split(key, 6 + len(cycle_sizes))
    params = {
        # Edge_node
        "en_edge_mlp_0": init_mlp(keys[0], [2 * R, H, R]),           # get_mlp(2R, 2R, R, 2)
        "en_node_mlp": init_mlp(keys[1], [2 * R, H, R]),             # get_mlp(2R, 2R, R, 2)
        # Edge_cycle
        "ec_cycle_mlp_2": init_mlp(keys[2], [2 * R, H, R]),          # Lin-ReLU-Lin-ReLU
        "ec_cycle_mlp": init_mlp(keys[3], [(C + 2) * R, H, H, R]),   # get_mlp((C+2)R, 2R, R, 3)
        "ec_edge_mlp": init_mlp(keys[4], [2 * R, H, R]),             # get_mlp(2R, 2R, R, 2)
        # ConvLayer top
        "edge_mlp": init_mlp(keys[5], [2 * R, H, H, R]),             # get_mlp(2R, 2R, R, 3)
        "autobahn": [],
    }
    for i, _ in enumerate(cycle_sizes):
        k1, k2, k3 = jax.random.split(keys[6 + i], 3)
        w1, _ = init_linear(k1, R, C * R)
        w2, _ = init_linear(k2, R, C * R)
        b = jax.random.uniform(k3, (C * R,), jnp.float32, -0.1, 0.1)
        # Stack [w1; w2] along K so the kernel does one concat-folded matmul.
        params["autobahn"].append({"w": jnp.concatenate([w1, w2], axis=0), "b": b})
    return params


# ----------------------------------------------------------------------------
# Synthetic graph (deterministic incidence maps, all pre-padded to [16, 16])
# ----------------------------------------------------------------------------
def build_synthetic_graph(cycle_sizes, pad_rows=16):
    num_nodes = 8
    edges = [(0, 1), (1, 2), (2, 3), (3, 4), (4, 5), (5, 6), (6, 7), (7, 0), (0, 2), (3, 5)]
    E = len(edges)
    assert num_nodes <= pad_rows and E <= pad_rows

    # All incidence maps live on the shared padded row space [pad_rows, pad_rows];
    # padded rows / columns are zero so the gathers ignore them.
    a_n2e = np.zeros((pad_rows, pad_rows), np.float32)   # edges x nodes
    for e, (u, v) in enumerate(edges):
        a_n2e[e, u] = 1.0
        a_n2e[e, v] = 1.0
    a_e2n = np.zeros((pad_rows, pad_rows), np.float32)   # nodes x edges
    a_e2n[:num_nodes, :E] = a_n2e[:E, :num_nodes].T

    cycles_per_size = {
        5: [[0, 1, 2, 3, 4], [3, 4, 5, 6, 7]],
        6: [[0, 1, 2, 3, 4, 5], [2, 3, 4, 5, 6, 7]],
    }

    A_e2c, A_pool, A_c2e, rows_per_size = [], [], [], []
    for s in cycle_sizes:
        cycs = cycles_per_size[s]
        rows = len(cycs) * s
        assert rows <= pad_rows
        a_e2c = np.zeros((pad_rows, pad_rows), np.float32)   # cycle rows x edges
        a_pool = np.zeros((pad_rows, pad_rows), np.float32)  # within-cycle pooling
        a_c2e = np.zeros((pad_rows, pad_rows), np.float32)   # edges x cycle rows
        r = 0
        for nodes in cycs:
            nodeset = set(nodes)
            for j, v in enumerate(nodes):
                for e, (u, w) in enumerate(edges):
                    if u in nodeset and w in nodeset and (v == u or v == w):
                        a_e2c[r + j, e] = 1.0
                        a_c2e[e, r + j] = 1.0
            a_pool[r:r + s, r:r + s] = 1.0
            r += s
        A_e2c.append(jnp.asarray(a_e2c))
        A_pool.append(jnp.asarray(a_pool))
        A_c2e.append(jnp.asarray(a_c2e))
        rows_per_size.append(rows)

    return {
        "num_nodes": num_nodes,
        "num_edges": E,
        "pad_rows": pad_rows,
        "rows_per_size": rows_per_size,
        "A_n2e": jnp.asarray(a_n2e),
        "A_e2n": jnp.asarray(a_e2n),
        "A_e2c": A_e2c,
        "A_pool": A_pool,
        "A_c2e": A_c2e,
    }


# ----------------------------------------------------------------------------
# Flat argument assembly (single source of truth for the kernel arg order)
# ----------------------------------------------------------------------------
def _flatten_inputs(params, graph, node_pad, edge_pad, cyc0_pad, cyc1_pad):
    args = [
        graph["A_n2e"], graph["A_e2n"],
        graph["A_e2c"][0], graph["A_pool"][0], graph["A_c2e"][0],
        graph["A_e2c"][1], graph["A_pool"][1], graph["A_c2e"][1],
        node_pad, edge_pad, cyc0_pad, cyc1_pad,
    ]
    for name in ("en_edge_mlp_0", "en_node_mlp", "ec_cycle_mlp_2",
                 "ec_cycle_mlp", "ec_edge_mlp", "edge_mlp"):
        for w, b in params[name]:
            args += [w, b.reshape(1, -1)]
    for a in params["autobahn"]:
        args += [a["w"], a["b"].reshape(1, -1)]
    return args


def make_conv_layer_forward(params, graph, rep_dim):
    R = rep_dim
    pad_rows = graph["pad_rows"]
    num_nodes = graph["num_nodes"]
    num_edges = graph["num_edges"]
    rows0, rows1 = graph["rows_per_size"]

    kernel = functools.partial(_conv_layer_kernel, rep_dim=R)

    @jax.jit
    def forward(node_rep, edge_rep, cyc_rep0, cyc_rep1):
        def pad_r(x):
            return jnp.pad(x, ((0, pad_rows - x.shape[0]), (0, 0)))

        args = _flatten_inputs(params, graph, pad_r(node_rep),
                               pad_r(edge_rep), pad_r(cyc_rep0), pad_r(cyc_rep1))
        slab = pl.pallas_call(
            kernel,
            out_shape=jax.ShapeDtypeStruct((pad_rows, 4 * R), jnp.float32),
            in_specs=[pl.BlockSpec(memory_space=pltpu.MemorySpace.VMEM)] * len(args),
            out_specs=pl.BlockSpec(memory_space=pltpu.MemorySpace.VMEM),
        )(*args)
        node_out = slab[:num_nodes, 0:R]
        edge_out = slab[:num_edges, R:2 * R]
        cyc_out0 = slab[:rows0, 2 * R:3 * R]
        cyc_out1 = slab[:rows1, 3 * R:4 * R]
        return node_out, edge_out, (cyc_out0, cyc_out1)

    return forward


# ----------------------------------------------------------------------------
# Main
# ----------------------------------------------------------------------------
if __name__ == "__main__":
    rep_dim = 32
    num_channels = 2
    cycle_sizes = [5, 6]

    graph = build_synthetic_graph(cycle_sizes)

    key = jax.random.PRNGKey(0)
    k_params, k_node, k_edge, k_c0, k_c1 = jax.random.split(key, 5)
    params = init_conv_layer(k_params, rep_dim, num_channels, cycle_sizes)

    node_rep = jax.random.normal(k_node, (graph["num_nodes"], rep_dim), jnp.float32)
    edge_rep = jax.random.normal(k_edge, (graph["num_edges"], rep_dim), jnp.float32)
    cycles_rep = [
        jax.random.normal(k_c0, (graph["rows_per_size"][0], rep_dim), jnp.float32),
        jax.random.normal(k_c1, (graph["rows_per_size"][1], rep_dim), jnp.float32),
    ]

    forward = make_conv_layer_forward(params, graph, rep_dim)
    node_out, edge_out, cycles_out = forward(node_rep, edge_rep,
                                             cycles_rep[0], cycles_rep[1])
    jax.block_until_ready((node_out, edge_out, cycles_out))

    # Shape checks.
    assert node_out.shape == (graph["num_nodes"], rep_dim)
    assert edge_out.shape == (graph["num_edges"], rep_dim)
    assert cycles_out[0].shape == (graph["rows_per_size"][0], rep_dim)
    assert cycles_out[1].shape == (graph["rows_per_size"][1], rep_dim)

    # Pure-JAX reference (same math, no Pallas) for a correctness check.
    def pad_r(x):
        return jnp.pad(x, ((0, graph["pad_rows"] - x.shape[0]), (0, 0)))

    with jax.default_matmul_precision("float32"):
        ref_vals = tuple(_flatten_inputs(params, graph, pad_r(node_rep), pad_r(edge_rep),
                                         pad_r(cycles_rep[0]), pad_r(cycles_rep[1])))
        r_node, r_edge, r_c0, r_c1 = _forward_math(ref_vals, rep_dim)
        r_node, r_edge, r_c0, r_c1 = jax.block_until_ready((r_node, r_edge, r_c0, r_c1))

    tol = dict(rtol=5e-2, atol=5e-2)
    np.testing.assert_allclose(np.asarray(node_out),
                               np.asarray(r_node[:graph["num_nodes"]]), **tol)
    np.testing.assert_allclose(np.asarray(edge_out),
                               np.asarray(r_edge[:graph["num_edges"]]), **tol)
    np.testing.assert_allclose(np.asarray(cycles_out[0]),
                               np.asarray(r_c0[:graph["rows_per_size"][0]]), **tol)
    np.testing.assert_allclose(np.asarray(cycles_out[1]),
                               np.asarray(r_c1[:graph["rows_per_size"][1]]), **tol)

    print("KERNEL_OK")
</pallas_src>

<mosaic_0001>
module attributes {stable_mosaic.version = 11 : i64} {
  func.func @_conv_layer_kernel(%arg0: memref<16x16xf32, #tpu.memory_space<vmem>>, %arg1: memref<16x16xf32, #tpu.memory_space<vmem>>, %arg2: memref<16x16xf32, #tpu.memory_space<vmem>>, %arg3: memref<16x16xf32, #tpu.memory_space<vmem>>, %arg4: memref<16x16xf32, #tpu.memory_space<vmem>>, %arg5: memref<16x16xf32, #tpu.memory_space<vmem>>, %arg6: memref<16x16xf32, #tpu.memory_space<vmem>>, %arg7: memref<16x16xf32, #tpu.memory_space<vmem>>, %arg8: memref<16x32xf32, #tpu.memory_space<vmem>>, %arg9: memref<16x32xf32, #tpu.memory_space<vmem>>, %arg10: memref<16x32xf32, #tpu.memory_space<vmem>>, %arg11: memref<16x32xf32, #tpu.memory_space<vmem>>, %arg12: memref<64x64xf32, #tpu.memory_space<vmem>>, %arg13: memref<1x64xf32, #tpu.memory_space<vmem>>, %arg14: memref<64x32xf32, #tpu.memory_space<vmem>>, %arg15: memref<1x32xf32, #tpu.memory_space<vmem>>, %arg16: memref<64x64xf32, #tpu.memory_space<vmem>>, %arg17: memref<1x64xf32, #tpu.memory_space<vmem>>, %arg18: memref<64x32xf32, #tpu.memory_space<vmem>>, %arg19: memref<1x32xf32, #tpu.memory_space<vmem>>, %arg20: memref<64x64xf32, #tpu.memory_space<vmem>>, %arg21: memref<1x64xf32, #tpu.memory_space<vmem>>, %arg22: memref<64x32xf32, #tpu.memory_space<vmem>>, %arg23: memref<1x32xf32, #tpu.memory_space<vmem>>, %arg24: memref<128x64xf32, #tpu.memory_space<vmem>>, %arg25: memref<1x64xf32, #tpu.memory_space<vmem>>, %arg26: memref<64x64xf32, #tpu.memory_space<vmem>>, %arg27: memref<1x64xf32, #tpu.memory_space<vmem>>, %arg28: memref<64x32xf32, #tpu.memory_space<vmem>>, %arg29: memref<1x32xf32, #tpu.memory_space<vmem>>, %arg30: memref<64x64xf32, #tpu.memory_space<vmem>>, %arg31: memref<1x64xf32, #tpu.memory_space<vmem>>, %arg32: memref<64x32xf32, #tpu.memory_space<vmem>>, %arg33: memref<1x32xf32, #tpu.memory_space<vmem>>, %arg34: memref<64x64xf32, #tpu.memory_space<vmem>>, %arg35: memref<1x64xf32, #tpu.memory_space<vmem>>, %arg36: memref<64x64xf32, #tpu.memory_space<vmem>>, %arg37: memref<1x64xf32, #tpu.memory_space<vmem>>, %arg38: memref<64x32xf32, #tpu.memory_space<vmem>>, %arg39: memref<1x32xf32, #tpu.memory_space<vmem>>, %arg40: memref<64x64xf32, #tpu.memory_space<vmem>>, %arg41: memref<1x64xf32, #tpu.memory_space<vmem>>, %arg42: memref<64x64xf32, #tpu.memory_space<vmem>>, %arg43: memref<1x64xf32, #tpu.memory_space<vmem>>, %arg44: memref<16x128xf32, #tpu.memory_space<vmem>>) attributes {dimension_semantics = [], scalar_prefetch = 0 : i64, scratch_operands = 0 : i64, tpu.core_type = #tpu.core_type<tc>} {
    %c0 = arith.constant 0 : index
    %c0_0 = arith.constant 0 : index
    %0 = vector.load %arg0[%c0, %c0_0] : memref<16x16xf32, #tpu.memory_space<vmem>>, vector<16x16xf32>
    %c0_1 = arith.constant 0 : index
    %c0_2 = arith.constant 0 : index
    %1 = vector.load %arg1[%c0_1, %c0_2] : memref<16x16xf32, #tpu.memory_space<vmem>>, vector<16x16xf32>
    %c0_3 = arith.constant 0 : index
    %c0_4 = arith.constant 0 : index
    %2 = vector.load %arg2[%c0_3, %c0_4] : memref<16x16xf32, #tpu.memory_space<vmem>>, vector<16x16xf32>
    %c0_5 = arith.constant 0 : index
    %c0_6 = arith.constant 0 : index
    %3 = vector.load %arg3[%c0_5, %c0_6] : memref<16x16xf32, #tpu.memory_space<vmem>>, vector<16x16xf32>
    %c0_7 = arith.constant 0 : index
    %c0_8 = arith.constant 0 : index
    %4 = vector.load %arg4[%c0_7, %c0_8] : memref<16x16xf32, #tpu.memory_space<vmem>>, vector<16x16xf32>
    %c0_9 = arith.constant 0 : index
    %c0_10 = arith.constant 0 : index
    %5 = vector.load %arg5[%c0_9, %c0_10] : memref<16x16xf32, #tpu.memory_space<vmem>>, vector<16x16xf32>
    %c0_11 = arith.constant 0 : index
    %c0_12 = arith.constant 0 : index
    %6 = vector.load %arg6[%c0_11, %c0_12] : memref<16x16xf32, #tpu.memory_space<vmem>>, vector<16x16xf32>
    %c0_13 = arith.constant 0 : index
    %c0_14 = arith.constant 0 : index
    %7 = vector.load %arg7[%c0_13, %c0_14] : memref<16x16xf32, #tpu.memory_space<vmem>>, vector<16x16xf32>
    %c0_15 = arith.constant 0 : index
    %c0_16 = arith.constant 0 : index
    %8 = vector.load %arg8[%c0_15, %c0_16] : memref<16x32xf32, #tpu.memory_space<vmem>>, vector<16x32xf32>
    %c0_17 = arith.constant 0 : index
    %c0_18 = arith.constant 0 : index
    %9 = vector.load %arg9[%c0_17, %c0_18] : memref<16x32xf32, #tpu.memory_space<vmem>>, vector<16x32xf32>
    %c0_19 = arith.constant 0 : index
    %c0_20 = arith.constant 0 : index
    %10 = vector.load %arg10[%c0_19, %c0_20] : memref<16x32xf32, #tpu.memory_space<vmem>>, vector<16x32xf32>
    %c0_21 = arith.constant 0 : index
    %c0_22 = arith.constant 0 : index
    %11 = vector.load %arg11[%c0_21, %c0_22] : memref<16x32xf32, #tpu.memory_space<vmem>>, vector<16x32xf32>
    %c0_23 = arith.constant 0 : index
    %c0_24 = arith.constant 0 : index
    %12 = vector.load %arg12[%c0_23, %c0_24] : memref<64x64xf32, #tpu.memory_space<vmem>>, vector<64x64xf32>
    %c0_25 = arith.constant 0 : index
    %c0_26 = arith.constant 0 : index
    %13 = vector.load %arg13[%c0_25, %c0_26] : memref<1x64xf32, #tpu.memory_space<vmem>>, vector<1x64xf32>
    %c0_27 = arith.constant 0 : index
    %c0_28 = arith.constant 0 : index
    %14 = vector.load %arg14[%c0_27, %c0_28] : memref<64x32xf32, #tpu.memory_space<vmem>>, vector<64x32xf32>
    %c0_29 = arith.constant 0 : index
    %c0_30 = arith.constant 0 : index
    %15 = vector.load %arg15[%c0_29, %c0_30] : memref<1x32xf32, #tpu.memory_space<vmem>>, vector<1x32xf32>
    %c0_31 = arith.constant 0 : index
    %c0_32 = arith.constant 0 : index
    %16 = vector.load %arg16[%c0_31, %c0_32] : memref<64x64xf32, #tpu.memory_space<vmem>>, vector<64x64xf32>
    %c0_33 = arith.constant 0 : index
    %c0_34 = arith.constant 0 : index
    %17 = vector.load %arg17[%c0_33, %c0_34] : memref<1x64xf32, #tpu.memory_space<vmem>>, vector<1x64xf32>
    %c0_35 = arith.constant 0 : index
    %c0_36 = arith.constant 0 : index
    %18 = vector.load %arg18[%c0_35, %c0_36] : memref<64x32xf32, #tpu.memory_space<vmem>>, vector<64x32xf32>
    %c0_37 = arith.constant 0 : index
    %c0_38 = arith.constant 0 : index
    %19 = vector.load %arg19[%c0_37, %c0_38] : memref<1x32xf32, #tpu.memory_space<vmem>>, vector<1x32xf32>
    %c0_39 = arith.constant 0 : index
    %c0_40 = arith.constant 0 : index
    %20 = vector.load %arg20[%c0_39, %c0_40] : memref<64x64xf32, #tpu.memory_space<vmem>>, vector<64x64xf32>
    %c0_41 = arith.constant 0 : index
    %c0_42 = arith.constant 0 : index
    %21 = vector.load %arg21[%c0_41, %c0_42] : memref<1x64xf32, #tpu.memory_space<vmem>>, vector<1x64xf32>
    %c0_43 = arith.constant 0 : index
    %c0_44 = arith.constant 0 : index
    %22 = vector.load %arg22[%c0_43, %c0_44] : memref<64x32xf32, #tpu.memory_space<vmem>>, vector<64x32xf32>
    %c0_45 = arith.constant 0 : index
    %c0_46 = arith.constant 0 : index
    %23 = vector.load %arg23[%c0_45, %c0_46] : memref<1x32xf32, #tpu.memory_space<vmem>>, vector<1x32xf32>
    %c0_47 = arith.constant 0 : index
    %c0_48 = arith.constant 0 : index
    %24 = vector.load %arg24[%c0_47, %c0_48] : memref<128x64xf32, #tpu.memory_space<vmem>>, vector<128x64xf32>
    %c0_49 = arith.constant 0 : index
    %c0_50 = arith.constant 0 : index
    %25 = vector.load %arg25[%c0_49, %c0_50] : memref<1x64xf32, #tpu.memory_space<vmem>>, vector<1x64xf32>
    %c0_51 = arith.constant 0 : index
    %c0_52 = arith.constant 0 : index
    %26 = vector.load %arg26[%c0_51, %c0_52] : memref<64x64xf32, #tpu.memory_space<vmem>>, vector<64x64xf32>
    %c0_53 = arith.constant 0 : index
    %c0_54 = arith.constant 0 : index
    %27 = vector.load %arg27[%c0_53, %c0_54] : memref<1x64xf32, #tpu.memory_space<vmem>>, vector<1x64xf32>
    %c0_55 = arith.constant 0 : index
    %c0_56 = arith.constant 0 : index
    %28 = vector.load %arg28[%c0_55, %c0_56] : memref<64x32xf32, #tpu.memory_space<vmem>>, vector<64x32xf32>
    %c0_57 = arith.constant 0 : index
    %c0_58 = arith.constant 0 : index
    %29 = vector.load %arg29[%c0_57, %c0_58] : memref<1x32xf32, #tpu.memory_space<vmem>>, vector<1x32xf32>
    %c0_59 = arith.constant 0 : index
    %c0_60 = arith.constant 0 : index
    %30 = vector.load %arg30[%c0_59, %c0_60] : memref<64x64xf32, #tpu.memory_space<vmem>>, vector<64x64xf32>
    %c0_61 = arith.constant 0 : index
    %c0_62 = arith.constant 0 : index
    %31 = vector.load %arg31[%c0_61, %c0_62] : memref<1x64xf32, #tpu.memory_space<vmem>>, vector<1x64xf32>
    %c0_63 = arith.constant 0 : index
    %c0_64 = arith.constant 0 : index
    %32 = vector.load %arg32[%c0_63, %c0_64] : memref<64x32xf32, #tpu.memory_space<vmem>>, vector<64x32xf32>
    %c0_65 = arith.constant 0 : index
    %c0_66 = arith.constant 0 : index
    %33 = vector.load %arg33[%c0_65, %c0_66] : memref<1x32xf32, #tpu.memory_space<vmem>>, vector<1x32xf32>
    %c0_67 = arith.constant 0 : index
    %c0_68 = arith.constant 0 : index
    %34 = vector.load %arg34[%c0_67, %c0_68] : memref<64x64xf32, #tpu.memory_space<vmem>>, vector<64x64xf32>
    %c0_69 = arith.constant 0 : index
    %c0_70 = arith.constant 0 : index
    %35 = vector.load %arg35[%c0_69, %c0_70] : memref<1x64xf32, #tpu.memory_space<vmem>>, vector<1x64xf32>
    %c0_71 = arith.constant 0 : index
    %c0_72 = arith.constant 0 : index
    %36 = vector.load %arg36[%c0_71, %c0_72] : memref<64x64xf32, #tpu.memory_space<vmem>>, vector<64x64xf32>
    %c0_73 = arith.constant 0 : index
    %c0_74 = arith.constant 0 : index
    %37 = vector.load %arg37[%c0_73, %c0_74] : memref<1x64xf32, #tpu.memory_space<vmem>>, vector<1x64xf32>
    %c0_75 = arith.constant 0 : index
    %c0_76 = arith.constant 0 : index
    %38 = vector.load %arg38[%c0_75, %c0_76] : memref<64x32xf32, #tpu.memory_space<vmem>>, vector<64x32xf32>
    %c0_77 = arith.constant 0 : index
    %c0_78 = arith.constant 0 : index
    %39 = vector.load %arg39[%c0_77, %c0_78] : memref<1x32xf32, #tpu.memory_space<vmem>>, vector<1x32xf32>
    %c0_79 = arith.constant 0 : index
    %c0_80 = arith.constant 0 : index
    %40 = vector.load %arg40[%c0_79, %c0_80] : memref<64x64xf32, #tpu.memory_space<vmem>>, vector<64x64xf32>
    %c0_81 = arith.constant 0 : index
    %c0_82 = arith.constant 0 : index
    %41 = vector.load %arg41[%c0_81, %c0_82] : memref<1x64xf32, #tpu.memory_space<vmem>>, vector<1x64xf32>
    %c0_83 = arith.constant 0 : index
    %c0_84 = arith.constant 0 : index
    %42 = vector.load %arg42[%c0_83, %c0_84] : memref<64x64xf32, #tpu.memory_space<vmem>>, vector<64x64xf32>
    %c0_85 = arith.constant 0 : index
    %c0_86 = arith.constant 0 : index
    %43 = vector.load %arg43[%c0_85, %c0_86] : memref<1x64xf32, #tpu.memory_space<vmem>>, vector<1x64xf32>
    %cst = arith.constant dense<0.000000e+00> : vector<16x32xf32>
    %44 = tpu.matmul %0, %8, %cst {dimension_numbers = #tpu.dot_dimension_numbers<[1], [0], [0], [1], [0, 0, 1, 1], [], []>} : vector<16x16xf32>, vector<16x32xf32>, vector<16x32xf32> -> vector<16x32xf32>
    %45 = vector.extract_strided_slice %12 {offsets = [0, 0], sizes = [32, 64], strides = [1, 1]} : vector<64x64xf32> to vector<32x64xf32>
    %cst_87 = arith.constant dense<0.000000e+00> : vector<16x64xf32>
    %46 = tpu.matmul %9, %45, %cst_87 {dimension_numbers = #tpu.dot_dimension_numbers<[1], [0], [0], [1], [0, 0, 1, 1], [], []>} : vector<16x32xf32>, vector<32x64xf32>, vector<16x64xf32> -> vector<16x64xf32>
    %47 = vector.extract_strided_slice %12 {offsets = [32, 0], sizes = [32, 64], strides = [1, 1]} : vector<64x64xf32> to vector<32x64xf32>
    %cst_88 = arith.constant dense<0.000000e+00> : vector<16x64xf32>
    %48 = tpu.matmul %44, %47, %cst_88 {dimension_numbers = #tpu.dot_dimension_numbers<[1], [0], [0], [1], [0, 0, 1, 1], [], []>} : vector<16x32xf32>, vector<32x64xf32>, vector<16x64xf32> -> vector<16x64xf32>
    %49 = arith.addf %46, %48 : vector<16x64xf32>
    %50 = vector.broadcast %13 : vector<1x64xf32> to vector<16x64xf32>
    %51 = arith.addf %49, %50 : vector<16x64xf32>
    %cst_89 = arith.constant 0.000000e+00 : f32
    %52 = vector.broadcast %cst_89 : f32 to vector<16x64xf32>
    %53 = arith.maximumf %51, %52 : vector<16x64xf32>
    %cst_90 = arith.constant dense<0.000000e+00> : vector<16x32xf32>
    %54 = tpu.matmul %53, %14, %cst_90 {dimension_numbers = #tpu.dot_dimension_numbers<[1], [0], [0], [1], [0, 0, 1, 1], [], []>} : vector<16x64xf32>, vector<64x32xf32>, vector<16x32xf32> -> vector<16x32xf32>
    %55 = vector.broadcast %15 : vector<1x32xf32> to vector<16x32xf32>
    %56 = arith.addf %54, %55 : vector<16x32xf32>
    %cst_91 = arith.constant dense<0.000000e+00> : vector<16x32xf32>
    %57 = tpu.matmul %1, %56, %cst_91 {dimension_numbers = #tpu.dot_dimension_numbers<[1], [0], [0], [1], [0, 0, 1, 1], [], []>} : vector<16x16xf32>, vector<16x32xf32>, vector<16x32xf32> -> vector<16x32xf32>
    %58 = vector.extract_strided_slice %16 {offsets = [0, 0], sizes = [32, 64], strides = [1, 1]} : vector<64x64xf32> to vector<32x64xf32>
    %cst_92 = arith.constant dense<0.000000e+00> : vector<16x64xf32>
    %59 = tpu.matmul %8, %58, %cst_92 {dimension_numbers = #tpu.dot_dimension_numbers<[1], [0], [0], [1], [0, 0, 1, 1], [], []>} : vector<16x32xf32>, vector<32x64xf32>, vector<16x64xf32> -> vector<16x64xf32>
    %60 = vector.extract_strided_slice %16 {offsets = [32, 0], sizes = [32, 64], strides = [1, 1]} : vector<64x64xf32> to vector<32x64xf32>
    %cst_93 = arith.constant dense<0.000000e+00> : vector<16x64xf32>
    %61 = tpu.matmul %57, %60, %cst_93 {dimension_numbers = #tpu.dot_dimension_numbers<[1], [0], [0], [1], [0, 0, 1, 1], [], []>} : vector<16x32xf32>, vector<32x64xf32>, vector<16x64xf32> -> vector<16x64xf32>
    %62 = arith.addf %59, %61 : vector<16x64xf32>
    %63 = vector.broadcast %17 : vector<1x64xf32> to vector<16x64xf32>
    %64 = arith.addf %62, %63 : vector<16x64xf32>
    %cst_94 = arith.constant 0.000000e+00 : f32
    %65 = vector.broadcast %cst_94 : f32 to vector<16x64xf32>
    %66 = arith.maximumf %64, %65 : vector<16x64xf32>
    %cst_95 = arith.constant dense<0.000000e+00> : vector<16x32xf32>
    %67 = tpu.matmul %66, %18, %cst_95 {dimension_numbers = #tpu.dot_dimension_numbers<[1], [0], [0], [1], [0, 0, 1, 1], [], []>} : vector<16x64xf32>, vector<64x32xf32>, vector<16x32xf32> -> vector<16x32xf32>
    %68 = vector.broadcast %19 : vector<1x32xf32> to vector<16x32xf32>
    %69 = arith.addf %67, %68 : vector<16x32xf32>
    %cst_96 = arith.constant dense<0.000000e+00> : vector<16x32xf32>
    %70 = tpu.matmul %2, %9, %cst_96 {dimension_numbers = #tpu.dot_dimension_numbers<[1], [0], [0], [1], [0, 0, 1, 1], [], []>} : vector<16x16xf32>, vector<16x32xf32>, vector<16x32xf32> -> vector<16x32xf32>
    %71 = vector.extract_strided_slice %20 {offsets = [0, 0], sizes = [32, 64], strides = [1, 1]} : vector<64x64xf32> to vector<32x64xf32>
    %cst_97 = arith.constant dense<0.000000e+00> : vector<16x64xf32>
    %72 = tpu.matmul %10, %71, %cst_97 {dimension_numbers = #tpu.dot_dimension_numbers<[1], [0], [0], [1], [0, 0, 1, 1], [], []>} : vector<16x32xf32>, vector<32x64xf32>, vector<16x64xf32> -> vector<16x64xf32>
    %73 = vector.extract_strided_slice %20 {offsets = [32, 0], sizes = [32, 64], strides = [1, 1]} : vector<64x64xf32> to vector<32x64xf32>
    %cst_98 = arith.constant dense<0.000000e+00> : vector<16x64xf32>
    %74 = tpu.matmul %70, %73, %cst_98 {dimension_numbers = #tpu.dot_dimension_numbers<[1], [0], [0], [1], [0, 0, 1, 1], [], []>} : vector<16x32xf32>, vector<32x64xf32>, vector<16x64xf32> -> vector<16x64xf32>
    %75 = arith.addf %72, %74 : vector<16x64xf32>
    %76 = vector.broadcast %21 : vector<1x64xf32> to vector<16x64xf32>
    %77 = arith.addf %75, %76 : vector<16x64xf32>
    %cst_99 = arith.constant 0.000000e+00 : f32
    %78 = vector.broadcast %cst_99 : f32 to vector<16x64xf32>
    %79 = arith.maximumf %77, %78 : vector<16x64xf32>
    %cst_100 = arith.constant dense<0.000000e+00> : vector<16x32xf32>
    %80 = tpu.matmul %79, %22, %cst_100 {dimension_numbers = #tpu.dot_dimension_numbers<[1], [0], [0], [1], [0, 0, 1, 1], [], []>} : vector<16x64xf32>, vector<64x32xf32>, vector<16x32xf32> -> vector<16x32xf32>
    %81 = vector.broadcast %23 : vector<1x32xf32> to vector<16x32xf32>
    %82 = arith.addf %80, %81 : vector<16x32xf32>
    %cst_101 = arith.constant 0.000000e+00 : f32
    %83 = vector.broadcast %cst_101 : f32 to vector<16x32xf32>
    %84 = arith.maximumf %82, %83 : vector<16x32xf32>
    %cst_102 = arith.constant dense<0.000000e+00> : vector<16x32xf32>
    %85 = tpu.matmul %3, %84, %cst_102 {dimension_numbers = #tpu.dot_dimension_numbers<[1], [0], [0], [1], [0, 0, 1, 1], [], []>} : vector<16x16xf32>, vector<16x32xf32>, vector<16x32xf32> -> vector<16x32xf32>
    %86 = vector.extract_strided_slice %40 {offsets = [0, 0], sizes = [32, 64], strides = [1, 1]} : vector<64x64xf32> to vector<32x64xf32>
    %cst_103 = arith.constant dense<0.000000e+00> : vector<16x64xf32>
    %87 = tpu.matmul %84, %86, %cst_103 {dimension_numbers = #tpu.dot_dimension_numbers<[1], [0], [0], [1], [0, 0, 1, 1], [], []>} : vector<16x32xf32>, vector<32x64xf32>, vector<16x64xf32> -> vector<16x64xf32>
    %88 = vector.extract_strided_slice %40 {offsets = [32, 0], sizes = [32, 64], strides = [1, 1]} : vector<64x64xf32> to vector<32x64xf32>
    %cst_104 = arith.constant dense<0.000000e+00> : vector<16x64xf32>
    %89 = tpu.matmul %85, %88, %cst_104 {dimension_numbers = #tpu.dot_dimension_numbers<[1], [0], [0], [1], [0, 0, 1, 1], [], []>} : vector<16x32xf32>, vector<32x64xf32>, vector<16x64xf32> -> vector<16x64xf32>
    %90 = arith.addf %87, %89 : vector<16x64xf32>
    %91 = vector.broadcast %41 : vector<1x64xf32> to vector<16x64xf32>
    %92 = arith.addf %90, %91 : vector<16x64xf32>
    %93 = vector.extract_strided_slice %24 {offsets = [0, 0], sizes = [32, 64], strides = [1, 1]} : vector<128x64xf32> to vector<32x64xf32>
    %cst_105 = arith.constant dense<0.000000e+00> : vector<16x64xf32>
    %94 = tpu.matmul %84, %93, %cst_105 {dimension_numbers = #tpu.dot_dimension_numbers<[1], [0], [0], [1], [0, 0, 1, 1], [], []>} : vector<16x32xf32>, vector<32x64xf32>, vector<16x64xf32> -> vector<16x64xf32>
    %95 = vector.extract_strided_slice %24 {offsets = [32, 0], sizes = [32, 64], strides = [1, 1]} : vector<128x64xf32> to vector<32x64xf32>
    %cst_106 = arith.constant dense<0.000000e+00> : vector<16x64xf32>
    %96 = tpu.matmul %85, %95, %cst_106 {dimension_numbers = #tpu.dot_dimension_numbers<[1], [0], [0], [1], [0, 0, 1, 1], [], []>} : vector<16x32xf32>, vector<32x64xf32>, vector<16x64xf32> -> vector<16x64xf32>
    %97 = arith.addf %94, %96 : vector<16x64xf32>
    %98 = vector.extract_strided_slice %24 {offsets = [64, 0], sizes = [64, 64], strides = [1, 1]} : vector<128x64xf32> to vector<64x64xf32>
    %cst_107 = arith.constant dense<0.000000e+00> : vector<16x64xf32>
    %99 = tpu.matmul %92, %98, %cst_107 {dimension_numbers = #tpu.dot_dimension_numbers<[1], [0], [0], [1], [0, 0, 1, 1], [], []>} : vector<16x64xf32>, vector<64x64xf32>, vector<16x64xf32> -> vector<16x64xf32>
    %100 = arith.addf %97, %99 : vector<16x64xf32>
    %101 = vector.broadcast %25 : vector<1x64xf32> to vector<16x64xf32>
    %102 = arith.addf %100, %101 : vector<16x64xf32>
    %cst_108 = arith.constant 0.000000e+00 : f32
    %103 = vector.broadcast %cst_108 : f32 to vector<16x64xf32>
    %104 = arith.maximumf %102, %103 : vector<16x64xf32>
    %cst_109 = arith.constant dense<0.000000e+00> : vector<16x64xf32>
    %105 = tpu.matmul %104, %26, %cst_109 {dimension_numbers = #tpu.dot_dimension_numbers<[1], [0], [0], [1], [0, 0, 1, 1], [], []>} : vector<16x64xf32>, vector<64x64xf32>, vector<16x64xf32> -> vector<16x64xf32>
    %106 = vector.broadcast %27 : vector<1x64xf32> to vector<16x64xf32>
    %107 = arith.addf %105, %106 : vector<16x64xf32>
    %cst_110 = arith.constant 0.000000e+00 : f32
    %108 = vector.broadcast %cst_110 : f32 to vector<16x64xf32>
    %109 = arith.maximumf %107, %108 : vector<16x64xf32>
    %cst_111 = arith.constant dense<0.000000e+00> : vector<16x32xf32>
    %110 = tpu.matmul %109, %28, %cst_111 {dimension_numbers = #tpu.dot_dimension_numbers<[1], [0], [0], [1], [0, 0, 1, 1], [], []>} : vector<16x64xf32>, vector<64x32xf32>, vector<16x32xf32> -> vector<16x32xf32>
    %111 = vector.broadcast %29 : vector<1x32xf32> to vector<16x32xf32>
    %112 = arith.addf %110, %111 : vector<16x32xf32>
    %cst_112 = arith.constant dense<0.000000e+00> : vector<16x32xf32>
    %113 = tpu.matmul %5, %9, %cst_112 {dimension_numbers = #tpu.dot_dimension_numbers<[1], [0], [0], [1], [0, 0, 1, 1], [], []>} : vector<16x16xf32>, vector<16x32xf32>, vector<16x32xf32> -> vector<16x32xf32>
    %114 = vector.extract_strided_slice %20 {offsets = [0, 0], sizes = [32, 64], strides = [1, 1]} : vector<64x64xf32> to vector<32x64xf32>
    %cst_113 = arith.constant dense<0.000000e+00> : vector<16x64xf32>
    %115 = tpu.matmul %11, %114, %cst_113 {dimension_numbers = #tpu.dot_dimension_numbers<[1], [0], [0], [1], [0, 0, 1, 1], [], []>} : vector<16x32xf32>, vector<32x64xf32>, vector<16x64xf32> -> vector<16x64xf32>
    %116 = vector.extract_strided_slice %20 {offsets = [32, 0], sizes = [32, 64], strides = [1, 1]} : vector<64x64xf32> to vector<32x64xf32>
    %cst_114 = arith.constant dense<0.000000e+00> : vector<16x64xf32>
    %117 = tpu.matmul %113, %116, %cst_114 {dimension_numbers = #tpu.dot_dimension_numbers<[1], [0], [0], [1], [0, 0, 1, 1], [], []>} : vector<16x32xf32>, vector<32x64xf32>, vector<16x64xf32> -> vector<16x64xf32>
    %118 = arith.addf %115, %117 : vector<16x64xf32>
    %119 = vector.broadcast %21 : vector<1x64xf32> to vector<16x64xf32>
    %120 = arith.addf %118, %119 : vector<16x64xf32>
    %cst_115 = arith.constant 0.000000e+00 : f32
    %121 = vector.broadcast %cst_115 : f32 to vector<16x64xf32>
    %122 = arith.maximumf %120, %121 : vector<16x64xf32>
    %cst_116 = arith.constant dense<0.000000e+00> : vector<16x32xf32>
    %123 = tpu.matmul %122, %22, %cst_116 {dimension_numbers = #tpu.dot_dimension_numbers<[1], [0], [0], [1], [0, 0, 1, 1], [], []>} : vector<16x64xf32>, vector<64x32xf32>, vector<16x32xf32> -> vector<16x32xf32>
    %124 = vector.broadcast %23 : vector<1x32xf32> to vector<16x32xf32>
    %125 = arith.addf %123, %124 : vector<16x32xf32>
    %cst_117 = arith.constant 0.000000e+00 : f32
    %126 = vector.broadcast %cst_117 : f32 to vector<16x32xf32>
    %127 = arith.maximumf %125, %126 : vector<16x32xf32>
    %cst_118 = arith.constant dense<0.000000e+00> : vector<16x32xf32>
    %128 = tpu.matmul %6, %127, %cst_118 {dimension_numbers = #tpu.dot_dimension_numbers<[1], [0], [0], [1], [0, 0, 1, 1], [], []>} : vector<16x16xf32>, vector<16x32xf32>, vector<16x32xf32> -> vector<16x32xf32>
    %129 = vector.extract_strided_slice %42 {offsets = [0, 0], sizes = [32, 64], strides = [1, 1]} : vector<64x64xf32> to vector<32x64xf32>
    %cst_119 = arith.constant dense<0.000000e+00> : vector<16x64xf32>
    %130 = tpu.matmul %127, %129, %cst_119 {dimension_numbers = #tpu.dot_dimension_numbers<[1], [0], [0], [1], [0, 0, 1, 1], [], []>} : vector<16x32xf32>, vector<32x64xf32>, vector<16x64xf32> -> vector<16x64xf32>
    %131 = vector.extract_strided_slice %42 {offsets = [32, 0], sizes = [32, 64], strides = [1, 1]} : vector<64x64xf32> to vector<32x64xf32>
    %cst_120 = arith.constant dense<0.000000e+00> : vector<16x64xf32>
    %132 = tpu.matmul %128, %131, %cst_120 {dimension_numbers = #tpu.dot_dimension_numbers<[1], [0], [0], [1], [0, 0, 1, 1], [], []>} : vector<16x32xf32>, vector<32x64xf32>, vector<16x64xf32> -> vector<16x64xf32>
    %133 = arith.addf %130, %132 : vector<16x64xf32>
    %134 = vector.broadcast %43 : vector<1x64xf32> to vector<16x64xf32>
    %135 = arith.addf %133, %134 : vector<16x64xf32>
    %136 = vector.extract_strided_slice %24 {offsets = [0, 0], sizes = [32, 64], strides = [1, 1]} : vector<128x64xf32> to vector<32x64xf32>
    %cst_121 = arith.constant dense<0.000000e+00> : vector<16x64xf32>
    %137 = tpu.matmul %127, %136, %cst_121 {dimension_numbers = #tpu.dot_dimension_numbers<[1], [0], [0], [1], [0, 0, 1, 1], [], []>} : vector<16x32xf32>, vector<32x64xf32>, vector<16x64xf32> -> vector<16x64xf32>
    %138 = vector.extract_strided_slice %24 {offsets = [32, 0], sizes = [32, 64], strides = [1, 1]} : vector<128x64xf32> to vector<32x64xf32>
    %cst_122 = arith.constant dense<0.000000e+00> : vector<16x64xf32>
    %139 = tpu.matmul %128, %138, %cst_122 {dimension_numbers = #tpu.dot_dimension_numbers<[1], [0], [0], [1], [0, 0, 1, 1], [], []>} : vector<16x32xf32>, vector<32x64xf32>, vector<16x64xf32> -> vector<16x64xf32>
    %140 = arith.addf %137, %139 : vector<16x64xf32>
    %141 = vector.extract_strided_slice %24 {offsets = [64, 0], sizes = [64, 64], strides = [1, 1]} : vector<128x64xf32> to vector<64x64xf32>
    %cst_123 = arith.constant dense<0.000000e+00> : vector<16x64xf32>
    %142 = tpu.matmul %135, %141, %cst_123 {dimension_numbers = #tpu.dot_dimension_numbers<[1], [0], [0], [1], [0, 0, 1, 1], [], []>} : vector<16x64xf32>, vector<64x64xf32>, vector<16x64xf32> -> vector<16x64xf32>
    %143 = arith.addf %140, %142 : vector<16x64xf32>
    %144 = vector.broadcast %25 : vector<1x64xf32> to vector<16x64xf32>
    %145 = arith.addf %143, %144 : vector<16x64xf32>
    %cst_124 = arith.constant 0.000000e+00 : f32
    %146 = vector.broadcast %cst_124 : f32 to vector<16x64xf32>
    %147 = arith.maximumf %145, %146 : vector<16x64xf32>
    %cst_125 = arith.constant dense<0.000000e+00> : vector<16x64xf32>
    %148 = tpu.matmul %147, %26, %cst_125 {dimension_numbers = #tpu.dot_dimension_numbers<[1], [0], [0], [1], [0, 0, 1, 1], [], []>} : vector<16x64xf32>, vector<64x64xf32>, vector<16x64xf32> -> vector<16x64xf32>
    %149 = vector.broadcast %27 : vector<1x64xf32> to vector<16x64xf32>
    %150 = arith.addf %148, %149 : vector<16x64xf32>
    %cst_126 = arith.constant 0.000000e+00 : f32
    %151 = vector.broadcast %cst_126 : f32 to vector<16x64xf32>
    %152 = arith.maximumf %150, %151 : vector<16x64xf32>
    %cst_127 = arith.constant dense<0.000000e+00> : vector<16x32xf32>
    %153 = tpu.matmul %152, %28, %cst_127 {dimension_numbers = #tpu.dot_dimension_numbers<[1], [0], [0], [1], [0, 0, 1, 1], [], []>} : vector<16x64xf32>, vector<64x32xf32>, vector<16x32xf32> -> vector<16x32xf32>
    %154 = vector.broadcast %29 : vector<1x32xf32> to vector<16x32xf32>
    %155 = arith.addf %153, %154 : vector<16x32xf32>
    %cst_128 = arith.constant dense<0.000000e+00> : vector<16x32xf32>
    %156 = tpu.matmul %4, %112, %cst_128 {dimension_numbers = #tpu.dot_dimension_numbers<[1], [0], [0], [1], [0, 0, 1, 1], [], []>} : vector<16x16xf32>, vector<16x32xf32>, vector<16x32xf32> -> vector<16x32xf32>
    %cst_129 = arith.constant dense<0.000000e+00> : vector<16x32xf32>
    %157 = tpu.matmul %7, %155, %cst_129 {dimension_numbers = #tpu.dot_dimension_numbers<[1], [0], [0], [1], [0, 0, 1, 1], [], []>} : vector<16x16xf32>, vector<16x32xf32>, vector<16x32xf32> -> vector<16x32xf32>
    %158 = arith.addf %156, %157 : vector<16x32xf32>
    %159 = vector.extract_strided_slice %30 {offsets = [0, 0], sizes = [32, 64], strides = [1, 1]} : vector<64x64xf32> to vector<32x64xf32>
    %cst_130 = arith.constant dense<0.000000e+00> : vector<16x64xf32>
    %160 = tpu.matmul %9, %159, %cst_130 {dimension_numbers = #tpu.dot_dimension_numbers<[1], [0], [0], [1], [0, 0, 1, 1], [], []>} : vector<16x32xf32>, vector<32x64xf32>, vector<16x64xf32> -> vector<16x64xf32>
    %161 = vector.extract_strided_slice %30 {offsets = [32, 0], sizes = [32, 64], strides = [1, 1]} : vector<64x64xf32> to vector<32x64xf32>
    %cst_131 = arith.constant dense<0.000000e+00> : vector<16x64xf32>
    %162 = tpu.matmul %158, %161, %cst_131 {dimension_numbers = #tpu.dot_dimension_numbers<[1], [0], [0], [1], [0, 0, 1, 1], [], []>} : vector<16x32xf32>, vector<32x64xf32>, vector<16x64xf32> -> vector<16x64xf32>
    %163 = arith.addf %160, %162 : vector<16x64xf32>
    %164 = vector.broadcast %31 : vector<1x64xf32> to vector<16x64xf32>
    %165 = arith.addf %163, %164 : vector<16x64xf32>
    %cst_132 = arith.constant 0.000000e+00 : f32
    %166 = vector.broadcast %cst_132 : f32 to vector<16x64xf32>
    %167 = arith.maximumf %165, %166 : vector<16x64xf32>
    %cst_133 = arith.constant dense<0.000000e+00> : vector<16x32xf32>
    %168 = tpu.matmul %167, %32, %cst_133 {dimension_numbers = #tpu.dot_dimension_numbers<[1], [0], [0], [1], [0, 0, 1, 1], [], []>} : vector<16x64xf32>, vector<64x32xf32>, vector<16x32xf32> -> vector<16x32xf32>
    %169 = vector.broadcast %33 : vector<1x32xf32> to vector<16x32xf32>
    %170 = arith.addf %168, %169 : vector<16x32xf32>
    %171 = vector.extract_strided_slice %34 {offsets = [0, 0], sizes = [32, 64], strides = [1, 1]} : vector<64x64xf32> to vector<32x64xf32>
    %cst_134 = arith.constant dense<0.000000e+00> : vector<16x64xf32>
    %172 = tpu.matmul %56, %171, %cst_134 {dimension_numbers = #tpu.dot_dimension_numbers<[1], [0], [0], [1], [0, 0, 1, 1], [], []>} : vector<16x32xf32>, vector<32x64xf32>, vector<16x64xf32> -> vector<16x64xf32>
    %173 = vector.extract_strided_slice %34 {offsets = [32, 0], sizes = [32, 64], strides = [1, 1]} : vector<64x64xf32> to vector<32x64xf32>
    %cst_135 = arith.constant dense<0.000000e+00> : vector<16x64xf32>
    %174 = tpu.matmul %170, %173, %cst_135 {dimension_numbers = #tpu.dot_dimension_numbers<[1], [0], [0], [1], [0, 0, 1, 1], [], []>} : vector<16x32xf32>, vector<32x64xf32>, vector<16x64xf32> -> vector<16x64xf32>
    %175 = arith.addf %172, %174 : vector<16x64xf32>
    %176 = vector.broadcast %35 : vector<1x64xf32> to vector<16x64xf32>
    %177 = arith.addf %175, %176 : vector<16x64xf32>
    %cst_136 = arith.constant 0.000000e+00 : f32
    %178 = vector.broadcast %cst_136 : f32 to vector<16x64xf32>
    %179 = arith.maximumf %177, %178 : vector<16x64xf32>
    %cst_137 = arith.constant dense<0.000000e+00> : vector<16x64xf32>
    %180 = tpu.matmul %179, %36, %cst_137 {dimension_numbers = #tpu.dot_dimension_numbers<[1], [0], [0], [1], [0, 0, 1, 1], [], []>} : vector<16x64xf32>, vector<64x64xf32>, vector<16x64xf32> -> vector<16x64xf32>
    %181 = vector.broadcast %37 : vector<1x64xf32> to vector<16x64xf32>
    %182 = arith.addf %180, %181 : vector<16x64xf32>
    %cst_138 = arith.constant 0.000000e+00 : f32
    %183 = vector.broadcast %cst_138 : f32 to vector<16x64xf32>
    %184 = arith.maximumf %182, %183 : vector<16x64xf32>
    %cst_139 = arith.constant dense<0.000000e+00> : vector<16x32xf32>
    %185 = tpu.matmul %184, %38, %cst_139 {dimension_numbers = #tpu.dot_dimension_numbers<[1], [0], [0], [1], [0, 0, 1, 1], [], []>} : vector<16x64xf32>, vector<64x32xf32>, vector<16x32xf32> -> vector<16x32xf32>
    %186 = vector.broadcast %39 : vector<1x32xf32> to vector<16x32xf32>
    %187 = arith.addf %185, %186 : vector<16x32xf32>
    %188 = tpu.concatenate %69, %187, %112, %155 in 1 : vector<16x32xf32>, vector<16x32xf32>, vector<16x32xf32>, vector<16x32xf32> -> vector<16x128xf32>
    %c0_140 = arith.constant 0 : index
    %c0_141 = arith.constant 0 : index
    %189 = vector.load %arg44[%c0_140, %c0_141] : memref<16x128xf32, #tpu.memory_space<vmem>>, vector<16x128xf32>
    tpu.vector_store %arg44[%c0_140, %c0_141], %188 {strides = array<i32>} : memref<16x128xf32, #tpu.memory_space<vmem>>, vector<16x128xf32>,
    return
  }
}

</mosaic_0001>

<llo_original>
// kernel: forward.1
$region0: #{forward.1}
  #allocation0 [shape = 'u32[]', space=smem, size = 0x4, offset = 0x4, fixed_abs, tag = 'smem constant byte address 0x4 - core index']
  #allocation1 [shape = 'u32[144,128]{1,0:T(1,128)}', space=vmem, size = 0x12000, scoped, tag = 'internal scratch']
  %s0 = inlined_call_operand.smem [shape: u32[45], index: -1, kind: input, shape index: {}]
  %s1 = sld [smem:[%s0]]
  %s2 = scalar_lea.smem %s0, 1
  %s3 = sld [smem:[%s2]]
  %s4 = scalar_lea.smem %s0, 2
  %s5 = sld [smem:[%s4]]
  %s6 = scalar_lea.smem %s0, 3
  %s7 = sld [smem:[%s6]]
  %s8 = scalar_lea.smem %s0, 4
  %s9 = sld [smem:[%s8]]
  %s10 = scalar_lea.smem %s0, 5
  %s11 = sld [smem:[%s10]]
  %s12 = scalar_lea.smem %s0, 6
  %s13 = sld [smem:[%s12]]
  %s14 = scalar_lea.smem %s0, 7
  %s15 = sld [smem:[%s14]]
  %s16 = scalar_lea.smem %s0, 8
  %s17 = sld [smem:[%s16]]
  %s18 = scalar_lea.smem %s0, 9
  %s19 = sld [smem:[%s18]]
  %s20 = scalar_lea.smem %s0, 10
  %s21 = sld [smem:[%s20]]
  %s22 = scalar_lea.smem %s0, 11
  %s23 = sld [smem:[%s22]]
  %s24 = scalar_lea.smem %s0, 12
  %s25 = sld [smem:[%s24]]
  %s26 = scalar_lea.smem %s0, 13
  %s27 = sld [smem:[%s26]]
  %s28 = scalar_lea.smem %s0, 14
  %s29 = sld [smem:[%s28]]
  %s30 = scalar_lea.smem %s0, 15
  %s31 = sld [smem:[%s30]]
  %s32 = scalar_lea.smem %s0, 16
  %s33 = sld [smem:[%s32]]
  %s34 = scalar_lea.smem %s0, 17
  %s35 = sld [smem:[%s34]]
  %s36 = scalar_lea.smem %s0, 18
  %s37 = sld [smem:[%s36]]
  %s38 = scalar_lea.smem %s0, 19
  %s39 = sld [smem:[%s38]]
  %s40 = scalar_lea.smem %s0, 20
  %s41 = sld [smem:[%s40]]
  %s42 = scalar_lea.smem %s0, 21
  %s43 = sld [smem:[%s42]]
  %s44 = scalar_lea.smem %s0, 22
  %s45 = sld [smem:[%s44]]
  %s46 = scalar_lea.smem %s0, 23
  %s47 = sld [smem:[%s46]]
  %s48 = scalar_lea.smem %s0, 24
  %s49 = sld [smem:[%s48]]
  %s50 = scalar_lea.smem %s0, 25
  %s51 = sld [smem:[%s50]]
  %s52 = scalar_lea.smem %s0, 26
  %s53 = sld [smem:[%s52]]
  %s54 = scalar_lea.smem %s0, 27
  %s55 = sld [smem:[%s54]]
  %s56 = scalar_lea.smem %s0, 28
  %s57 = sld [smem:[%s56]]
  %s58 = scalar_lea.smem %s0, 29
  %s59 = sld [smem:[%s58]]
  %s60 = scalar_lea.smem %s0, 30
  %s61 = sld [smem:[%s60]]
  %s62 = scalar_lea.smem %s0, 31
  %s63 = sld [smem:[%s62]]
  %s64 = scalar_lea.smem %s0, 32
  %s65 = sld [smem:[%s64]]
  %s66 = scalar_lea.smem %s0, 33
  %s67 = sld [smem:[%s66]]
  %s68 = scalar_lea.smem %s0, 34
  %s69 = sld [smem:[%s68]]
  %s70 = scalar_lea.smem %s0, 35
  %s71 = sld [smem:[%s70]]
  %s72 = scalar_lea.smem %s0, 36
  %s73 = sld [smem:[%s72]]
  %s74 = scalar_lea.smem %s0, 37
  %s75 = sld [smem:[%s74]]
  %s76 = scalar_lea.smem %s0, 38
  %s77 = sld [smem:[%s76]]
  %s78 = scalar_lea.smem %s0, 39
  %s79 = sld [smem:[%s78]]
  %s80 = scalar_lea.smem %s0, 40
  %s81 = sld [smem:[%s80]]
  %s82 = scalar_lea.smem %s0, 41
  %s83 = sld [smem:[%s82]]
  %s84 = scalar_lea.smem %s0, 42
  %s85 = sld [smem:[%s84]]
  %s86 = scalar_lea.smem %s0, 43
  %s87 = sld [smem:[%s86]]
  %s88 = scalar_lea.smem %s0, 44
  %s89 = sld [smem:[%s88]]
  %s90 = sld [smem:[#allocation0]]
  $region326: #{forward.1} parent=0
    _
  %s92 = ssub.s32 1, %s90
  %s93 = scalar_select 0, %s92, %s90
  $region1: #{forward.1} parent=0
    #allocation2 [shape = 'u8[8192]{0}', space=vmem, size = 0x2000, scoped, tag = 'input window, operand 0, single buffered']
    #allocation3 [shape = 's32[1]{0}', space=sflag, size = 0x4, scoped, tag = 'scoped memory for forward.1']
    #allocation4 [shape = 'u8[8192]{0}', space=vmem, size = 0x2000, scoped, tag = 'input window, operand 1, single buffered']
    #allocation5 [shape = 's32[1]{0}', space=sflag, size = 0x4, scoped, tag = 'scoped memory for forward.1']
    #allocation6 [shape = 'u8[8192]{0}', space=vmem, size = 0x2000, scoped, tag = 'input window, operand 2, single buffered']
    #allocation7 [shape = 'u8[8192]{0}', space=vmem, size = 0x2000, scoped, tag = 'input window, operand 3, single buffered']
    #allocation8 [shape = 's32[1]{0}', space=sflag, size = 0x4, scoped, tag = 'scoped memory for forward.1']
    #allocation9 [shape = 'u8[8192]{0}', space=vmem, size = 0x2000, scoped, tag = 'input window, operand 4, single buffered']
    #allocation10 [shape = 'u8[8192]{0}', space=vmem, size = 0x2000, scoped, tag = 'input window, operand 5, single buffered']
    #allocation11 [shape = 's32[1]{0}', space=sflag, size = 0x4, scoped, tag = 'scoped memory for forward.1']
    #allocation12 [shape = 'u8[8192]{0}', space=vmem, size = 0x2000, scoped, tag = 'input window, operand 6, single buffered']
    #allocation13 [shape = 'u8[8192]{0}', space=vmem, size = 0x2000, scoped, tag = 'input window, operand 7, single buffered']
    #allocation14 [shape = 's32[1]{0}', space=sflag, size = 0x4, scoped, tag = 'scoped memory for forward.1']
    #allocation15 [shape = 'u8[32768]{0}', space=vmem, size = 0x8000, scoped, tag = 'input window, operand 12, single buffered']
    #allocation16 [shape = 'u8[32768]{0}', space=vmem, size = 0x8000, scoped, tag = 'input window, operand 14, single buffered']
    #allocation17 [shape = 's32[1]{0}', space=sflag, size = 0x4, scoped, tag = 'scoped memory for forward.1']
    #allocation18 [shape = 'u8[32768]{0}', space=vmem, size = 0x8000, scoped, tag = 'input window, operand 16, single buffered']
    #allocation19 [shape = 'u8[32768]{0}', space=vmem, size = 0x8000, scoped, tag = 'input window, operand 18, single buffered']
    #allocation20 [shape = 's32[1]{0}', space=sflag, size = 0x4, scoped, tag = 'scoped memory for forward.1']
    #allocation21 [shape = 'u8[512]{0}', space=vmem, size = 0x400, scoped, tag = 'input window, operand 19, single buffered']
    #allocation22 [shape = 'u8[32768]{0}', space=vmem, size = 0x8000, scoped, tag = 'input window, operand 20, single buffered']
    #allocation23 [shape = 's32[1]{0}', space=sflag, size = 0x4, scoped, tag = 'scoped memory for forward.1']
    #allocation24 [shape = 'u8[512]{0}', space=vmem, size = 0x400, scoped, tag = 'input window, operand 21, single buffered']
    #allocation25 [shape = 'u8[32768]{0}', space=vmem, size = 0x8000, scoped, tag = 'input window, operand 22, single buffered']
    #allocation26 [shape = 's32[1]{0}', space=sflag, size = 0x4, scoped, tag = 'scoped memory for forward.1']
    #allocation27 [shape = 'u8[512]{0}', space=vmem, size = 0x400, scoped, tag = 'input window, operand 23, single buffered']
    #allocation28 [shape = 'u8[512]{0}', space=vmem, size = 0x400, scoped, tag = 'input window, operand 25, single buffered']
    #allocation29 [shape = 's32[1]{0}', space=sflag, size = 0x4, scoped, tag = 'scoped memory for forward.1']
    #allocation30 [shape = 'u8[32768]{0}', space=vmem, size = 0x8000, scoped, tag = 'input window, operand 26, single buffered']
    #allocation31 [shape = 'u8[512]{0}', space=vmem, size = 0x400, scoped, tag = 'input window, operand 27, single buffered']
    #allocation32 [shape = 's32[1]{0}', space=sflag, size = 0x4, scoped, tag = 'scoped memory for forward.1']
    #allocation33 [shape = 'u8[32768]{0}', space=vmem, size = 0x8000, scoped, tag = 'input window, operand 28, single buffered']
    #allocation34 [shape = 'u8[512]{0}', space=vmem, size = 0x400, scoped, tag = 'input window, operand 29, single buffered']
    #allocation35 [shape = 's32[1]{0}', space=sflag, size = 0x4, scoped, tag = 'scoped memory for forward.1']
    #allocation36 [shape = 'u8[32768]{0}', space=vmem, size = 0x8000, scoped, tag = 'input window, operand 30, single buffered']
    #allocation37 [shape = 'u8[512]{0}', space=vmem, size = 0x400, scoped, tag = 'input window, operand 31, single buffered']
    #allocation38 [shape = 's32[1]{0}', space=sflag, size = 0x4, scoped, tag = 'scoped memory for forward.1']
    #allocation39 [shape = 'u8[32768]{0}', space=vmem, size = 0x8000, scoped, tag = 'input window, operand 32, single buffered']
    #allocation40 [shape = 'u8[512]{0}', space=vmem, size = 0x400, scoped, tag = 'input window, operand 33, single buffered']
    #allocation41 [shape = 's32[1]{0}', space=sflag, size = 0x4, scoped, tag = 'scoped memory for forward.1']
    #allocation42 [shape = 'u8[32768]{0}', space=vmem, size = 0x8000, scoped, tag = 'input window, operand 34, single buffered']
    #allocation43 [shape = 'u8[512]{0}', space=vmem, size = 0x400, scoped, tag = 'input window, operand 35, single buffered']
    #allocation44 [shape = 's32[1]{0}', space=sflag, size = 0x4, scoped, tag = 'scoped memory for forward.1']
    #allocation45 [shape = 'u8[32768]{0}', space=vmem, size = 0x8000, scoped, tag = 'input window, operand 36, single buffered']
    #allocation46 [shape = 'u8[512]{0}', space=vmem, size = 0x400, scoped, tag = 'input window, operand 37, single buffered']
    #allocation47 [shape = 's32[1]{0}', space=sflag, size = 0x4, scoped, tag = 'scoped memory for forward.1']
    #allocation48 [shape = 'u8[32768]{0}', space=vmem, size = 0x8000, scoped, tag = 'input window, operand 38, single buffered']
    #allocation49 [shape = 'u8[512]{0}', space=vmem, size = 0x400, scoped, tag = 'input window, operand 39, single buffered']
    #allocation50 [shape = 's32[1]{0}', space=sflag, size = 0x4, scoped, tag = 'scoped memory for forward.1']
    #allocation51 [shape = 'u8[32768]{0}', space=vmem, size = 0x8000, scoped, tag = 'input window, operand 40, single buffered']
    #allocation52 [shape = 'u8[512]{0}', space=vmem, size = 0x400, scoped, tag = 'input window, operand 41, single buffered']
    #allocation53 [shape = 's32[1]{0}', space=sflag, size = 0x4, scoped, tag = 'scoped memory for forward.1']
    #allocation54 [shape = 'u8[512]{0}', space=vmem, size = 0x400, scoped, tag = 'input window, operand 43, single buffered']
    %94 = vsyncpa [#allocation3], 0
    %95 = vsyncpa [#allocation5], 0
    %96 = vsyncpa [#allocation8], 0
    %97 = vsyncpa [#allocation11], 0
    %98 = vsyncpa [#allocation14], 0
    %99 = vsyncpa [#allocation17], 0
    %100 = vsyncpa [#allocation20], 0
    %101 = vsyncpa [#allocation23], 0
    %102 = vsyncpa [#allocation26], 0
    %103 = vsyncpa [#allocation29], 0
    %104 = vsyncpa [#allocation32], 0
    %105 = vsyncpa [#allocation35], 0
    %106 = vsyncpa [#allocation38], 0
    %107 = vsyncpa [#allocation41], 0
    %108 = vsyncpa [#allocation44], 0
    %109 = vsyncpa [#allocation47], 0
    %110 = vsyncpa [#allocation50], 0
    %111 = vsyncpa [#allocation53], 0
    // Predicated region
    $region2: #{forward.1} parent=1 // pred_check
      _
    $region3: #{forward.1} parent=1 // pred_check_branch
      %113 = sbr.rel (0) target = $region5
    $region4: #{forward.1} parent=1 // pred_region
      %s115 = ssub.s32 256, 256
      %116 = vsyncadd [#allocation3], %s115
      %s117 = sshll.u32 [#allocation2], 4
      %s118 = int_to_ptr.vmem [resolvable:$true] %s117
      %123 = dma.hbm_to_vmem [thread:$0]  %s1, 256, %s118, [#allocation3], 128, 128, 8
    $region5: #{forward.1} parent=1 // pred_fallthru
      _
    // Predicated region
    $region6: #{forward.1} parent=1 // pred_check
      _
    $region7: #{forward.1} parent=1 // pred_check_branch
      %125 = sbr.rel (0) target = $region9
    $region8: #{forward.1} parent=1 // pred_region
      %s127 = ssub.s32 256, 256
      %128 = vsyncadd [#allocation5], %s127
      %s129 = sshll.u32 [#allocation4], 4
      %s130 = int_to_ptr.vmem [resolvable:$true] %s129
      %135 = dma.hbm_to_vmem [thread:$0]  %s3, 256, %s130, [#allocation5], 128, 128, 8
    $region9: #{forward.1} parent=1 // pred_fallthru
      _
    // Predicated region
    $region10: #{forward.1} parent=1 // pred_check
      _
    $region11: #{forward.1} parent=1 // pred_check_branch
      %137 = sbr.rel (0) target = $region13
    $region12: #{forward.1} parent=1 // pred_region
      %s139 = ssub.s32 256, 256
      %140 = vsyncadd [#allocation5], %s139
      %s141 = sshll.u32 [#allocation6], 4
      %s142 = int_to_ptr.vmem [resolvable:$true] %s141
      %147 = dma.hbm_to_vmem [thread:$0]  %s5, 256, %s142, [#allocation5], 128, 128, 8
    $region13: #{forward.1} parent=1 // pred_fallthru
      _
    // Predicated region
    $region14: #{forward.1} parent=1 // pred_check
      _
    $region15: #{forward.1} parent=1 // pred_check_branch
      %149 = sbr.rel (0) target = $region17
    $region16: #{forward.1} parent=1 // pred_region
      %s151 = ssub.s32 256, 256
      %152 = vsyncadd [#allocation8], %s151
      %s153 = sshll.u32 [#allocation7], 4
      %s154 = int_to_ptr.vmem [resolvable:$true] %s153
      %159 = dma.hbm_to_vmem [thread:$0]  %s7, 256, %s154, [#allocation8], 128, 128, 8
    $region17: #{forward.1} parent=1 // pred_fallthru
      _
    // Predicated region
    $region18: #{forward.1} parent=1 // pred_check
      _
    $region19: #{forward.1} parent=1 // pred_check_branch
      %161 = sbr.rel (0) target = $region21
    $region20: #{forward.1} parent=1 // pred_region
      %s163 = ssub.s32 256, 256
      %164 = vsyncadd [#allocation8], %s163
      %s165 = sshll.u32 [#allocation9], 4
      %s166 = int_to_ptr.vmem [resolvable:$true] %s165
      %171 = dma.hbm_to_vmem [thread:$0]  %s9, 256, %s166, [#allocation8], 128, 128, 8
    $region21: #{forward.1} parent=1 // pred_fallthru
      _
    // Predicated region
    $region22: #{forward.1} parent=1 // pred_check
      _
    $region23: #{forward.1} parent=1 // pred_check_branch
      %173 = sbr.rel (0) target = $region25
    $region24: #{forward.1} parent=1 // pred_region
      %s175 = ssub.s32 256, 256
      %176 = vsyncadd [#allocation11], %s175
      %s177 = sshll.u32 [#allocation10], 4
      %s178 = int_to_ptr.vmem [resolvable:$true] %s177
      %183 = dma.hbm_to_vmem [thread:$0]  %s11, 256, %s178, [#allocation11], 128, 128, 8
    $region25: #{forward.1} parent=1 // pred_fallthru
      _
    // Predicated region
    $region26: #{forward.1} parent=1 // pred_check
      _
    $region27: #{forward.1} parent=1 // pred_check_branch
      %185 = sbr.rel (0) target = $region29
    $region28: #{forward.1} parent=1 // pred_region
      %s187 = ssub.s32 256, 256
      %188 = vsyncadd [#allocation11], %s187
      %s189 = sshll.u32 [#allocation12], 4
      %s190 = int_to_ptr.vmem [resolvable:$true] %s189
      %195 = dma.hbm_to_vmem [thread:$0]  %s13, 256, %s190, [#allocation11], 128, 128, 8
    $region29: #{forward.1} parent=1 // pred_fallthru
      _
    // Predicated region
    $region30: #{forward.1} parent=1 // pred_check
      _
    $region31: #{forward.1} parent=1 // pred_check_branch
      %197 = sbr.rel (0) target = $region33
    $region32: #{forward.1} parent=1 // pred_region
      %s199 = ssub.s32 256, 256
      %200 = vsyncadd [#allocation14], %s199
      %s201 = sshll.u32 [#allocation13], 4
      %s202 = int_to_ptr.vmem [resolvable:$true] %s201
      %207 = dma.hbm_to_vmem [thread:$0]  %s15, 256, %s202, [#allocation14], 128, 128, 8
    $region33: #{forward.1} parent=1 // pred_fallthru
      _
    // Predicated region
    $region34: #{forward.1} parent=1 // pred_check
      _
    $region35: #{forward.1} parent=1 // pred_check_branch
      %209 = sbr.rel (0) target = $region37
    $region36: #{forward.1} parent=1 // pred_region
      _
    $region37: #{forward.1} parent=1 // pred_fallthru
      _
    // Predicated region
    $region38: #{forward.1} parent=1 // pred_check
      _
    $region39: #{forward.1} parent=1 // pred_check_branch
      %211 = sbr.rel (0) target = $region41
    $region40: #{forward.1} parent=1 // pred_region
      _
    $region41: #{forward.1} parent=1 // pred_fallthru
      _
    // Predicated region
    $region42: #{forward.1} parent=1 // pred_check
      _
    $region43: #{forward.1} parent=1 // pred_check_branch
      %213 = sbr.rel (0) target = $region45
    $region44: #{forward.1} parent=1 // pred_region
      _
    $region45: #{forward.1} parent=1 // pred_fallthru
      _
    // Predicated region
    $region46: #{forward.1} parent=1 // pred_check
      _
    $region47: #{forward.1} parent=1 // pred_check_branch
      %215 = sbr.rel (0) target = $region49
    $region48: #{forward.1} parent=1 // pred_region
      _
    $region49: #{forward.1} parent=1 // pred_fallthru
      _
    // Predicated region
    $region50: #{forward.1} parent=1 // pred_check
      _
    $region51: #{forward.1} parent=1 // pred_check_branch
      %217 = sbr.rel (0) target = $region53
    $region52: #{forward.1} parent=1 // pred_region
      %s219 = ssub.s32 1024, 1024
      %220 = vsyncadd [#allocation14], %s219
      %s221 = sshll.u32 [#allocation15], 4
      %s222 = int_to_ptr.vmem [resolvable:$true] %s221
      %227 = dma.hbm_to_vmem [thread:$0]  %s25, 1024, %s222, [#allocation14], 128, 128, 8
    $region53: #{forward.1} parent=1 // pred_fallthru
      _
    // Predicated region
    $region54: #{forward.1} parent=1 // pred_check
      _
    $region55: #{forward.1} parent=1 // pred_check_branch
      %229 = sbr.rel (0) target = $region57
    $region56: #{forward.1} parent=1 // pred_region
      _
    $region57: #{forward.1} parent=1 // pred_fallthru
      _
    // Predicated region
    $region58: #{forward.1} parent=1 // pred_check
      _
    $region59: #{forward.1} parent=1 // pred_check_branch
      %231 = sbr.rel (0) target = $region61
    $region60: #{forward.1} parent=1 // pred_region
      %s233 = ssub.s32 1024, 1024
      %234 = vsyncadd [#allocation17], %s233
      %s235 = sshll.u32 [#allocation16], 4
      %s236 = int_to_ptr.vmem [resolvable:$true] %s235
      %241 = dma.hbm_to_vmem [thread:$0]  %s29, 1024, %s236, [#allocation17], 128, 128, 8
    $region61: #{forward.1} parent=1 // pred_fallthru
      _
    // Predicated region
    $region62: #{forward.1} parent=1 // pred_check
      _
    $region63: #{forward.1} parent=1 // pred_check_branch
      %243 = sbr.rel (0) target = $region65
    $region64: #{forward.1} parent=1 // pred_region
      _
    $region65: #{forward.1} parent=1 // pred_fallthru
      _
    // Predicated region
    $region66: #{forward.1} parent=1 // pred_check
      _
    $region67: #{forward.1} parent=1 // pred_check_branch
      %245 = sbr.rel (0) target = $region69
    $region68: #{forward.1} parent=1 // pred_region
      %s247 = ssub.s32 1024, 1024
      %248 = vsyncadd [#allocation17], %s247
      %s249 = sshll.u32 [#allocation18], 4
      %s250 = int_to_ptr.vmem [resolvable:$true] %s249
      %255 = dma.hbm_to_vmem [thread:$0]  %s33, 1024, %s250, [#allocation17], 128, 128, 8
    $region69: #{forward.1} parent=1 // pred_fallthru
      _
    // Predicated region
    $region70: #{forward.1} parent=1 // pred_check
      _
    $region71: #{forward.1} parent=1 // pred_check_branch
      %257 = sbr.rel (0) target = $region73
    $region72: #{forward.1} parent=1 // pred_region
      _
    $region73: #{forward.1} parent=1 // pred_fallthru
      _
    // Predicated region
    $region74: #{forward.1} parent=1 // pred_check
      _
    $region75: #{forward.1} parent=1 // pred_check_branch
      %259 = sbr.rel (0) target = $region77
    $region76: #{forward.1} parent=1 // pred_region
      %s261 = ssub.s32 1024, 1024
      %262 = vsyncadd [#allocation20], %s261
      %s263 = sshll.u32 [#allocation19], 4
      %s264 = int_to_ptr.vmem [resolvable:$true] %s263
      %269 = dma.hbm_to_vmem [thread:$0]  %s37, 1024, %s264, [#allocation20], 128, 128, 8
    $region77: #{forward.1} parent=1 // pred_fallthru
      _
    // Predicated region
    $region78: #{forward.1} parent=1 // pred_check
      _
    $region79: #{forward.1} parent=1 // pred_check_branch
      %271 = sbr.rel (0) target = $region81
    $region80: #{forward.1} parent=1 // pred_region
      %s273 = ssub.s32 16, 16
      %274 = vsyncadd [#allocation20], %s273
      %s276 = sshll.u32 [#allocation21], 4
      %s277 = int_to_ptr.vmem [resolvable:$true] %s276
      %279 = dma.hbm_to_vmem [thread:$0]  %s39, 16, %s277, [#allocation20]
    $region81: #{forward.1} parent=1 // pred_fallthru
      _
    // Predicated region
    $region82: #{forward.1} parent=1 // pred_check
      _
    $region83: #{forward.1} parent=1 // pred_check_branch
      %281 = sbr.rel (0) target = $region85
    $region84: #{forward.1} parent=1 // pred_region
      %s283 = ssub.s32 1024, 1024
      %284 = vsyncadd [#allocation23], %s283
      %s285 = sshll.u32 [#allocation22], 4
      %s286 = int_to_ptr.vmem [resolvable:$true] %s285
      %291 = dma.hbm_to_vmem [thread:$0]  %s41, 1024, %s286, [#allocation23], 128, 128, 8
    $region85: #{forward.1} parent=1 // pred_fallthru
      _
    // Predicated region
    $region86: #{forward.1} parent=1 // pred_check
      _
    $region87: #{forward.1} parent=1 // pred_check_branch
      %293 = sbr.rel (0) target = $region89
    $region88: #{forward.1} parent=1 // pred_region
      %s295 = ssub.s32 16, 16
      %296 = vsyncadd [#allocation23], %s295
      %s298 = sshll.u32 [#allocation24], 4
      %s299 = int_to_ptr.vmem [resolvable:$true] %s298
      %301 = dma.hbm_to_vmem [thread:$0]  %s43, 16, %s299, [#allocation23]
    $region89: #{forward.1} parent=1 // pred_fallthru
      _
    // Predicated region
    $region90: #{forward.1} parent=1 // pred_check
      _
    $region91: #{forward.1} parent=1 // pred_check_branch
      %303 = sbr.rel (0) target = $region93
    $region92: #{forward.1} parent=1 // pred_region
      %s305 = ssub.s32 1024, 1024
      %306 = vsyncadd [#allocation26], %s305
      %s307 = sshll.u32 [#allocation25], 4
      %s308 = int_to_ptr.vmem [resolvable:$true] %s307
      %313 = dma.hbm_to_vmem [thread:$0]  %s45, 1024, %s308, [#allocation26], 128, 128, 8
    $region93: #{forward.1} parent=1 // pred_fallthru
      _
    // Predicated region
    $region94: #{forward.1} parent=1 // pred_check
      _
    $region95: #{forward.1} parent=1 // pred_check_branch
      %315 = sbr.rel (0) target = $region97
    $region96: #{forward.1} parent=1 // pred_region
      %s317 = ssub.s32 16, 16
      %318 = vsyncadd [#allocation26], %s317
      %s320 = sshll.u32 [#allocation27], 4
      %s321 = int_to_ptr.vmem [resolvable:$true] %s320
      %323 = dma.hbm_to_vmem [thread:$0]  %s47, 16, %s321, [#allocation26]
    $region97: #{forward.1} parent=1 // pred_fallthru
      _
    // Predicated region
    $region98: #{forward.1} parent=1 // pred_check
      _
    $region99: #{forward.1} parent=1 // pred_check_branch
      %325 = sbr.rel (0) target = $region101
    $region100: #{forward.1} parent=1 // pred_region
      _
    $region101: #{forward.1} parent=1 // pred_fallthru
      _
    // Predicated region
    $region102: #{forward.1} parent=1 // pred_check
      _
    $region103: #{forward.1} parent=1 // pred_check_branch
      %327 = sbr.rel (0) target = $region105
    $region104: #{forward.1} parent=1 // pred_region
      %s329 = ssub.s32 16, 16
      %330 = vsyncadd [#allocation29], %s329
      %s332 = sshll.u32 [#allocation28], 4
      %s333 = int_to_ptr.vmem [resolvable:$true] %s332
      %335 = dma.hbm_to_vmem [thread:$0]  %s51, 16, %s333, [#allocation29]
    $region105: #{forward.1} parent=1 // pred_fallthru
      _
    // Predicated region
    $region106: #{forward.1} parent=1 // pred_check
      _
    $region107: #{forward.1} parent=1 // pred_check_branch
      %337 = sbr.rel (0) target = $region109
    $region108: #{forward.1} parent=1 // pred_region
      %s339 = ssub.s32 1024, 1024
      %340 = vsyncadd [#allocation29], %s339
      %s341 = sshll.u32 [#allocation30], 4
      %s342 = int_to_ptr.vmem [resolvable:$true] %s341
      %347 = dma.hbm_to_vmem [thread:$0]  %s53, 1024, %s342, [#allocation29], 128, 128, 8
    $region109: #{forward.1} parent=1 // pred_fallthru
      _
    // Predicated region
    $region110: #{forward.1} parent=1 // pred_check
      _
    $region111: #{forward.1} parent=1 // pred_check_branch
      %349 = sbr.rel (0) target = $region113
    $region112: #{forward.1} parent=1 // pred_region
      %s351 = ssub.s32 16, 16
      %352 = vsyncadd [#allocation32], %s351
      %s354 = sshll.u32 [#allocation31], 4
      %s355 = int_to_ptr.vmem [resolvable:$true] %s354
      %357 = dma.hbm_to_vmem [thread:$0]  %s55, 16, %s355, [#allocation32]
    $region113: #{forward.1} parent=1 // pred_fallthru
      _
    // Predicated region
    $region114: #{forward.1} parent=1 // pred_check
      _
    $region115: #{forward.1} parent=1 // pred_check_branch
      %359 = sbr.rel (0) target = $region117
    $region116: #{forward.1} parent=1 // pred_region
      %s361 = ssub.s32 1024, 1024
      %362 = vsyncadd [#allocation32], %s361
      %s363 = sshll.u32 [#allocation33], 4
      %s364 = int_to_ptr.vmem [resolvable:$true] %s363
      %369 = dma.hbm_to_vmem [thread:$0]  %s57, 1024, %s364, [#allocation32], 128, 128, 8
    $region117: #{forward.1} parent=1 // pred_fallthru
      _
    // Predicated region
    $region118: #{forward.1} parent=1 // pred_check
      _
    $region119: #{forward.1} parent=1 // pred_check_branch
      %371 = sbr.rel (0) target = $region121
    $region120: #{forward.1} parent=1 // pred_region
      %s373 = ssub.s32 16, 16
      %374 = vsyncadd [#allocation35], %s373
      %s376 = sshll.u32 [#allocation34], 4
      %s377 = int_to_ptr.vmem [resolvable:$true] %s376
      %379 = dma.hbm_to_vmem [thread:$0]  %s59, 16, %s377, [#allocation35]
    $region121: #{forward.1} parent=1 // pred_fallthru
      _
    // Predicated region
    $region122: #{forward.1} parent=1 // pred_check
      _
    $region123: #{forward.1} parent=1 // pred_check_branch
      %381 = sbr.rel (0) target = $region125
    $region124: #{forward.1} parent=1 // pred_region
      %s383 = ssub.s32 1024, 1024
      %384 = vsyncadd [#allocation35], %s383
      %s385 = sshll.u32 [#allocation36], 4
      %s386 = int_to_ptr.vmem [resolvable:$true] %s385
      %391 = dma.hbm_to_vmem [thread:$0]  %s61, 1024, %s386, [#allocation35], 128, 128, 8
    $region125: #{forward.1} parent=1 // pred_fallthru
      _
    // Predicated region
    $region126: #{forward.1} parent=1 // pred_check
      _
    $region127: #{forward.1} parent=1 // pred_check_branch
      %393 = sbr.rel (0) target = $region129
    $region128: #{forward.1} parent=1 // pred_region
      %s395 = ssub.s32 16, 16
      %396 = vsyncadd [#allocation38], %s395
      %s398 = sshll.u32 [#allocation37], 4
      %s399 = int_to_ptr.vmem [resolvable:$true] %s398
      %401 = dma.hbm_to_vmem [thread:$0]  %s63, 16, %s399, [#allocation38]
    $region129: #{forward.1} parent=1 // pred_fallthru
      _
    // Predicated region
    $region130: #{forward.1} parent=1 // pred_check
      _
    $region131: #{forward.1} parent=1 // pred_check_branch
      %403 = sbr.rel (0) target = $region133
    $region132: #{forward.1} parent=1 // pred_region
      %s405 = ssub.s32 1024, 1024
      %406 = vsyncadd [#allocation38], %s405
      %s407 = sshll.u32 [#allocation39], 4
      %s408 = int_to_ptr.vmem [resolvable:$true] %s407
      %413 = dma.hbm_to_vmem [thread:$0]  %s65, 1024, %s408, [#allocation38], 128, 128, 8
    $region133: #{forward.1} parent=1 // pred_fallthru
      _
    // Predicated region
    $region134: #{forward.1} parent=1 // pred_check
      _
    $region135: #{forward.1} parent=1 // pred_check_branch
      %415 = sbr.rel (0) target = $region137
    $region136: #{forward.1} parent=1 // pred_region
      %s417 = ssub.s32 16, 16
      %418 = vsyncadd [#allocation41], %s417
      %s420 = sshll.u32 [#allocation40], 4
      %s421 = int_to_ptr.vmem [resolvable:$true] %s420
      %423 = dma.hbm_to_vmem [thread:$0]  %s67, 16, %s421, [#allocation41]
    $region137: #{forward.1} parent=1 // pred_fallthru
      _
    // Predicated region
    $region138: #{forward.1} parent=1 // pred_check
      _
    $region139: #{forward.1} parent=1 // pred_check_branch
      %425 = sbr.rel (0) target = $region141
    $region140: #{forward.1} parent=1 // pred_region
      %s427 = ssub.s32 1024, 1024
      %428 = vsyncadd [#allocation41], %s427
      %s429 = sshll.u32 [#allocation42], 4
      %s430 = int_to_ptr.vmem [resolvable:$true] %s429
      %435 = dma.hbm_to_vmem [thread:$0]  %s69, 1024, %s430, [#allocation41], 128, 128, 8
    $region141: #{forward.1} parent=1 // pred_fallthru
      _
    // Predicated region
    $region142: #{forward.1} parent=1 // pred_check
      _
    $region143: #{forward.1} parent=1 // pred_check_branch
      %437 = sbr.rel (0) target = $region145
    $region144: #{forward.1} parent=1 // pred_region
      %s439 = ssub.s32 16, 16
      %440 = vsyncadd [#allocation44], %s439
      %s442 = sshll.u32 [#allocation43], 4
      %s443 = int_to_ptr.vmem [resolvable:$true] %s442
      %445 = dma.hbm_to_vmem [thread:$0]  %s71, 16, %s443, [#allocation44]
    $region145: #{forward.1} parent=1 // pred_fallthru
      _
    // Predicated region
    $region146: #{forward.1} parent=1 // pred_check
      _
    $region147: #{forward.1} parent=1 // pred_check_branch
      %447 = sbr.rel (0) target = $region149
    $region148: #{forward.1} parent=1 // pred_region
      %s449 = ssub.s32 1024, 1024
      %450 = vsyncadd [#allocation44], %s449
      %s451 = sshll.u32 [#allocation45], 4
      %s452 = int_to_ptr.vmem [resolvable:$true] %s451
      %457 = dma.hbm_to_vmem [thread:$0]  %s73, 1024, %s452, [#allocation44], 128, 128, 8
    $region149: #{forward.1} parent=1 // pred_fallthru
      _
    // Predicated region
    $region150: #{forward.1} parent=1 // pred_check
      _
    $region151: #{forward.1} parent=1 // pred_check_branch
      %459 = sbr.rel (0) target = $region153
    $region152: #{forward.1} parent=1 // pred_region
      %s461 = ssub.s32 16, 16
      %462 = vsyncadd [#allocation47], %s461
      %s464 = sshll.u32 [#allocation46], 4
      %s465 = int_to_ptr.vmem [resolvable:$true] %s464
      %467 = dma.hbm_to_vmem [thread:$0]  %s75, 16, %s465, [#allocation47]
    $region153: #{forward.1} parent=1 // pred_fallthru
      _
    // Predicated region
    $region154: #{forward.1} parent=1 // pred_check
      _
    $region155: #{forward.1} parent=1 // pred_check_branch
      %469 = sbr.rel (0) target = $region157
    $region156: #{forward.1} parent=1 // pred_region
      %s471 = ssub.s32 1024, 1024
      %472 = vsyncadd [#allocation47], %s471
      %s473 = sshll.u32 [#allocation48], 4
      %s474 = int_to_ptr.vmem [resolvable:$true] %s473
      %479 = dma.hbm_to_vmem [thread:$0]  %s77, 1024, %s474, [#allocation47], 128, 128, 8
    $region157: #{forward.1} parent=1 // pred_fallthru
      _
    // Predicated region
    $region158: #{forward.1} parent=1 // pred_check
      _
    $region159: #{forward.1} parent=1 // pred_check_branch
      %481 = sbr.rel (0) target = $region161
    $region160: #{forward.1} parent=1 // pred_region
      %s483 = ssub.s32 16, 16
      %484 = vsyncadd [#allocation50], %s483
      %s486 = sshll.u32 [#allocation49], 4
      %s487 = int_to_ptr.vmem [resolvable:$true] %s486
      %489 = dma.hbm_to_vmem [thread:$0]  %s79, 16, %s487, [#allocation50]
    $region161: #{forward.1} parent=1 // pred_fallthru
      _
    // Predicated region
    $region162: #{forward.1} parent=1 // pred_check
      _
    $region163: #{forward.1} parent=1 // pred_check_branch
      %491 = sbr.rel (0) target = $region165
    $region164: #{forward.1} parent=1 // pred_region
      %s493 = ssub.s32 1024, 1024
      %494 = vsyncadd [#allocation50], %s493
      %s495 = sshll.u32 [#allocation51], 4
      %s496 = int_to_ptr.vmem [resolvable:$true] %s495
      %501 = dma.hbm_to_vmem [thread:$0]  %s81, 1024, %s496, [#allocation50], 128, 128, 8
    $region165: #{forward.1} parent=1 // pred_fallthru
      _
    // Predicated region
    $region166: #{forward.1} parent=1 // pred_check
      _
    $region167: #{forward.1} parent=1 // pred_check_branch
      %503 = sbr.rel (0) target = $region169
    $region168: #{forward.1} parent=1 // pred_region
      %s505 = ssub.s32 16, 16
      %506 = vsyncadd [#allocation53], %s505
      %s508 = sshll.u32 [#allocation52], 4
      %s509 = int_to_ptr.vmem [resolvable:$true] %s508
      %511 = dma.hbm_to_vmem [thread:$0]  %s83, 16, %s509, [#allocation53]
    $region169: #{forward.1} parent=1 // pred_fallthru
      _
    // Predicated region
    $region170: #{forward.1} parent=1 // pred_check
      _
    $region171: #{forward.1} parent=1 // pred_check_branch
      %513 = sbr.rel (0) target = $region173
    $region172: #{forward.1} parent=1 // pred_region
      _
    $region173: #{forward.1} parent=1 // pred_fallthru
      _
    // Predicated region
    $region174: #{forward.1} parent=1 // pred_check
      _
    $region175: #{forward.1} parent=1 // pred_check_branch
      %515 = sbr.rel (0) target = $region177
    $region176: #{forward.1} parent=1 // pred_region
      %s517 = ssub.s32 16, 16
      %518 = vsyncadd [#allocation53], %s517
      %s520 = sshll.u32 [#allocation54], 4
      %s521 = int_to_ptr.vmem [resolvable:$true] %s520
      %523 = dma.hbm_to_vmem [thread:$0]  %s87, 16, %s521, [#allocation53]
    $region177: #{forward.1} parent=1 // pred_fallthru
      _
    // Predicated region
    $region178: #{forward.1} parent=1 // pred_check
      _
    $region179: #{forward.1} parent=1 // pred_check_branch
      %525 = sbr.rel (0) target = $region181
    $region180: #{forward.1} parent=1 // pred_region
      %526 = dma.done [#allocation3], 256
    $region181: #{forward.1} parent=1 // pred_fallthru
      _
    // Predicated region
    $region182: #{forward.1} parent=1 // pred_check
      _
    $region183: #{forward.1} parent=1 // pred_check_branch
      %528 = sbr.rel (0) target = $region185
    $region184: #{forward.1} parent=1 // pred_region
      %529 = dma.done [#allocation5], 256
    $region185: #{forward.1} parent=1 // pred_fallthru
      _
    // Predicated region
    $region186: #{forward.1} parent=1 // pred_check
      _
    $region187: #{forward.1} parent=1 // pred_check_branch
      %531 = sbr.rel (0) target = $region189
    $region188: #{forward.1} parent=1 // pred_region
      %532 = dma.done [#allocation5], 256
    $region189: #{forward.1} parent=1 // pred_fallthru
      _
    // Predicated region
    $region190: #{forward.1} parent=1 // pred_check
      _
    $region191: #{forward.1} parent=1 // pred_check_branch
      %534 = sbr.rel (0) target = $region193
    $region192: #{forward.1} parent=1 // pred_region
      %535 = dma.done [#allocation8], 256
    $region193: #{forward.1} parent=1 // pred_fallthru
      _
    // Predicated region
    $region194: #{forward.1} parent=1 // pred_check
      _
    $region195: #{forward.1} parent=1 // pred_check_branch
      %537 = sbr.rel (0) target = $region197
    $region196: #{forward.1} parent=1 // pred_region
      %538 = dma.done [#allocation8], 256
    $region197: #{forward.1} parent=1 // pred_fallthru
      _
    // Predicated region
    $region198: #{forward.1} parent=1 // pred_check
      _
    $region199: #{forward.1} parent=1 // pred_check_branch
      %540 = sbr.rel (0) target = $region201
    $region200: #{forward.1} parent=1 // pred_region
      %541 = dma.done [#allocation11], 256
    $region201: #{forward.1} parent=1 // pred_fallthru
      _
    // Predicated region
    $region202: #{forward.1} parent=1 // pred_check
      _
    $region203: #{forward.1} parent=1 // pred_check_branch
      %543 = sbr.rel (0) target = $region205
    $region204: #{forward.1} parent=1 // pred_region
      %544 = dma.done [#allocation11], 256
    $region205: #{forward.1} parent=1 // pred_fallthru
      _
    // Predicated region
    $region206: #{forward.1} parent=1 // pred_check
      _
    $region207: #{forward.1} parent=1 // pred_check_branch
      %546 = sbr.rel (0) target = $region209
    $region208: #{forward.1} parent=1 // pred_region
      %547 = dma.done [#allocation14], 256
    $region209: #{forward.1} parent=1 // pred_fallthru
      _
    // Predicated region
    $region210: #{forward.1} parent=1 // pred_check
      _
    $region211: #{forward.1} parent=1 // pred_check_branch
      %549 = sbr.rel (0) target = $region213
    $region212: #{forward.1} parent=1 // pred_region
      %550 = dma.done [#allocation14], 1024
    $region213: #{forward.1} parent=1 // pred_fallthru
      _
    // Predicated region
    $region214: #{forward.1} parent=1 // pred_check
      _
    $region215: #{forward.1} parent=1 // pred_check_branch
      %552 = sbr.rel (0) target = $region217
    $region216: #{forward.1} parent=1 // pred_region
      %553 = dma.done [#allocation17], 1024
    $region217: #{forward.1} parent=1 // pred_fallthru
      _
    // Predicated region
    $region218: #{forward.1} parent=1 // pred_check
      _
    $region219: #{forward.1} parent=1 // pred_check_branch
      %555 = sbr.rel (0) target = $region221
    $region220: #{forward.1} parent=1 // pred_region
      %556 = dma.done [#allocation17], 1024
    $region221: #{forward.1} parent=1 // pred_fallthru
      _
    // Predicated region
    $region222: #{forward.1} parent=1 // pred_check
      _
    $region223: #{forward.1} parent=1 // pred_check_branch
      %558 = sbr.rel (0) target = $region225
    $region224: #{forward.1} parent=1 // pred_region
      %559 = dma.done [#allocation20], 1024
    $region225: #{forward.1} parent=1 // pred_fallthru
      _
    // Predicated region
    $region226: #{forward.1} parent=1 // pred_check
      _
    $region227: #{forward.1} parent=1 // pred_check_branch
      %561 = sbr.rel (0) target = $region229
    $region228: #{forward.1} parent=1 // pred_region
      %562 = dma.done [#allocation20], 16
    $region229: #{forward.1} parent=1 // pred_fallthru
      _
    // Predicated region
    $region230: #{forward.1} parent=1 // pred_check
      _
    $region231: #{forward.1} parent=1 // pred_check_branch
      %564 = sbr.rel (0) target = $region233
    $region232: #{forward.1} parent=1 // pred_region
      %565 = dma.done [#allocation23], 1024
    $region233: #{forward.1} parent=1 // pred_fallthru
      _
    // Predicated region
    $region234: #{forward.1} parent=1 // pred_check
      _
    $region235: #{forward.1} parent=1 // pred_check_branch
      %567 = sbr.rel (0) target = $region237
    $region236: #{forward.1} parent=1 // pred_region
      %568 = dma.done [#allocation23], 16
    $region237: #{forward.1} parent=1 // pred_fallthru
      _
    // Predicated region
    $region238: #{forward.1} parent=1 // pred_check
      _
    $region239: #{forward.1} parent=1 // pred_check_branch
      %570 = sbr.rel (0) target = $region241
    $region240: #{forward.1} parent=1 // pred_region
      %571 = dma.done [#allocation26], 1024
    $region241: #{forward.1} parent=1 // pred_fallthru
      _
    // Predicated region
    $region242: #{forward.1} parent=1 // pred_check
      _
    $region243: #{forward.1} parent=1 // pred_check_branch
      %573 = sbr.rel (0) target = $region245
    $region244: #{forward.1} parent=1 // pred_region
      %574 = dma.done [#allocation26], 16
    $region245: #{forward.1} parent=1 // pred_fallthru
      _
    // Predicated region
    $region246: #{forward.1} parent=1 // pred_check
      _
    $region247: #{forward.1} parent=1 // pred_check_branch
      %576 = sbr.rel (0) target = $region249
    $region248: #{forward.1} parent=1 // pred_region
      %577 = dma.done [#allocation29], 16
    $region249: #{forward.1} parent=1 // pred_fallthru
      _
    // Predicated region
    $region250: #{forward.1} parent=1 // pred_check
      _
    $region251: #{forward.1} parent=1 // pred_check_branch
      %579 = sbr.rel (0) target = $region253
    $region252: #{forward.1} parent=1 // pred_region
      %580 = dma.done [#allocation29], 1024
    $region253: #{forward.1} parent=1 // pred_fallthru
      _
    // Predicated region
    $region254: #{forward.1} parent=1 // pred_check
      _
    $region255: #{forward.1} parent=1 // pred_check_branch
      %582 = sbr.rel (0) target = $region257
    $region256: #{forward.1} parent=1 // pred_region
      %583 = dma.done [#allocation32], 16
    $region257: #{forward.1} parent=1 // pred_fallthru
      _
    // Predicated region
    $region258: #{forward.1} parent=1 // pred_check
      _
    $region259: #{forward.1} parent=1 // pred_check_branch
      %585 = sbr.rel (0) target = $region261
    $region260: #{forward.1} parent=1 // pred_region
      %586 = dma.done [#allocation32], 1024
    $region261: #{forward.1} parent=1 // pred_fallthru
      _
    // Predicated region
    $region262: #{forward.1} parent=1 // pred_check
      _
    $region263: #{forward.1} parent=1 // pred_check_branch
      %588 = sbr.rel (0) target = $region265
    $region264: #{forward.1} parent=1 // pred_region
      %589 = dma.done [#allocation35], 16
    $region265: #{forward.1} parent=1 // pred_fallthru
      _
    // Predicated region
    $region266: #{forward.1} parent=1 // pred_check
      _
    $region267: #{forward.1} parent=1 // pred_check_branch
      %591 = sbr.rel (0) target = $region269
    $region268: #{forward.1} parent=1 // pred_region
      %592 = dma.done [#allocation35], 1024
    $region269: #{forward.1} parent=1 // pred_fallthru
      _
    // Predicated region
    $region270: #{forward.1} parent=1 // pred_check
      _
    $region271: #{forward.1} parent=1 // pred_check_branch
      %594 = sbr.rel (0) target = $region273
    $region272: #{forward.1} parent=1 // pred_region
      %595 = dma.done [#allocation38], 16
    $region273: #{forward.1} parent=1 // pred_fallthru
      _
    // Predicated region
    $region274: #{forward.1} parent=1 // pred_check
      _
    $region275: #{forward.1} parent=1 // pred_check_branch
      %597 = sbr.rel (0) target = $region277
    $region276: #{forward.1} parent=1 // pred_region
      %598 = dma.done [#allocation38], 1024
    $region277: #{forward.1} parent=1 // pred_fallthru
      _
    // Predicated region
    $region278: #{forward.1} parent=1 // pred_check
      _
    $region279: #{forward.1} parent=1 // pred_check_branch
      %600 = sbr.rel (0) target = $region281
    $region280: #{forward.1} parent=1 // pred_region
      %601 = dma.done [#allocation41], 16
    $region281: #{forward.1} parent=1 // pred_fallthru
      _
    // Predicated region
    $region282: #{forward.1} parent=1 // pred_check
      _
    $region283: #{forward.1} parent=1 // pred_check_branch
      %603 = sbr.rel (0) target = $region285
    $region284: #{forward.1} parent=1 // pred_region
      %604 = dma.done [#allocation41], 1024
    $region285: #{forward.1} parent=1 // pred_fallthru
      _
    // Predicated region
    $region286: #{forward.1} parent=1 // pred_check
      _
    $region287: #{forward.1} parent=1 // pred_check_branch
      %606 = sbr.rel (0) target = $region289
    $region288: #{forward.1} parent=1 // pred_region
      %607 = dma.done [#allocation44], 16
    $region289: #{forward.1} parent=1 // pred_fallthru
      _
    // Predicated region
    $region290: #{forward.1} parent=1 // pred_check
      _
    $region291: #{forward.1} parent=1 // pred_check_branch
      %609 = sbr.rel (0) target = $region293
    $region292: #{forward.1} parent=1 // pred_region
      %610 = dma.done [#allocation44], 1024
    $region293: #{forward.1} parent=1 // pred_fallthru
      _
    // Predicated region
    $region294: #{forward.1} parent=1 // pred_check
      _
    $region295: #{forward.1} parent=1 // pred_check_branch
      %612 = sbr.rel (0) target = $region297
    $region296: #{forward.1} parent=1 // pred_region
      %613 = dma.done [#allocation47], 16
    $region297: #{forward.1} parent=1 // pred_fallthru
      _
    // Predicated region
    $region298: #{forward.1} parent=1 // pred_check
      _
    $region299: #{forward.1} parent=1 // pred_check_branch
      %615 = sbr.rel (0) target = $region301
    $region300: #{forward.1} parent=1 // pred_region
      %616 = dma.done [#allocation47], 1024
    $region301: #{forward.1} parent=1 // pred_fallthru
      _
    // Predicated region
    $region302: #{forward.1} parent=1 // pred_check
      _
    $region303: #{forward.1} parent=1 // pred_check_branch
      %618 = sbr.rel (0) target = $region305
    $region304: #{forward.1} parent=1 // pred_region
      %619 = dma.done [#allocation50], 16
    $region305: #{forward.1} parent=1 // pred_fallthru
      _
    // Predicated region
    $region306: #{forward.1} parent=1 // pred_check
      _
    $region307: #{forward.1} parent=1 // pred_check_branch
      %621 = sbr.rel (0) target = $region309
    $region308: #{forward.1} parent=1 // pred_region
      %622 = dma.done [#allocation50], 1024
    $region309: #{forward.1} parent=1 // pred_fallthru
      _
    // Predicated region
    $region310: #{forward.1} parent=1 // pred_check
      _
    $region311: #{forward.1} parent=1 // pred_check_branch
      %624 = sbr.rel (0) target = $region313
    $region312: #{forward.1} parent=1 // pred_region
      %625 = dma.done [#allocation53], 16
    $region313: #{forward.1} parent=1 // pred_fallthru
      _
    // Predicated region
    $region314: #{forward.1} parent=1 // pred_check
      _
    $region315: #{forward.1} parent=1 // pred_check_branch
      %627 = sbr.rel (0) target = $region317
    $region316: #{forward.1} parent=1 // pred_region
      %628 = dma.done [#allocation53], 16
    $region317: #{forward.1} parent=1 // pred_fallthru
      _
    %v629 = vld [vmem:[#allocation2] sm:$0xff]
    %v630 = vld [vmem:[#allocation2 + $0x8] sm:$0xff]
    %v631 = vld [vmem:[#allocation4] sm:$0xff]
    %v632 = vld [vmem:[#allocation4 + $0x8] sm:$0xff]
    %v633 = vld [vmem:[#allocation6] sm:$0xff]
    %v634 = vld [vmem:[#allocation6 + $0x8] sm:$0xff]
    %v635 = vld [vmem:[#allocation7] sm:$0xff]
    %v636 = vld [vmem:[#allocation7 + $0x8] sm:$0xff]
    %v637 = vld [vmem:[#allocation9] sm:$0xff]
    %v638 = vld [vmem:[#allocation9 + $0x8] sm:$0xff]
    %v639 = vld [vmem:[#allocation10] sm:$0xff]
    %v640 = vld [vmem:[#allocation10 + $0x8] sm:$0xff]
    %v641 = vld [vmem:[#allocation12] sm:$0xff]
    %v642 = vld [vmem:[#allocation12 + $0x8] sm:$0xff]
    %v643 = vld [vmem:[#allocation13] sm:$0xff]
    %v644 = vld [vmem:[#allocation13 + $0x8] sm:$0xff]
    %v645 = vld [vmem:[%s17] sm:$0xff]
    %v646 = vld [vmem:[%s17 + $0x8] sm:$0xff]
    %v647 = vld [vmem:[%s19] sm:$0xff]
    %v648 = vld [vmem:[%s19 + $0x8] sm:$0xff]
    %v649 = vld [vmem:[%s21] sm:$0xff]
    %v650 = vld [vmem:[%s21 + $0x8] sm:$0xff]
    %v651 = vld [vmem:[%s23] sm:$0xff]
    %v652 = vld [vmem:[%s23 + $0x8] sm:$0xff]
    %v653 = vld [vmem:[#allocation15] sm:$0xff]
    %v654 = vld [vmem:[#allocation15 + $0x8] sm:$0xff]
    %v655 = vld [vmem:[#allocation15 + $0x10] sm:$0xff]
    %v656 = vld [vmem:[#allocation15 + $0x18] sm:$0xff]
    %v657 = vld [vmem:[#allocation15 + $0x20] sm:$0xff]
    %v658 = vld [vmem:[#allocation15 + $0x28] sm:$0xff]
    %v659 = vld [vmem:[#allocation15 + $0x30] sm:$0xff]
    %v660 = vld [vmem:[#allocation15 + $0x38] sm:$0xff]
    %v661 = vld [vmem:[%s27] sm:$0x1]
    %v662 = vld [vmem:[#allocation16] sm:$0xff]
    %v663 = vld [vmem:[#allocation16 + $0x8] sm:$0xff]
    %v664 = vld [vmem:[#allocation16 + $0x10] sm:$0xff]
    %v665 = vld [vmem:[#allocation16 + $0x18] sm:$0xff]
    %v666 = vld [vmem:[#allocation16 + $0x20] sm:$0xff]
    %v667 = vld [vmem:[#allocation16 + $0x28] sm:$0xff]
    %v668 = vld [vmem:[#allocation16 + $0x30] sm:$0xff]
    %v669 = vld [vmem:[#allocation16 + $0x38] sm:$0xff]
    %v670 = vld [vmem:[%s31] sm:$0x1]
    %v671 = vld [vmem:[#allocation18] sm:$0xff]
    %v672 = vld [vmem:[#allocation18 + $0x8] sm:$0xff]
    %v673 = vld [vmem:[#allocation18 + $0x10] sm:$0xff]
    %v674 = vld [vmem:[#allocation18 + $0x18] sm:$0xff]
    %v675 = vld [vmem:[#allocation18 + $0x20] sm:$0xff]
    %v676 = vld [vmem:[#allocation18 + $0x28] sm:$0xff]
    %v677 = vld [vmem:[#allocation18 + $0x30] sm:$0xff]
    %v678 = vld [vmem:[#allocation18 + $0x38] sm:$0xff]
    %v679 = vld [vmem:[%s35] sm:$0x1]
    %v680 = vld [vmem:[#allocation19] sm:$0xff]
    %v681 = vld [vmem:[#allocation19 + $0x8] sm:$0xff]
    %v682 = vld [vmem:[#allocation19 + $0x10] sm:$0xff]
    %v683 = vld [vmem:[#allocation19 + $0x18] sm:$0xff]
    %v684 = vld [vmem:[#allocation19 + $0x20] sm:$0xff]
    %v685 = vld [vmem:[#allocation19 + $0x28] sm:$0xff]
    %v686 = vld [vmem:[#allocation19 + $0x30] sm:$0xff]
    %v687 = vld [vmem:[#allocation19 + $0x38] sm:$0xff]
    %v688 = vld [vmem:[#allocation21] sm:$0x1]
    %v689 = vld [vmem:[#allocation22] sm:$0xff]
    %v690 = vld [vmem:[#allocation22 + $0x8] sm:$0xff]
    %v691 = vld [vmem:[#allocation22 + $0x10] sm:$0xff]
    %v692 = vld [vmem:[#allocation22 + $0x18] sm:$0xff]
    %v693 = vld [vmem:[#allocation22 + $0x20] sm:$0xff]
    %v694 = vld [vmem:[#allocation22 + $0x28] sm:$0xff]
    %v695 = vld [vmem:[#allocation22 + $0x30] sm:$0xff]
    %v696 = vld [vmem:[#allocation22 + $0x38] sm:$0xff]
    %v697 = vld [vmem:[#allocation24] sm:$0x1]
    %v698 = vld [vmem:[#allocation25] sm:$0xff]
    %v699 = vld [vmem:[#allocation25 + $0x8] sm:$0xff]
    %v700 = vld [vmem:[#allocation25 + $0x10] sm:$0xff]
    %v701 = vld [vmem:[#allocation25 + $0x18] sm:$0xff]
    %v702 = vld [vmem:[#allocation25 + $0x20] sm:$0xff]
    %v703 = vld [vmem:[#allocation25 + $0x28] sm:$0xff]
    %v704 = vld [vmem:[#allocation25 + $0x30] sm:$0xff]
    %v705 = vld [vmem:[#allocation25 + $0x38] sm:$0xff]
    %v706 = vld [vmem:[#allocation27] sm:$0x1]
    %v707 = vld [vmem:[%s49] sm:$0xff]
    %v708 = vld [vmem:[%s49 + $0x8] sm:$0xff]
    %v709 = vld [vmem:[%s49 + $0x10] sm:$0xff]
    %v710 = vld [vmem:[%s49 + $0x18] sm:$0xff]
    %v711 = vld [vmem:[%s49 + $0x20] sm:$0xff]
    %v712 = vld [vmem:[%s49 + $0x28] sm:$0xff]
    %v713 = vld [vmem:[%s49 + $0x30] sm:$0xff]
    %v714 = vld [vmem:[%s49 + $0x38] sm:$0xff]
    %v715 = vld [vmem:[%s49 + $0x40] sm:$0xff]
    %v716 = vld [vmem:[%s49 + $0x48] sm:$0xff]
    %v717 = vld [vmem:[%s49 + $0x50] sm:$0xff]
    %v718 = vld [vmem:[%s49 + $0x58] sm:$0xff]
    %v719 = vld [vmem:[%s49 + $0x60] sm:$0xff]
    %v720 = vld [vmem:[%s49 + $0x68] sm:$0xff]
    %v721 = vld [vmem:[%s49 + $0x70] sm:$0xff]
    %v722 = vld [vmem:[%s49 + $0x78] sm:$0xff]
    %v723 = vld [vmem:[#allocation28] sm:$0x1]
    %v724 = vld [vmem:[#allocation30] sm:$0xff]
    %v725 = vld [vmem:[#allocation30 + $0x8] sm:$0xff]
    %v726 = vld [vmem:[#allocation30 + $0x10] sm:$0xff]
    %v727 = vld [vmem:[#allocation30 + $0x18] sm:$0xff]
    %v728 = vld [vmem:[#allocation30 + $0x20] sm:$0xff]
    %v729 = vld [vmem:[#allocation30 + $0x28] sm:$0xff]
    %v730 = vld [vmem:[#allocation30 + $0x30] sm:$0xff]
    %v731 = vld [vmem:[#allocation30 + $0x38] sm:$0xff]
    %v732 = vld [vmem:[#allocation31] sm:$0x1]
    %v733 = vld [vmem:[#allocation33] sm:$0xff]
    %v734 = vld [vmem:[#allocation33 + $0x8] sm:$0xff]
    %v735 = vld [vmem:[#allocation33 + $0x10] sm:$0xff]
    %v736 = vld [vmem:[#allocation33 + $0x18] sm:$0xff]
    %v737 = vld [vmem:[#allocation33 + $0x20] sm:$0xff]
    %v738 = vld [vmem:[#allocation33 + $0x28] sm:$0xff]
    %v739 = vld [vmem:[#allocation33 + $0x30] sm:$0xff]
    %v740 = vld [vmem:[#allocation33 + $0x38] sm:$0xff]
    %v741 = vld [vmem:[#allocation34] sm:$0x1]
    %v742 = vld [vmem:[#allocation36] sm:$0xff]
    %v743 = vld [vmem:[#allocation36 + $0x8] sm:$0xff]
    %v744 = vld [vmem:[#allocation36 + $0x10] sm:$0xff]
    %v745 = vld [vmem:[#allocation36 + $0x18] sm:$0xff]
    %v746 = vld [vmem:[#allocation36 + $0x20] sm:$0xff]
    %v747 = vld [vmem:[#allocation36 + $0x28] sm:$0xff]
    %v748 = vld [vmem:[#allocation36 + $0x30] sm:$0xff]
    %v749 = vld [vmem:[#allocation36 + $0x38] sm:$0xff]
    %v750 = vld [vmem:[#allocation37] sm:$0x1]
    %v751 = vld [vmem:[#allocation39] sm:$0xff]
    %v752 = vld [vmem:[#allocation39 + $0x8] sm:$0xff]
    %v753 = vld [vmem:[#allocation39 + $0x10] sm:$0xff]
    %v754 = vld [vmem:[#allocation39 + $0x18] sm:$0xff]
    %v755 = vld [vmem:[#allocation39 + $0x20] sm:$0xff]
    %v756 = vld [vmem:[#allocation39 + $0x28] sm:$0xff]
    %v757 = vld [vmem:[#allocation39 + $0x30] sm:$0xff]
    %v758 = vld [vmem:[#allocation39 + $0x38] sm:$0xff]
    %v759 = vld [vmem:[#allocation40] sm:$0x1]
    %v760 = vld [vmem:[#allocation42] sm:$0xff]
    %v761 = vld [vmem:[#allocation42 + $0x8] sm:$0xff]
    %v762 = vld [vmem:[#allocation42 + $0x10] sm:$0xff]
    %v763 = vld [vmem:[#allocation42 + $0x18] sm:$0xff]
    %v764 = vld [vmem:[#allocation42 + $0x20] sm:$0xff]
    %v765 = vld [vmem:[#allocation42 + $0x28] sm:$0xff]
    %v766 = vld [vmem:[#allocation42 + $0x30] sm:$0xff]
    %v767 = vld [vmem:[#allocation42 + $0x38] sm:$0xff]
    %v768 = vld [vmem:[#allocation43] sm:$0x1]
    %v769 = vld [vmem:[#allocation45] sm:$0xff]
    %v770 = vld [vmem:[#allocation45 + $0x8] sm:$0xff]
    %v771 = vld [vmem:[#allocation45 + $0x10] sm:$0xff]
    %v772 = vld [vmem:[#allocation45 + $0x18] sm:$0xff]
    %v773 = vld [vmem:[#allocation45 + $0x20] sm:$0xff]
    %v774 = vld [vmem:[#allocation45 + $0x28] sm:$0xff]
    %v775 = vld [vmem:[#allocation45 + $0x30] sm:$0xff]
    %v776 = vld [vmem:[#allocation45 + $0x38] sm:$0xff]
    %v777 = vld [vmem:[#allocation46] sm:$0x1]
    %v778 = vld [vmem:[#allocation48] sm:$0xff]
    %v779 = vld [vmem:[#allocation48 + $0x8] sm:$0xff]
    %v780 = vld [vmem:[#allocation48 + $0x10] sm:$0xff]
    %v781 = vld [vmem:[#allocation48 + $0x18] sm:$0xff]
    %v782 = vld [vmem:[#allocation48 + $0x20] sm:$0xff]
    %v783 = vld [vmem:[#allocation48 + $0x28] sm:$0xff]
    %v784 = vld [vmem:[#allocation48 + $0x30] sm:$0xff]
    %v785 = vld [vmem:[#allocation48 + $0x38] sm:$0xff]
    %v786 = vld [vmem:[#allocation49] sm:$0x1]
    %v787 = vld [vmem:[#allocation51] sm:$0xff]
    %v788 = vld [vmem:[#allocation51 + $0x8] sm:$0xff]
    %v789 = vld [vmem:[#allocation51 + $0x10] sm:$0xff]
    %v790 = vld [vmem:[#allocation51 + $0x18] sm:$0xff]
    %v791 = vld [vmem:[#allocation51 + $0x20] sm:$0xff]
    %v792 = vld [vmem:[#allocation51 + $0x28] sm:$0xff]
    %v793 = vld [vmem:[#allocation51 + $0x30] sm:$0xff]
    %v794 = vld [vmem:[#allocation51 + $0x38] sm:$0xff]
    %v795 = vld [vmem:[#allocation52] sm:$0x1]
    %v796 = vld [vmem:[%s85] sm:$0xff]
    %v797 = vld [vmem:[%s85 + $0x8] sm:$0xff]
    %v798 = vld [vmem:[%s85 + $0x10] sm:$0xff]
    %v799 = vld [vmem:[%s85 + $0x18] sm:$0xff]
    %v800 = vld [vmem:[%s85 + $0x20] sm:$0xff]
    %v801 = vld [vmem:[%s85 + $0x28] sm:$0xff]
    %v802 = vld [vmem:[%s85 + $0x30] sm:$0xff]
    %v803 = vld [vmem:[%s85 + $0x38] sm:$0xff]
    %v804 = vld [vmem:[#allocation54] sm:$0x1]
    %vm805 = vcmask 130048
    %v807 = vsel %vm805, %v629, 0
    %v810 = vsel %vm805, %v630, 0
    %812 = vmatprep.subr.mxu0 0.0
    %813 = vmatpush1.msra.mxu0 0.0
    %814 = vmatprep.subr.mxu0 0.0
    %815 = vmatpush1.msra.mxu0 0.0
    %816 = vmatprep.subr.mxu0 0.0
    %817 = vmatpush1.msra.mxu0 0.0
    %818 = vmatprep.subr.mxu0 0.0
    %819 = vmatpush1.msra.mxu0 0.0
    %820 = vmatprep.subr.mxu0 0.0
    %821 = vmatpush1.msra.mxu0 0.0
    %822 = vmatprep.subr.mxu0 0.0
    %823 = vmatpush1.msra.mxu0 0.0
    %824 = vmatprep.subr.mxu0 0.0
    %825 = vmatpush1.msra.mxu0 0.0
    %826 = vmatprep.subr.mxu0 0.0
    %827 = vmatpush1.msra.mxu0 0.0
    %828 = vmatprep.subr.mxu0 0.0
    %829 = vmatpush1.msra.mxu0 0.0
    %830 = vmatprep.subr.mxu0 0.0
    %831 = vmatpush1.msra.mxu0 0.0
    %832 = vmatprep.subr.mxu0 0.0
    %833 = vmatpush1.msra.mxu0 0.0
    %834 = vmatprep.subr.mxu0 0.0
    %835 = vmatpush1.msra.mxu0 0.0
    %836 = vmatprep.subr.mxu0 0.0
    %837 = vmatpush1.msra.mxu0 0.0
    %838 = vmatprep.subr.mxu0 0.0
    %839 = vmatpush1.msra.mxu0 0.0
    %840 = vmatprep.subr.mxu0 0.0
    %841 = vmatpush1.msra.mxu0 %v646
    %842 = vmatprep.subr.mxu0 0.0
    %843 = vmatpush1.msra.mxu0 %v645
    %844 = vmatprep.subr.mxu0 0.0
    %845 = vmatpush2.msra.mxu0 0.0
    %846 = vmatprep.subr.mxu0 0.0
    %847 = vmatpush2.msra.mxu0 0.0
    %848 = vmatprep.subr.mxu0 0.0
    %849 = vmatpush2.msra.mxu0 0.0
    %850 = vmatprep.subr.mxu0 0.0
    %851 = vmatpush2.msra.mxu0 0.0
    %852 = vmatprep.subr.mxu0 0.0
    %853 = vmatpush2.msra.mxu0 0.0
    %854 = vmatprep.subr.mxu0 0.0
    %855 = vmatpush2.msra.mxu0 0.0
    %856 = vmatprep.subr.mxu0 0.0
    %857 = vmatpush2.msra.mxu0 0.0
    %858 = vmatprep.subr.mxu0 0.0
    %859 = vmatpush2.msra.mxu0 0.0
    %860 = vmatprep.subr.mxu0 0.0
    %861 = vmatpush2.msra.mxu0 0.0
    %862 = vmatprep.subr.mxu0 0.0
    %863 = vmatpush2.msra.mxu0 0.0
    %864 = vmatprep.subr.mxu0 0.0
    %865 = vmatpush2.msra.mxu0 0.0
    %866 = vmatprep.subr.mxu0 0.0
    %867 = vmatpush2.msra.mxu0 0.0
    %868 = vmatprep.subr.mxu0 0.0
    %869 = vmatpush2.msra.mxu0 0.0
    %870 = vmatprep.subr.mxu0 0.0
    %871 = vmatpush2.msra.mxu0 0.0
    %872 = vmatprep.subr.mxu0 0.0
    %873 = vmatpush2.msra.mxu0 0.0
    %874 = vmatprep.subr.mxu0 0.0
    %875 = vmatpush2.msra.mxu0 0.0
    %876 = vmatprep.mubr.f32.mxu0 0.0
    %877 = vmatmul.mubr.f32.gmra.mxu0 %v807
    %v878 = vpop.f32.mrf.mxu0
    %v879 = vadd.f32 0.0, %v878
    %v880 = vpop.f32.mrf.mxu0
    %881 = vmatprep.mubr.f32.mxu0 0.0
    %882 = vmatmul.mubr.f32.gmra.mxu0 %v810
    %v883 = vpop.f32.mrf.mxu0
    %v884 = vadd.f32 0.0, %v883
    %v885 = vpop.f32.mrf.mxu0
    %886 = vdwg.mxu0
    %vm887 = vcmask 261120
    %v889 = vsel %vm887, %v879, 0
    %v892 = vsel %vm887, %v884, 0
    %894 = vmatprep.subr.mxu0 0.0
    %895 = vmatpush1.msra.mxu0 0.0
    %896 = vmatprep.subr.mxu0 0.0
    %897 = vmatpush1.msra.mxu0 0.0
    %898 = vmatprep.subr.mxu0 0.0
    %899 = vmatpush1.msra.mxu0 0.0
    %900 = vmatprep.subr.mxu0 0.0
    %901 = vmatpush1.msra.mxu0 0.0
    %902 = vmatprep.subr.mxu0 0.0
    %903 = vmatpush1.msra.mxu0 0.0
    %904 = vmatprep.subr.mxu0 0.0
    %905 = vmatpush1.msra.mxu0 0.0
    %906 = vmatprep.subr.mxu0 0.0
    %907 = vmatpush1.msra.mxu0 0.0
    %908 = vmatprep.subr.mxu0 0.0
    %909 = vmatpush1.msra.mxu0 0.0
    %910 = vmatprep.subr.mxu0 0.0
    %911 = vmatpush1.msra.mxu0 0.0
    %912 = vmatprep.subr.mxu0 0.0
    %913 = vmatpush1.msra.mxu0 0.0
    %914 = vmatprep.subr.mxu0 0.0
    %915 = vmatpush1.msra.mxu0 0.0
    %916 = vmatprep.subr.mxu0 0.0
    %917 = vmatpush1.msra.mxu0 0.0
    %918 = vmatprep.subr.mxu0 0.0
    %919 = vmatpush1.msra.mxu0 %v660
    %920 = vmatprep.subr.mxu0 0.0
    %921 = vmatpush1.msra.mxu0 %v659
    %922 = vmatprep.subr.mxu0 0.0
    %923 = vmatpush1.msra.mxu0 %v658
    %924 = vmatprep.subr.mxu0 0.0
    %925 = vmatpush1.msra.mxu0 %v657
    %926 = vmatprep.subr.mxu0 0.0
    %927 = vmatpush2.msra.mxu0 0.0
    %928 = vmatprep.subr.mxu0 0.0
    %929 = vmatpush2.msra.mxu0 0.0
    %930 = vmatprep.subr.mxu0 0.0
    %931 = vmatpush2.msra.mxu0 0.0
    %932 = vmatprep.subr.mxu0 0.0
    %933 = vmatpush2.msra.mxu0 0.0
    %934 = vmatprep.subr.mxu0 0.0
    %935 = vmatpush2.msra.mxu0 0.0
    %936 = vmatprep.subr.mxu0 0.0
    %937 = vmatpush2.msra.mxu0 0.0
    %938 = vmatprep.subr.mxu0 0.0
    %939 = vmatpush2.msra.mxu0 0.0
    %940 = vmatprep.subr.mxu0 0.0
    %941 = vmatpush2.msra.mxu0 0.0
    %942 = vmatprep.subr.mxu0 0.0
    %943 = vmatpush2.msra.mxu0 0.0
    %944 = vmatprep.subr.mxu0 0.0
    %945 = vmatpush2.msra.mxu0 0.0
    %946 = vmatprep.subr.mxu0 0.0
    %947 = vmatpush2.msra.mxu0 0.0
    %948 = vmatprep.subr.mxu0 0.0
    %949 = vmatpush2.msra.mxu0 0.0
    %950 = vmatprep.subr.mxu0 0.0
    %951 = vmatpush2.msra.mxu0 0.0
    %952 = vmatprep.subr.mxu0 0.0
    %953 = vmatpush2.msra.mxu0 0.0
    %954 = vmatprep.subr.mxu0 0.0
    %955 = vmatpush2.msra.mxu0 0.0
    %956 = vmatprep.subr.mxu0 0.0
    %957 = vmatpush2.msra.mxu0 0.0
    %958 = vmatprep.mubr.f32.mxu0 0.0
    %959 = vmatmul.mubr.f32.gmra.mxu0 %v889
    %v960 = vpop.f32.mrf.mxu0
    %v961 = vadd.f32 0.0, %v960
    %v962 = vpop.f32.mrf.mxu0
    %963 = vmatprep.mubr.f32.mxu0 0.0
    %964 = vmatmul.mubr.f32.gmra.mxu0 %v892
    %v965 = vpop.f32.mrf.mxu0
    %v966 = vadd.f32 0.0, %v965
    %v967 = vpop.f32.mrf.mxu0
    %968 = vdwg.mxu0
    %v970 = vsel %vm887, %v647, 0
    %v973 = vsel %vm887, %v648, 0
    %975 = vmatprep.subr.mxu0 0.0
    %976 = vmatpush1.msra.mxu0 0.0
    %977 = vmatprep.subr.mxu0 0.0
    %978 = vmatpush1.msra.mxu0 0.0
    %979 = vmatprep.subr.mxu0 0.0
    %980 = vmatpush1.msra.mxu0 0.0
    %981 = vmatprep.subr.mxu0 0.0
    %982 = vmatpush1.msra.mxu0 0.0
    %983 = vmatprep.subr.mxu0 0.0
    %984 = vmatpush1.msra.mxu0 0.0
    %985 = vmatprep.subr.mxu0 0.0
    %986 = vmatpush1.msra.mxu0 0.0
    %987 = vmatprep.subr.mxu0 0.0
    %988 = vmatpush1.msra.mxu0 0.0
    %989 = vmatprep.subr.mxu0 0.0
    %990 = vmatpush1.msra.mxu0 0.0
    %991 = vmatprep.subr.mxu0 0.0
    %992 = vmatpush1.msra.mxu0 0.0
    %993 = vmatprep.subr.mxu0 0.0
    %994 = vmatpush1.msra.mxu0 0.0
    %995 = vmatprep.subr.mxu0 0.0
    %996 = vmatpush1.msra.mxu0 0.0
    %997 = vmatprep.subr.mxu0 0.0
    %998 = vmatpush1.msra.mxu0 0.0
    %999 = vmatprep.subr.mxu0 0.0
    %1000 = vmatpush1.msra.mxu0 %v656
    %1001 = vmatprep.subr.mxu0 0.0
    %1002 = vmatpush1.msra.mxu0 %v655
    %1003 = vmatprep.subr.mxu0 0.0
    %1004 = vmatpush1.msra.mxu0 %v654
    %1005 = vmatprep.subr.mxu0 0.0
    %1006 = vmatpush1.msra.mxu0 %v653
    %1007 = vmatprep.subr.mxu0 0.0
    %1008 = vmatpush2.msra.mxu0 0.0
    %1009 = vmatprep.subr.mxu0 0.0
    %1010 = vmatpush2.msra.mxu0 0.0
    %1011 = vmatprep.subr.mxu0 0.0
    %1012 = vmatpush2.msra.mxu0 0.0
    %1013 = vmatprep.subr.mxu0 0.0
    %1014 = vmatpush2.msra.mxu0 0.0
    %1015 = vmatprep.subr.mxu0 0.0
    %1016 = vmatpush2.msra.mxu0 0.0
    %1017 = vmatprep.subr.mxu0 0.0
    %1018 = vmatpush2.msra.mxu0 0.0
    %1019 = vmatprep.subr.mxu0 0.0
    %1020 = vmatpush2.msra.mxu0 0.0
    %1021 = vmatprep.subr.mxu0 0.0
    %1022 = vmatpush2.msra.mxu0 0.0
    %1023 = vmatprep.subr.mxu0 0.0
    %1024 = vmatpush2.msra.mxu0 0.0
    %1025 = vmatprep.subr.mxu0 0.0
    %1026 = vmatpush2.msra.mxu0 0.0
    %1027 = vmatprep.subr.mxu0 0.0
    %1028 = vmatpush2.msra.mxu0 0.0
    %1029 = vmatprep.subr.mxu0 0.0
    %1030 = vmatpush2.msra.mxu0 0.0
    %1031 = vmatprep.subr.mxu0 0.0
    %1032 = vmatpush2.msra.mxu0 0.0
    %1033 = vmatprep.subr.mxu0 0.0
    %1034 = vmatpush2.msra.mxu0 0.0
    %1035 = vmatprep.subr.mxu0 0.0
    %1036 = vmatpush2.msra.mxu0 0.0
    %1037 = vmatprep.subr.mxu0 0.0
    %1038 = vmatpush2.msra.mxu0 0.0
    %1039 = vmatprep.mubr.f32.mxu0 0.0
    %1040 = vmatmul.mubr.f32.gmra.mxu0 %v970
    %v1041 = vpop.f32.mrf.mxu0
    %v1042 = vadd.f32 %v961, %v1041
    %v1043 = vpop.f32.mrf.mxu0
    %1044 = vmatprep.mubr.f32.mxu0 0.0
    %1045 = vmatmul.mubr.f32.gmra.mxu0 %v973
    %v1046 = vpop.f32.mrf.mxu0
    %v1047 = vadd.f32 %v966, %v1046
    %v1048 = vpop.f32.mrf.mxu0
    %1049 = vdwg.mxu0
    %v1051 = vlaneseq
    %v1052 = vshrl.u32 %v1051, 7
    %v1053 = vsub.s32 0, %v1052
    %v1054 = vrot.slane %v661, %v1053
    %v1056 = vadd.f32 %v1042, %v1054
    %v1057 = vadd.f32 %v1047, %v1054
    %v1058 = vmax.f32 %v1056, 0.0
    %v1059 = vmax.f32 %v1057, 0.0
    %v1061 = vlaneseq
    %v1062 = vshrl.u32 %v1061, 7
    %v1063 = vsub.s32 0, %v1062
    %v1064 = vrot.slane %v670, %v1063
    %vm1066 = vcmask 523264
    %v1068 = vsel %vm1066, %v1058, 0
    %v1071 = vsel %vm1066, %v1059, 0
    %1073 = vmatprep.subr.mxu0 0.0
    %1074 = vmatpush1.msra.mxu0 0.0
    %1075 = vmatprep.subr.mxu0 0.0
    %1076 = vmatpush1.msra.mxu0 0.0
    %1077 = vmatprep.subr.mxu0 0.0
    %1078 = vmatpush1.msra.mxu0 0.0
    %1079 = vmatprep.subr.mxu0 0.0
    %1080 = vmatpush1.msra.mxu0 0.0
    %1081 = vmatprep.subr.mxu0 0.0
    %1082 = vmatpush1.msra.mxu0 0.0
    %1083 = vmatprep.subr.mxu0 0.0
    %1084 = vmatpush1.msra.mxu0 0.0
    %1085 = vmatprep.subr.mxu0 0.0
    %1086 = vmatpush1.msra.mxu0 0.0
    %1087 = vmatprep.subr.mxu0 0.0
    %1088 = vmatpush1.msra.mxu0 0.0
    %1089 = vmatprep.subr.mxu0 0.0
    %1090 = vmatpush1.msra.mxu0 %v669
    %1091 = vmatprep.subr.mxu0 0.0
    %1092 = vmatpush1.msra.mxu0 %v668
    %1093 = vmatprep.subr.mxu0 0.0
    %1094 = vmatpush1.msra.mxu0 %v667
    %1095 = vmatprep.subr.mxu0 0.0
    %1096 = vmatpush1.msra.mxu0 %v666
    %1097 = vmatprep.subr.mxu0 0.0
    %1098 = vmatpush1.msra.mxu0 %v665
    %1099 = vmatprep.subr.mxu0 0.0
    %1100 = vmatpush1.msra.mxu0 %v664
    %1101 = vmatprep.subr.mxu0 0.0
    %1102 = vmatpush1.msra.mxu0 %v663
    %1103 = vmatprep.subr.mxu0 0.0
    %1104 = vmatpush1.msra.mxu0 %v662
    %1105 = vmatprep.subr.mxu0 0.0
    %1106 = vmatpush2.msra.mxu0 0.0
    %1107 = vmatprep.subr.mxu0 0.0
    %1108 = vmatpush2.msra.mxu0 0.0
    %1109 = vmatprep.subr.mxu0 0.0
    %1110 = vmatpush2.msra.mxu0 0.0
    %1111 = vmatprep.subr.mxu0 0.0
    %1112 = vmatpush2.msra.mxu0 0.0
    %1113 = vmatprep.subr.mxu0 0.0
    %1114 = vmatpush2.msra.mxu0 0.0
    %1115 = vmatprep.subr.mxu0 0.0
    %1116 = vmatpush2.msra.mxu0 0.0
    %1117 = vmatprep.subr.mxu0 0.0
    %1118 = vmatpush2.msra.mxu0 0.0
    %1119 = vmatprep.subr.mxu0 0.0
    %1120 = vmatpush2.msra.mxu0 0.0
    %1121 = vmatprep.subr.mxu0 0.0
    %1122 = vmatpush2.msra.mxu0 0.0
    %1123 = vmatprep.subr.mxu0 0.0
    %1124 = vmatpush2.msra.mxu0 0.0
    %1125 = vmatprep.subr.mxu0 0.0
    %1126 = vmatpush2.msra.mxu0 0.0
    %1127 = vmatprep.subr.mxu0 0.0
    %1128 = vmatpush2.msra.mxu0 0.0
    %1129 = vmatprep.subr.mxu0 0.0
    %1130 = vmatpush2.msra.mxu0 0.0
    %1131 = vmatprep.subr.mxu0 0.0
    %1132 = vmatpush2.msra.mxu0 0.0
    %1133 = vmatprep.subr.mxu0 0.0
    %1134 = vmatpush2.msra.mxu0 0.0
    %1135 = vmatprep.subr.mxu0 0.0
    %1136 = vmatpush2.msra.mxu0 0.0
    %1137 = vmatprep.mubr.f32.mxu0 0.0
    %1138 = vmatmul.mubr.f32.gmra.mxu0 %v1068
    %v1139 = vpop.f32.mrf.mxu0
    %v1140 = vadd.f32 %v1064, %v1139
    %v1141 = vpop.f32.mrf.mxu0
    %1142 = vmatprep.mubr.f32.mxu0 0.0
    %1143 = vmatmul.mubr.f32.gmra.mxu0 %v1071
    %v1144 = vpop.f32.mrf.mxu0
    %v1145 = vadd.f32 %v1064, %v1144
    %v1146 = vpop.f32.mrf.mxu0
    %1147 = vdwg.mxu0
    %v1149 = vsel %vm805, %v631, 0
    %v1152 = vsel %vm805, %v632, 0
    %1154 = vmatprep.subr.mxu0 0.0
    %1155 = vmatpush1.msra.mxu0 0.0
    %1156 = vmatprep.subr.mxu0 0.0
    %1157 = vmatpush1.msra.mxu0 0.0
    %1158 = vmatprep.subr.mxu0 0.0
    %1159 = vmatpush1.msra.mxu0 0.0
    %1160 = vmatprep.subr.mxu0 0.0
    %1161 = vmatpush1.msra.mxu0 0.0
    %1162 = vmatprep.subr.mxu0 0.0
    %1163 = vmatpush1.msra.mxu0 0.0
    %1164 = vmatprep.subr.mxu0 0.0
    %1165 = vmatpush1.msra.mxu0 0.0
    %1166 = vmatprep.subr.mxu0 0.0
    %1167 = vmatpush1.msra.mxu0 0.0
    %1168 = vmatprep.subr.mxu0 0.0
    %1169 = vmatpush1.msra.mxu0 0.0
    %1170 = vmatprep.subr.mxu0 0.0
    %1171 = vmatpush1.msra.mxu0 0.0
    %1172 = vmatprep.subr.mxu0 0.0
    %1173 = vmatpush1.msra.mxu0 0.0
    %1174 = vmatprep.subr.mxu0 0.0
    %1175 = vmatpush1.msra.mxu0 0.0
    %1176 = vmatprep.subr.mxu0 0.0
    %1177 = vmatpush1.msra.mxu0 0.0
    %1178 = vmatprep.subr.mxu0 0.0
    %1179 = vmatpush1.msra.mxu0 0.0
    %1180 = vmatprep.subr.mxu0 0.0
    %1181 = vmatpush1.msra.mxu0 0.0
    %1182 = vmatprep.subr.mxu0 0.0
    %1183 = vmatpush1.msra.mxu0 %v1145
    %1184 = vmatprep.subr.mxu0 0.0
    %1185 = vmatpush1.msra.mxu0 %v1140
    %1186 = vmatprep.subr.mxu0 0.0
    %1187 = vmatpush2.msra.mxu0 0.0
    %1188 = vmatprep.subr.mxu0 0.0
    %1189 = vmatpush2.msra.mxu0 0.0
    %1190 = vmatprep.subr.mxu0 0.0
    %1191 = vmatpush2.msra.mxu0 0.0
    %1192 = vmatprep.subr.mxu0 0.0
    %1193 = vmatpush2.msra.mxu0 0.0
    %1194 = vmatprep.subr.mxu0 0.0
    %1195 = vmatpush2.msra.mxu0 0.0
    %1196 = vmatprep.subr.mxu0 0.0
    %1197 = vmatpush2.msra.mxu0 0.0
    %1198 = vmatprep.subr.mxu0 0.0
    %1199 = vmatpush2.msra.mxu0 0.0
    %1200 = vmatprep.subr.mxu0 0.0
    %1201 = vmatpush2.msra.mxu0 0.0
    %1202 = vmatprep.subr.mxu0 0.0
    %1203 = vmatpush2.msra.mxu0 0.0
    %1204 = vmatprep.subr.mxu0 0.0
    %1205 = vmatpush2.msra.mxu0 0.0
    %1206 = vmatprep.subr.mxu0 0.0
    %1207 = vmatpush2.msra.mxu0 0.0
    %1208 = vmatprep.subr.mxu0 0.0
    %1209 = vmatpush2.msra.mxu0 0.0
    %1210 = vmatprep.subr.mxu0 0.0
    %1211 = vmatpush2.msra.mxu0 0.0
    %1212 = vmatprep.subr.mxu0 0.0
    %1213 = vmatpush2.msra.mxu0 0.0
    %1214 = vmatprep.subr.mxu0 0.0
    %1215 = vmatpush2.msra.mxu0 0.0
    %1216 = vmatprep.subr.mxu0 0.0
    %1217 = vmatpush2.msra.mxu0 0.0
    %1218 = vmatprep.mubr.f32.mxu0 0.0
    %1219 = vmatmul.mubr.f32.gmra.mxu0 %v1149
    %v1220 = vpop.f32.mrf.mxu0
    %v1221 = vadd.f32 0.0, %v1220
    %v1222 = vpop.f32.mrf.mxu0
    %1223 = vmatprep.mubr.f32.mxu0 0.0
    %1224 = vmatmul.mubr.f32.gmra.mxu0 %v1152
    %v1225 = vpop.f32.mrf.mxu0
    %v1226 = vadd.f32 0.0, %v1225
    %v1227 = vpop.f32.mrf.mxu0
    %1228 = vdwg.mxu0
    %v1230 = vsel %vm887, %v1221, 0
    %v1233 = vsel %vm887, %v1226, 0
    %1235 = vmatprep.subr.mxu0 0.0
    %1236 = vmatpush1.msra.mxu0 0.0
    %1237 = vmatprep.subr.mxu0 0.0
    %1238 = vmatpush1.msra.mxu0 0.0
    %1239 = vmatprep.subr.mxu0 0.0
    %1240 = vmatpush1.msra.mxu0 0.0
    %1241 = vmatprep.subr.mxu0 0.0
    %1242 = vmatpush1.msra.mxu0 0.0
    %1243 = vmatprep.subr.mxu0 0.0
    %1244 = vmatpush1.msra.mxu0 0.0
    %1245 = vmatprep.subr.mxu0 0.0
    %1246 = vmatpush1.msra.mxu0 0.0
    %1247 = vmatprep.subr.mxu0 0.0
    %1248 = vmatpush1.msra.mxu0 0.0
    %1249 = vmatprep.subr.mxu0 0.0
    %1250 = vmatpush1.msra.mxu0 0.0
    %1251 = vmatprep.subr.mxu0 0.0
    %1252 = vmatpush1.msra.mxu0 0.0
    %1253 = vmatprep.subr.mxu0 0.0
    %1254 = vmatpush1.msra.mxu0 0.0
    %1255 = vmatprep.subr.mxu0 0.0
    %1256 = vmatpush1.msra.mxu0 0.0
    %1257 = vmatprep.subr.mxu0 0.0
    %1258 = vmatpush1.msra.mxu0 0.0
    %1259 = vmatprep.subr.mxu0 0.0
    %1260 = vmatpush1.msra.mxu0 %v678
    %1261 = vmatprep.subr.mxu0 0.0
    %1262 = vmatpush1.msra.mxu0 %v677
    %1263 = vmatprep.subr.mxu0 0.0
    %1264 = vmatpush1.msra.mxu0 %v676
    %1265 = vmatprep.subr.mxu0 0.0
    %1266 = vmatpush1.msra.mxu0 %v675
    %1267 = vmatprep.subr.mxu0 0.0
    %1268 = vmatpush2.msra.mxu0 0.0
    %1269 = vmatprep.subr.mxu0 0.0
    %1270 = vmatpush2.msra.mxu0 0.0
    %1271 = vmatprep.subr.mxu0 0.0
    %1272 = vmatpush2.msra.mxu0 0.0
    %1273 = vmatprep.subr.mxu0 0.0
    %1274 = vmatpush2.msra.mxu0 0.0
    %1275 = vmatprep.subr.mxu0 0.0
    %1276 = vmatpush2.msra.mxu0 0.0
    %1277 = vmatprep.subr.mxu0 0.0
    %1278 = vmatpush2.msra.mxu0 0.0
    %1279 = vmatprep.subr.mxu0 0.0
    %1280 = vmatpush2.msra.mxu0 0.0
    %1281 = vmatprep.subr.mxu0 0.0
    %1282 = vmatpush2.msra.mxu0 0.0
    %1283 = vmatprep.subr.mxu0 0.0
    %1284 = vmatpush2.msra.mxu0 0.0
    %1285 = vmatprep.subr.mxu0 0.0
    %1286 = vmatpush2.msra.mxu0 0.0
    %1287 = vmatprep.subr.mxu0 0.0
    %1288 = vmatpush2.msra.mxu0 0.0
    %1289 = vmatprep.subr.mxu0 0.0
    %1290 = vmatpush2.msra.mxu0 0.0
    %1291 = vmatprep.subr.mxu0 0.0
    %1292 = vmatpush2.msra.mxu0 0.0
    %1293 = vmatprep.subr.mxu0 0.0
    %1294 = vmatpush2.msra.mxu0 0.0
    %1295 = vmatprep.subr.mxu0 0.0
    %1296 = vmatpush2.msra.mxu0 0.0
    %1297 = vmatprep.subr.mxu0 0.0
    %1298 = vmatpush2.msra.mxu0 0.0
    %1299 = vmatprep.mubr.f32.mxu0 0.0
    %1300 = vmatmul.mubr.f32.gmra.mxu0 %v1230
    %v1301 = vpop.f32.mrf.mxu0
    %v1302 = vadd.f32 0.0, %v1301
    %v1303 = vpop.f32.mrf.mxu0
    %1304 = vmatprep.mubr.f32.mxu0 0.0
    %1305 = vmatmul.mubr.f32.gmra.mxu0 %v1233
    %v1306 = vpop.f32.mrf.mxu0
    %v1307 = vadd.f32 0.0, %v1306
    %v1308 = vpop.f32.mrf.mxu0
    %1309 = vdwg.mxu0
    %v1311 = vsel %vm887, %v645, 0
    %v1314 = vsel %vm887, %v646, 0
    %1316 = vmatprep.subr.mxu0 0.0
    %1317 = vmatpush1.msra.mxu0 0.0
    %1318 = vmatprep.subr.mxu0 0.0
    %1319 = vmatpush1.msra.mxu0 0.0
    %1320 = vmatprep.subr.mxu0 0.0
    %1321 = vmatpush1.msra.mxu0 0.0
    %1322 = vmatprep.subr.mxu0 0.0
    %1323 = vmatpush1.msra.mxu0 0.0
    %1324 = vmatprep.subr.mxu0 0.0
    %1325 = vmatpush1.msra.mxu0 0.0
    %1326 = vmatprep.subr.mxu0 0.0
    %1327 = vmatpush1.msra.mxu0 0.0
    %1328 = vmatprep.subr.mxu0 0.0
    %1329 = vmatpush1.msra.mxu0 0.0
    %1330 = vmatprep.subr.mxu0 0.0
    %1331 = vmatpush1.msra.mxu0 0.0
    %1332 = vmatprep.subr.mxu0 0.0
    %1333 = vmatpush1.msra.mxu0 0.0
    %1334 = vmatprep.subr.mxu0 0.0
    %1335 = vmatpush1.msra.mxu0 0.0
    %1336 = vmatprep.subr.mxu0 0.0
    %1337 = vmatpush1.msra.mxu0 0.0
    %1338 = vmatprep.subr.mxu0 0.0
    %1339 = vmatpush1.msra.mxu0 0.0
    %1340 = vmatprep.subr.mxu0 0.0
    %1341 = vmatpush1.msra.mxu0 %v674
    %1342 = vmatprep.subr.mxu0 0.0
    %1343 = vmatpush1.msra.mxu0 %v673
    %1344 = vmatprep.subr.mxu0 0.0
    %1345 = vmatpush1.msra.mxu0 %v672
    %1346 = vmatprep.subr.mxu0 0.0
    %1347 = vmatpush1.msra.mxu0 %v671
    %1348 = vmatprep.subr.mxu0 0.0
    %1349 = vmatpush2.msra.mxu0 0.0
    %1350 = vmatprep.subr.mxu0 0.0
    %1351 = vmatpush2.msra.mxu0 0.0
    %1352 = vmatprep.subr.mxu0 0.0
    %1353 = vmatpush2.msra.mxu0 0.0
    %1354 = vmatprep.subr.mxu0 0.0
    %1355 = vmatpush2.msra.mxu0 0.0
    %1356 = vmatprep.subr.mxu0 0.0
    %1357 = vmatpush2.msra.mxu0 0.0
    %1358 = vmatprep.subr.mxu0 0.0
    %1359 = vmatpush2.msra.mxu0 0.0
    %1360 = vmatprep.subr.mxu0 0.0
    %1361 = vmatpush2.msra.mxu0 0.0
    %1362 = vmatprep.subr.mxu0 0.0
    %1363 = vmatpush2.msra.mxu0 0.0
    %1364 = vmatprep.subr.mxu0 0.0
    %1365 = vmatpush2.msra.mxu0 0.0
    %1366 = vmatprep.subr.mxu0 0.0
    %1367 = vmatpush2.msra.mxu0 0.0
    %1368 = vmatprep.subr.mxu0 0.0
    %1369 = vmatpush2.msra.mxu0 0.0
    %1370 = vmatprep.subr.mxu0 0.0
    %1371 = vmatpush2.msra.mxu0 0.0
    %1372 = vmatprep.subr.mxu0 0.0
    %1373 = vmatpush2.msra.mxu0 0.0
    %1374 = vmatprep.subr.mxu0 0.0
    %1375 = vmatpush2.msra.mxu0 0.0
    %1376 = vmatprep.subr.mxu0 0.0
    %1377 = vmatpush2.msra.mxu0 0.0
    %1378 = vmatprep.subr.mxu0 0.0
    %1379 = vmatpush2.msra.mxu0 0.0
    %1380 = vmatprep.mubr.f32.mxu0 0.0
    %1381 = vmatmul.mubr.f32.gmra.mxu0 %v1311
    %v1382 = vpop.f32.mrf.mxu0
    %v1383 = vadd.f32 %v1302, %v1382
    %v1384 = vpop.f32.mrf.mxu0
    %1385 = vmatprep.mubr.f32.mxu0 0.0
    %1386 = vmatmul.mubr.f32.gmra.mxu0 %v1314
    %v1387 = vpop.f32.mrf.mxu0
    %v1388 = vadd.f32 %v1307, %v1387
    %v1389 = vpop.f32.mrf.mxu0
    %1390 = vdwg.mxu0
    %v1392 = vlaneseq
    %v1393 = vshrl.u32 %v1392, 7
    %v1394 = vsub.s32 0, %v1393
    %v1395 = vrot.slane %v679, %v1394
    %v1397 = vadd.f32 %v1383, %v1395
    %v1398 = vadd.f32 %v1388, %v1395
    %v1399 = vmax.f32 %v1397, 0.0
    %v1400 = vmax.f32 %v1398, 0.0
    %v1402 = vlaneseq
    %v1403 = vshrl.u32 %v1402, 7
    %v1404 = vsub.s32 0, %v1403
    %v1405 = vrot.slane %v688, %v1404
    %v1408 = vsel %vm1066, %v1399, 0
    %v1411 = vsel %vm1066, %v1400, 0
    %1413 = vmatprep.subr.mxu0 0.0
    %1414 = vmatpush1.msra.mxu0 0.0
    %1415 = vmatprep.subr.mxu0 0.0
    %1416 = vmatpush1.msra.mxu0 0.0
    %1417 = vmatprep.subr.mxu0 0.0
    %1418 = vmatpush1.msra.mxu0 0.0
    %1419 = vmatprep.subr.mxu0 0.0
    %1420 = vmatpush1.msra.mxu0 0.0
    %1421 = vmatprep.subr.mxu0 0.0
    %1422 = vmatpush1.msra.mxu0 0.0
    %1423 = vmatprep.subr.mxu0 0.0
    %1424 = vmatpush1.msra.mxu0 0.0
    %1425 = vmatprep.subr.mxu0 0.0
    %1426 = vmatpush1.msra.mxu0 0.0
    %1427 = vmatprep.subr.mxu0 0.0
    %1428 = vmatpush1.msra.mxu0 0.0
    %1429 = vmatprep.subr.mxu0 0.0
    %1430 = vmatpush1.msra.mxu0 %v687
    %1431 = vmatprep.subr.mxu0 0.0
    %1432 = vmatpush1.msra.mxu0 %v686
    %1433 = vmatprep.subr.mxu0 0.0
    %1434 = vmatpush1.msra.mxu0 %v685
    %1435 = vmatprep.subr.mxu0 0.0
    %1436 = vmatpush1.msra.mxu0 %v684
    %1437 = vmatprep.subr.mxu0 0.0
    %1438 = vmatpush1.msra.mxu0 %v683
    %1439 = vmatprep.subr.mxu0 0.0
    %1440 = vmatpush1.msra.mxu0 %v682
    %1441 = vmatprep.subr.mxu0 0.0
    %1442 = vmatpush1.msra.mxu0 %v681
    %1443 = vmatprep.subr.mxu0 0.0
    %1444 = vmatpush1.msra.mxu0 %v680
    %1445 = vmatprep.subr.mxu0 0.0
    %1446 = vmatpush2.msra.mxu0 0.0
    %1447 = vmatprep.subr.mxu0 0.0
    %1448 = vmatpush2.msra.mxu0 0.0
    %1449 = vmatprep.subr.mxu0 0.0
    %1450 = vmatpush2.msra.mxu0 0.0
    %1451 = vmatprep.subr.mxu0 0.0
    %1452 = vmatpush2.msra.mxu0 0.0
    %1453 = vmatprep.subr.mxu0 0.0
    %1454 = vmatpush2.msra.mxu0 0.0
    %1455 = vmatprep.subr.mxu0 0.0
    %1456 = vmatpush2.msra.mxu0 0.0
    %1457 = vmatprep.subr.mxu0 0.0
    %1458 = vmatpush2.msra.mxu0 0.0
    %1459 = vmatprep.subr.mxu0 0.0
    %1460 = vmatpush2.msra.mxu0 0.0
    %1461 = vmatprep.subr.mxu0 0.0
    %1462 = vmatpush2.msra.mxu0 0.0
    %1463 = vmatprep.subr.mxu0 0.0
    %1464 = vmatpush2.msra.mxu0 0.0
    %1465 = vmatprep.subr.mxu0 0.0
    %1466 = vmatpush2.msra.mxu0 0.0
    %1467 = vmatprep.subr.mxu0 0.0
    %1468 = vmatpush2.msra.mxu0 0.0
    %1469 = vmatprep.subr.mxu0 0.0
    %1470 = vmatpush2.msra.mxu0 0.0
    %1471 = vmatprep.subr.mxu0 0.0
    %1472 = vmatpush2.msra.mxu0 0.0
    %1473 = vmatprep.subr.mxu0 0.0
    %1474 = vmatpush2.msra.mxu0 0.0
    %1475 = vmatprep.subr.mxu0 0.0
    %1476 = vmatpush2.msra.mxu0 0.0
    %1477 = vmatprep.mubr.f32.mxu0 0.0
    %1478 = vmatmul.mubr.f32.gmra.mxu0 %v1408
    %v1479 = vpop.f32.mrf.mxu0
    %v1480 = vadd.f32 %v1405, %v1479
    %v1481 = vpop.f32.mrf.mxu0
    %1482 = vmatprep.mubr.f32.mxu0 0.0
    %1483 = vmatmul.mubr.f32.gmra.mxu0 %v1411
    %v1484 = vpop.f32.mrf.mxu0
    %v1485 = vadd.f32 %v1405, %v1484
    %v1486 = vpop.f32.mrf.mxu0
    %1487 = vdwg.mxu0
    %v1489 = vsel %vm805, %v633, 0
    %v1492 = vsel %vm805, %v634, 0
    %1494 = vmatprep.subr.mxu0 0.0
    %1495 = vmatpush1.msra.mxu0 0.0
    %1496 = vmatprep.subr.mxu0 0.0
    %1497 = vmatpush1.msra.mxu0 0.0
    %1498 = vmatprep.subr.mxu0 0.0
    %1499 = vmatpush1.msra.mxu0 0.0
    %1500 = vmatprep.subr.mxu0 0.0
    %1501 = vmatpush1.msra.mxu0 0.0
    %1502 = vmatprep.subr.mxu0 0.0
    %1503 = vmatpush1.msra.mxu0 0.0
    %1504 = vmatprep.subr.mxu0 0.0
    %1505 = vmatpush1.msra.mxu0 0.0
    %1506 = vmatprep.subr.mxu0 0.0
    %1507 = vmatpush1.msra.mxu0 0.0
    %1508 = vmatprep.subr.mxu0 0.0
    %1509 = vmatpush1.msra.mxu0 0.0
    %1510 = vmatprep.subr.mxu0 0.0
    %1511 = vmatpush1.msra.mxu0 0.0
    %1512 = vmatprep.subr.mxu0 0.0
    %1513 = vmatpush1.msra.mxu0 0.0
    %1514 = vmatprep.subr.mxu0 0.0
    %1515 = vmatpush1.msra.mxu0 0.0
    %1516 = vmatprep.subr.mxu0 0.0
    %1517 = vmatpush1.msra.mxu0 0.0
    %1518 = vmatprep.subr.mxu0 0.0
    %1519 = vmatpush1.msra.mxu0 0.0
    %1520 = vmatprep.subr.mxu0 0.0
    %1521 = vmatpush1.msra.mxu0 0.0
    %1522 = vmatprep.subr.mxu0 0.0
    %1523 = vmatpush1.msra.mxu0 %v648
    %1524 = vmatprep.subr.mxu0 0.0
    %1525 = vmatpush1.msra.mxu0 %v647
    %1526 = vmatprep.subr.mxu0 0.0
    %1527 = vmatpush2.msra.mxu0 0.0
    %1528 = vmatprep.subr.mxu0 0.0
    %1529 = vmatpush2.msra.mxu0 0.0
    %1530 = vmatprep.subr.mxu0 0.0
    %1531 = vmatpush2.msra.mxu0 0.0
    %1532 = vmatprep.subr.mxu0 0.0
    %1533 = vmatpush2.msra.mxu0 0.0
    %1534 = vmatprep.subr.mxu0 0.0
    %1535 = vmatpush2.msra.mxu0 0.0
    %1536 = vmatprep.subr.mxu0 0.0
    %1537 = vmatpush2.msra.mxu0 0.0
    %1538 = vmatprep.subr.mxu0 0.0
    %1539 = vmatpush2.msra.mxu0 0.0
    %1540 = vmatprep.subr.mxu0 0.0
    %1541 = vmatpush2.msra.mxu0 0.0
    %1542 = vmatprep.subr.mxu0 0.0
    %1543 = vmatpush2.msra.mxu0 0.0
    %1544 = vmatprep.subr.mxu0 0.0
    %1545 = vmatpush2.msra.mxu0 0.0
    %1546 = vmatprep.subr.mxu0 0.0
    %1547 = vmatpush2.msra.mxu0 0.0
    %1548 = vmatprep.subr.mxu0 0.0
    %1549 = vmatpush2.msra.mxu0 0.0
    %1550 = vmatprep.subr.mxu0 0.0
    %1551 = vmatpush2.msra.mxu0 0.0
    %1552 = vmatprep.subr.mxu0 0.0
    %1553 = vmatpush2.msra.mxu0 0.0
    %1554 = vmatprep.subr.mxu0 0.0
    %1555 = vmatpush2.msra.mxu0 0.0
    %1556 = vmatprep.subr.mxu0 0.0
    %1557 = vmatpush2.msra.mxu0 0.0
    %1558 = vmatprep.mubr.f32.mxu0 0.0
    %1559 = vmatmul.mubr.f32.gmra.mxu0 %v1489
    %v1560 = vpop.f32.mrf.mxu0
    %v1561 = vadd.f32 0.0, %v1560
    %v1562 = vpop.f32.mrf.mxu0
    %1563 = vmatprep.mubr.f32.mxu0 0.0
    %1564 = vmatmul.mubr.f32.gmra.mxu0 %v1492
    %v1565 = vpop.f32.mrf.mxu0
    %v1566 = vadd.f32 0.0, %v1565
    %v1567 = vpop.f32.mrf.mxu0
    %1568 = vdwg.mxu0
    %v1570 = vsel %vm887, %v1561, 0
    %v1573 = vsel %vm887, %v1566, 0
    %1575 = vmatprep.subr.mxu0 0.0
    %1576 = vmatpush1.msra.mxu0 0.0
    %1577 = vmatprep.subr.mxu0 0.0
    %1578 = vmatpush1.msra.mxu0 0.0
    %1579 = vmatprep.subr.mxu0 0.0
    %1580 = vmatpush1.msra.mxu0 0.0
    %1581 = vmatprep.subr.mxu0 0.0
    %1582 = vmatpush1.msra.mxu0 0.0
    %1583 = vmatprep.subr.mxu0 0.0
    %1584 = vmatpush1.msra.mxu0 0.0
    %1585 = vmatprep.subr.mxu0 0.0
    %1586 = vmatpush1.msra.mxu0 0.0
    %1587 = vmatprep.subr.mxu0 0.0
    %1588 = vmatpush1.msra.mxu0 0.0
    %1589 = vmatprep.subr.mxu0 0.0
    %1590 = vmatpush1.msra.mxu0 0.0
    %1591 = vmatprep.subr.mxu0 0.0
    %1592 = vmatpush1.msra.mxu0 0.0
    %1593 = vmatprep.subr.mxu0 0.0
    %1594 = vmatpush1.msra.mxu0 0.0
    %1595 = vmatprep.subr.mxu0 0.0
    %1596 = vmatpush1.msra.mxu0 0.0
    %1597 = vmatprep.subr.mxu0 0.0
    %1598 = vmatpush1.msra.mxu0 0.0
    %1599 = vmatprep.subr.mxu0 0.0
    %1600 = vmatpush1.msra.mxu0 %v696
    %1601 = vmatprep.subr.mxu0 0.0
    %1602 = vmatpush1.msra.mxu0 %v695
    %1603 = vmatprep.subr.mxu0 0.0
    %1604 = vmatpush1.msra.mxu0 %v694
    %1605 = vmatprep.subr.mxu0 0.0
    %1606 = vmatpush1.msra.mxu0 %v693
    %1607 = vmatprep.subr.mxu0 0.0
    %1608 = vmatpush2.msra.mxu0 0.0
    %1609 = vmatprep.subr.mxu0 0.0
    %1610 = vmatpush2.msra.mxu0 0.0
    %1611 = vmatprep.subr.mxu0 0.0
    %1612 = vmatpush2.msra.mxu0 0.0
    %1613 = vmatprep.subr.mxu0 0.0
    %1614 = vmatpush2.msra.mxu0 0.0
    %1615 = vmatprep.subr.mxu0 0.0
    %1616 = vmatpush2.msra.mxu0 0.0
    %1617 = vmatprep.subr.mxu0 0.0
    %1618 = vmatpush2.msra.mxu0 0.0
    %1619 = vmatprep.subr.mxu0 0.0
    %1620 = vmatpush2.msra.mxu0 0.0
    %1621 = vmatprep.subr.mxu0 0.0
    %1622 = vmatpush2.msra.mxu0 0.0
    %1623 = vmatprep.subr.mxu0 0.0
    %1624 = vmatpush2.msra.mxu0 0.0
    %1625 = vmatprep.subr.mxu0 0.0
    %1626 = vmatpush2.msra.mxu0 0.0
    %1627 = vmatprep.subr.mxu0 0.0
    %1628 = vmatpush2.msra.mxu0 0.0
    %1629 = vmatprep.subr.mxu0 0.0
    %1630 = vmatpush2.msra.mxu0 0.0
    %1631 = vmatprep.subr.mxu0 0.0
    %1632 = vmatpush2.msra.mxu0 0.0
    %1633 = vmatprep.subr.mxu0 0.0
    %1634 = vmatpush2.msra.mxu0 0.0
    %1635 = vmatprep.subr.mxu0 0.0
    %1636 = vmatpush2.msra.mxu0 0.0
    %1637 = vmatprep.subr.mxu0 0.0
    %1638 = vmatpush2.msra.mxu0 0.0
    %1639 = vmatprep.mubr.f32.mxu0 0.0
    %1640 = vmatmul.mubr.f32.gmra.mxu0 %v1570
    %v1641 = vpop.f32.mrf.mxu0
    %v1642 = vadd.f32 0.0, %v1641
    %v1643 = vpop.f32.mrf.mxu0
    %1644 = vmatprep.mubr.f32.mxu0 0.0
    %1645 = vmatmul.mubr.f32.gmra.mxu0 %v1573
    %v1646 = vpop.f32.mrf.mxu0
    %v1647 = vadd.f32 0.0, %v1646
    %v1648 = vpop.f32.mrf.mxu0
    %1649 = vdwg.mxu0
    %v1651 = vsel %vm887, %v649, 0
    %v1654 = vsel %vm887, %v650, 0
    %1656 = vmatprep.subr.mxu0 0.0
    %1657 = vmatpush1.msra.mxu0 0.0
    %1658 = vmatprep.subr.mxu0 0.0
    %1659 = vmatpush1.msra.mxu0 0.0
    %1660 = vmatprep.subr.mxu0 0.0
    %1661 = vmatpush1.msra.mxu0 0.0
    %1662 = vmatprep.subr.mxu0 0.0
    %1663 = vmatpush1.msra.mxu0 0.0
    %1664 = vmatprep.subr.mxu0 0.0
    %1665 = vmatpush1.msra.mxu0 0.0
    %1666 = vmatprep.subr.mxu0 0.0
    %1667 = vmatpush1.msra.mxu0 0.0
    %1668 = vmatprep.subr.mxu0 0.0
    %1669 = vmatpush1.msra.mxu0 0.0
    %1670 = vmatprep.subr.mxu0 0.0
    %1671 = vmatpush1.msra.mxu0 0.0
    %1672 = vmatprep.subr.mxu0 0.0
    %1673 = vmatpush1.msra.mxu0 0.0
    %1674 = vmatprep.subr.mxu0 0.0
    %1675 = vmatpush1.msra.mxu0 0.0
    %1676 = vmatprep.subr.mxu0 0.0
    %1677 = vmatpush1.msra.mxu0 0.0
    %1678 = vmatprep.subr.mxu0 0.0
    %1679 = vmatpush1.msra.mxu0 0.0
    %1680 = vmatprep.subr.mxu0 0.0
    %1681 = vmatpush1.msra.mxu0 %v692
    %1682 = vmatprep.subr.mxu0 0.0
    %1683 = vmatpush1.msra.mxu0 %v691
    %1684 = vmatprep.subr.mxu0 0.0
    %1685 = vmatpush1.msra.mxu0 %v690
    %1686 = vmatprep.subr.mxu0 0.0
    %1687 = vmatpush1.msra.mxu0 %v689
    %1688 = vmatprep.subr.mxu0 0.0
    %1689 = vmatpush2.msra.mxu0 0.0
    %1690 = vmatprep.subr.mxu0 0.0
    %1691 = vmatpush2.msra.mxu0 0.0
    %1692 = vmatprep.subr.mxu0 0.0
    %1693 = vmatpush2.msra.mxu0 0.0
    %1694 = vmatprep.subr.mxu0 0.0
    %1695 = vmatpush2.msra.mxu0 0.0
    %1696 = vmatprep.subr.mxu0 0.0
    %1697 = vmatpush2.msra.mxu0 0.0
    %1698 = vmatprep.subr.mxu0 0.0
    %1699 = vmatpush2.msra.mxu0 0.0
    %1700 = vmatprep.subr.mxu0 0.0
    %1701 = vmatpush2.msra.mxu0 0.0
    %1702 = vmatprep.subr.mxu0 0.0
    %1703 = vmatpush2.msra.mxu0 0.0
    %1704 = vmatprep.subr.mxu0 0.0
    %1705 = vmatpush2.msra.mxu0 0.0
    %1706 = vmatprep.subr.mxu0 0.0
    %1707 = vmatpush2.msra.mxu0 0.0
    %1708 = vmatprep.subr.mxu0 0.0
    %1709 = vmatpush2.msra.mxu0 0.0
    %1710 = vmatprep.subr.mxu0 0.0
    %1711 = vmatpush2.msra.mxu0 0.0
    %1712 = vmatprep.subr.mxu0 0.0
    %1713 = vmatpush2.msra.mxu0 0.0
    %1714 = vmatprep.subr.mxu0 0.0
    %1715 = vmatpush2.msra.mxu0 0.0
    %1716 = vmatprep.subr.mxu0 0.0
    %1717 = vmatpush2.msra.mxu0 0.0
    %1718 = vmatprep.subr.mxu0 0.0
    %1719 = vmatpush2.msra.mxu0 0.0
    %1720 = vmatprep.mubr.f32.mxu0 0.0
    %1721 = vmatmul.mubr.f32.gmra.mxu0 %v1651
    %v1722 = vpop.f32.mrf.mxu0
    %v1723 = vadd.f32 %v1642, %v1722
    %v1724 = vpop.f32.mrf.mxu0
    %1725 = vmatprep.mubr.f32.mxu0 0.0
    %1726 = vmatmul.mubr.f32.gmra.mxu0 %v1654
    %v1727 = vpop.f32.mrf.mxu0
    %v1728 = vadd.f32 %v1647, %v1727
    %v1729 = vpop.f32.mrf.mxu0
    %1730 = vdwg.mxu0
    %v1732 = vlaneseq
    %v1733 = vshrl.u32 %v1732, 7
    %v1734 = vsub.s32 0, %v1733
    %v1735 = vrot.slane %v697, %v1734
    %v1737 = vadd.f32 %v1723, %v1735
    %v1738 = vadd.f32 %v1728, %v1735
    %v1739 = vmax.f32 %v1737, 0.0
    %v1740 = vmax.f32 %v1738, 0.0
    %v1742 = vlaneseq
    %v1743 = vshrl.u32 %v1742, 7
    %v1744 = vsub.s32 0, %v1743
    %v1745 = vrot.slane %v706, %v1744
    %v1748 = vsel %vm1066, %v1739, 0
    %v1751 = vsel %vm1066, %v1740, 0
    %1753 = vmatprep.subr.mxu0 0.0
    %1754 = vmatpush1.msra.mxu0 0.0
    %1755 = vmatprep.subr.mxu0 0.0
    %1756 = vmatpush1.msra.mxu0 0.0
    %1757 = vmatprep.subr.mxu0 0.0
    %1758 = vmatpush1.msra.mxu0 0.0
    %1759 = vmatprep.subr.mxu0 0.0
    %1760 = vmatpush1.msra.mxu0 0.0
    %1761 = vmatprep.subr.mxu0 0.0
    %1762 = vmatpush1.msra.mxu0 0.0
    %1763 = vmatprep.subr.mxu0 0.0
    %1764 = vmatpush1.msra.mxu0 0.0
    %1765 = vmatprep.subr.mxu0 0.0
    %1766 = vmatpush1.msra.mxu0 0.0
    %1767 = vmatprep.subr.mxu0 0.0
    %1768 = vmatpush1.msra.mxu0 0.0
    %1769 = vmatprep.subr.mxu0 0.0
    %1770 = vmatpush1.msra.mxu0 %v705
    %1771 = vmatprep.subr.mxu0 0.0
    %1772 = vmatpush1.msra.mxu0 %v704
    %1773 = vmatprep.subr.mxu0 0.0
    %1774 = vmatpush1.msra.mxu0 %v703
    %1775 = vmatprep.subr.mxu0 0.0
    %1776 = vmatpush1.msra.mxu0 %v702
    %1777 = vmatprep.subr.mxu0 0.0
    %1778 = vmatpush1.msra.mxu0 %v701
    %1779 = vmatprep.subr.mxu0 0.0
    %1780 = vmatpush1.msra.mxu0 %v700
    %1781 = vmatprep.subr.mxu0 0.0
    %1782 = vmatpush1.msra.mxu0 %v699
    %1783 = vmatprep.subr.mxu0 0.0
    %1784 = vmatpush1.msra.mxu0 %v698
    %1785 = vmatprep.subr.mxu0 0.0
    %1786 = vmatpush2.msra.mxu0 0.0
    %1787 = vmatprep.subr.mxu0 0.0
    %1788 = vmatpush2.msra.mxu0 0.0
    %1789 = vmatprep.subr.mxu0 0.0
    %1790 = vmatpush2.msra.mxu0 0.0
    %1791 = vmatprep.subr.mxu0 0.0
    %1792 = vmatpush2.msra.mxu0 0.0
    %1793 = vmatprep.subr.mxu0 0.0
    %1794 = vmatpush2.msra.mxu0 0.0
    %1795 = vmatprep.subr.mxu0 0.0
    %1796 = vmatpush2.msra.mxu0 0.0
    %1797 = vmatprep.subr.mxu0 0.0
    %1798 = vmatpush2.msra.mxu0 0.0
    %1799 = vmatprep.subr.mxu0 0.0
    %1800 = vmatpush2.msra.mxu0 0.0
    %1801 = vmatprep.subr.mxu0 0.0
    %1802 = vmatpush2.msra.mxu0 0.0
    %1803 = vmatprep.subr.mxu0 0.0
    %1804 = vmatpush2.msra.mxu0 0.0
    %1805 = vmatprep.subr.mxu0 0.0
    %1806 = vmatpush2.msra.mxu0 0.0
    %1807 = vmatprep.subr.mxu0 0.0
    %1808 = vmatpush2.msra.mxu0 0.0
    %1809 = vmatprep.subr.mxu0 0.0
    %1810 = vmatpush2.msra.mxu0 0.0
    %1811 = vmatprep.subr.mxu0 0.0
    %1812 = vmatpush2.msra.mxu0 0.0
    %1813 = vmatprep.subr.mxu0 0.0
    %1814 = vmatpush2.msra.mxu0 0.0
    %1815 = vmatprep.subr.mxu0 0.0
    %1816 = vmatpush2.msra.mxu0 0.0
    %1817 = vmatprep.mubr.f32.mxu0 0.0
    %1818 = vmatmul.mubr.f32.gmra.mxu0 %v1748
    %v1819 = vpop.f32.mrf.mxu0
    %v1820 = vadd.f32 %v1745, %v1819
    %v1821 = vpop.f32.mrf.mxu0
    %1822 = vmatprep.mubr.f32.mxu0 0.0
    %1823 = vmatmul.mubr.f32.gmra.mxu0 %v1751
    %v1824 = vpop.f32.mrf.mxu0
    %v1825 = vadd.f32 %v1745, %v1824
    %v1826 = vpop.f32.mrf.mxu0
    %1827 = vdwg.mxu0
    %v1828 = vmax.f32 %v1820, 0.0
    %v1829 = vmax.f32 %v1825, 0.0
    %v1831 = vsel %vm805, %v635, 0
    %v1834 = vsel %vm805, %v636, 0
    %1836 = vmatprep.subr.mxu0 0.0
    %1837 = vmatpush1.msra.mxu0 0.0
    %1838 = vmatprep.subr.mxu0 0.0
    %1839 = vmatpush1.msra.mxu0 0.0
    %1840 = vmatprep.subr.mxu0 0.0
    %1841 = vmatpush1.msra.mxu0 0.0
    %1842 = vmatprep.subr.mxu0 0.0
    %1843 = vmatpush1.msra.mxu0 0.0
    %1844 = vmatprep.subr.mxu0 0.0
    %1845 = vmatpush1.msra.mxu0 0.0
    %1846 = vmatprep.subr.mxu0 0.0
    %1847 = vmatpush1.msra.mxu0 0.0
    %1848 = vmatprep.subr.mxu0 0.0
    %1849 = vmatpush1.msra.mxu0 0.0
    %1850 = vmatprep.subr.mxu0 0.0
    %1851 = vmatpush1.msra.mxu0 0.0
    %1852 = vmatprep.subr.mxu0 0.0
    %1853 = vmatpush1.msra.mxu0 0.0
    %1854 = vmatprep.subr.mxu0 0.0
    %1855 = vmatpush1.msra.mxu0 0.0
    %1856 = vmatprep.subr.mxu0 0.0
    %1857 = vmatpush1.msra.mxu0 0.0
    %1858 = vmatprep.subr.mxu0 0.0
    %1859 = vmatpush1.msra.mxu0 0.0
    %1860 = vmatprep.subr.mxu0 0.0
    %1861 = vmatpush1.msra.mxu0 0.0
    %1862 = vmatprep.subr.mxu0 0.0
    %1863 = vmatpush1.msra.mxu0 0.0
    %1864 = vmatprep.subr.mxu0 0.0
    %1865 = vmatpush1.msra.mxu0 %v1829
    %1866 = vmatprep.subr.mxu0 0.0
    %1867 = vmatpush1.msra.mxu0 %v1828
    %1868 = vmatprep.subr.mxu0 0.0
    %1869 = vmatpush2.msra.mxu0 0.0
    %1870 = vmatprep.subr.mxu0 0.0
    %1871 = vmatpush2.msra.mxu0 0.0
    %1872 = vmatprep.subr.mxu0 0.0
    %1873 = vmatpush2.msra.mxu0 0.0
    %1874 = vmatprep.subr.mxu0 0.0
    %1875 = vmatpush2.msra.mxu0 0.0
    %1876 = vmatprep.subr.mxu0 0.0
    %1877 = vmatpush2.msra.mxu0 0.0
    %1878 = vmatprep.subr.mxu0 0.0
    %1879 = vmatpush2.msra.mxu0 0.0
    %1880 = vmatprep.subr.mxu0 0.0
    %1881 = vmatpush2.msra.mxu0 0.0
    %1882 = vmatprep.subr.mxu0 0.0
    %1883 = vmatpush2.msra.mxu0 0.0
    %1884 = vmatprep.subr.mxu0 0.0
    %1885 = vmatpush2.msra.mxu0 0.0
    %1886 = vmatprep.subr.mxu0 0.0
    %1887 = vmatpush2.msra.mxu0 0.0
    %1888 = vmatprep.subr.mxu0 0.0
    %1889 = vmatpush2.msra.mxu0 0.0
    %1890 = vmatprep.subr.mxu0 0.0
    %1891 = vmatpush2.msra.mxu0 0.0
    %1892 = vmatprep.subr.mxu0 0.0
    %1893 = vmatpush2.msra.mxu0 0.0
    %1894 = vmatprep.subr.mxu0 0.0
    %1895 = vmatpush2.msra.mxu0 0.0
    %1896 = vmatprep.subr.mxu0 0.0
    %1897 = vmatpush2.msra.mxu0 0.0
    %1898 = vmatprep.subr.mxu0 0.0
    %1899 = vmatpush2.msra.mxu0 0.0
    %1900 = vmatprep.mubr.f32.mxu0 0.0
    %1901 = vmatmul.mubr.f32.gmra.mxu0 %v1831
    %v1902 = vpop.f32.mrf.mxu0
    %v1903 = vadd.f32 0.0, %v1902
    %v1904 = vpop.f32.mrf.mxu0
    %1905 = vmatprep.mubr.f32.mxu0 0.0
    %1906 = vmatmul.mubr.f32.gmra.mxu0 %v1834
    %v1907 = vpop.f32.mrf.mxu0
    %v1908 = vadd.f32 0.0, %v1907
    %v1909 = vpop.f32.mrf.mxu0
    %1910 = vdwg.mxu0
    %v1912 = vsel %vm887, %v1903, 0
    %v1915 = vsel %vm887, %v1908, 0
    %1917 = vmatprep.subr.mxu0 0.0
    %1918 = vmatpush1.msra.mxu0 0.0
    %1919 = vmatprep.subr.mxu0 0.0
    %1920 = vmatpush1.msra.mxu0 0.0
    %1921 = vmatprep.subr.mxu0 0.0
    %1922 = vmatpush1.msra.mxu0 0.0
    %1923 = vmatprep.subr.mxu0 0.0
    %1924 = vmatpush1.msra.mxu0 0.0
    %1925 = vmatprep.subr.mxu0 0.0
    %1926 = vmatpush1.msra.mxu0 0.0
    %1927 = vmatprep.subr.mxu0 0.0
    %1928 = vmatpush1.msra.mxu0 0.0
    %1929 = vmatprep.subr.mxu0 0.0
    %1930 = vmatpush1.msra.mxu0 0.0
    %1931 = vmatprep.subr.mxu0 0.0
    %1932 = vmatpush1.msra.mxu0 0.0
    %1933 = vmatprep.subr.mxu0 0.0
    %1934 = vmatpush1.msra.mxu0 0.0
    %1935 = vmatprep.subr.mxu0 0.0
    %1936 = vmatpush1.msra.mxu0 0.0
    %1937 = vmatprep.subr.mxu0 0.0
    %1938 = vmatpush1.msra.mxu0 0.0
    %1939 = vmatprep.subr.mxu0 0.0
    %1940 = vmatpush1.msra.mxu0 0.0
    %1941 = vmatprep.subr.mxu0 0.0
    %1942 = vmatpush1.msra.mxu0 %v794
    %1943 = vmatprep.subr.mxu0 0.0
    %1944 = vmatpush1.msra.mxu0 %v793
    %1945 = vmatprep.subr.mxu0 0.0
    %1946 = vmatpush1.msra.mxu0 %v792
    %1947 = vmatprep.subr.mxu0 0.0
    %1948 = vmatpush1.msra.mxu0 %v791
    %1949 = vmatprep.subr.mxu0 0.0
    %1950 = vmatpush2.msra.mxu0 0.0
    %1951 = vmatprep.subr.mxu0 0.0
    %1952 = vmatpush2.msra.mxu0 0.0
    %1953 = vmatprep.subr.mxu0 0.0
    %1954 = vmatpush2.msra.mxu0 0.0
    %1955 = vmatprep.subr.mxu0 0.0
    %1956 = vmatpush2.msra.mxu0 0.0
    %1957 = vmatprep.subr.mxu0 0.0
    %1958 = vmatpush2.msra.mxu0 0.0
    %1959 = vmatprep.subr.mxu0 0.0
    %1960 = vmatpush2.msra.mxu0 0.0
    %1961 = vmatprep.subr.mxu0 0.0
    %1962 = vmatpush2.msra.mxu0 0.0
    %1963 = vmatprep.subr.mxu0 0.0
    %1964 = vmatpush2.msra.mxu0 0.0
    %1965 = vmatprep.subr.mxu0 0.0
    %1966 = vmatpush2.msra.mxu0 0.0
    %1967 = vmatprep.subr.mxu0 0.0
    %1968 = vmatpush2.msra.mxu0 0.0
    %1969 = vmatprep.subr.mxu0 0.0
    %1970 = vmatpush2.msra.mxu0 0.0
    %1971 = vmatprep.subr.mxu0 0.0
    %1972 = vmatpush2.msra.mxu0 0.0
    %1973 = vmatprep.subr.mxu0 0.0
    %1974 = vmatpush2.msra.mxu0 0.0
    %1975 = vmatprep.subr.mxu0 0.0
    %1976 = vmatpush2.msra.mxu0 0.0
    %1977 = vmatprep.subr.mxu0 0.0
    %1978 = vmatpush2.msra.mxu0 0.0
    %1979 = vmatprep.subr.mxu0 0.0
    %1980 = vmatpush2.msra.mxu0 0.0
    %1981 = vmatprep.mubr.f32.mxu0 0.0
    %1982 = vmatmul.mubr.f32.gmra.mxu0 %v1912
    %v1983 = vpop.f32.mrf.mxu0
    %v1984 = vadd.f32 0.0, %v1983
    %v1985 = vpop.f32.mrf.mxu0
    %1986 = vmatprep.mubr.f32.mxu0 0.0
    %1987 = vmatmul.mubr.f32.gmra.mxu0 %v1915
    %v1988 = vpop.f32.mrf.mxu0
    %v1989 = vadd.f32 0.0, %v1988
    %v1990 = vpop.f32.mrf.mxu0
    %1991 = vdwg.mxu0
    %v1993 = vsel %vm887, %v1828, 0
    %v1996 = vsel %vm887, %v1829, 0
    %1998 = vmatprep.subr.mxu0 0.0
    %1999 = vmatpush1.msra.mxu0 0.0
    %2000 = vmatprep.subr.mxu0 0.0
    %2001 = vmatpush1.msra.mxu0 0.0
    %2002 = vmatprep.subr.mxu0 0.0
    %2003 = vmatpush1.msra.mxu0 0.0
    %2004 = vmatprep.subr.mxu0 0.0
    %2005 = vmatpush1.msra.mxu0 0.0
    %2006 = vmatprep.subr.mxu0 0.0
    %2007 = vmatpush1.msra.mxu0 0.0
    %2008 = vmatprep.subr.mxu0 0.0
    %2009 = vmatpush1.msra.mxu0 0.0
    %2010 = vmatprep.subr.mxu0 0.0
    %2011 = vmatpush1.msra.mxu0 0.0
    %2012 = vmatprep.subr.mxu0 0.0
    %2013 = vmatpush1.msra.mxu0 0.0
    %2014 = vmatprep.subr.mxu0 0.0
    %2015 = vmatpush1.msra.mxu0 0.0
    %2016 = vmatprep.subr.mxu0 0.0
    %2017 = vmatpush1.msra.mxu0 0.0
    %2018 = vmatprep.subr.mxu0 0.0
    %2019 = vmatpush1.msra.mxu0 0.0
    %2020 = vmatprep.subr.mxu0 0.0
    %2021 = vmatpush1.msra.mxu0 0.0
    %2022 = vmatprep.subr.mxu0 0.0
    %2023 = vmatpush1.msra.mxu0 %v790
    %2024 = vmatprep.subr.mxu0 0.0
    %2025 = vmatpush1.msra.mxu0 %v789
    %2026 = vmatprep.subr.mxu0 0.0
    %2027 = vmatpush1.msra.mxu0 %v788
    %2028 = vmatprep.subr.mxu0 0.0
    %2029 = vmatpush1.msra.mxu0 %v787
    %2030 = vmatprep.subr.mxu0 0.0
    %2031 = vmatpush2.msra.mxu0 0.0
    %2032 = vmatprep.subr.mxu0 0.0
    %2033 = vmatpush2.msra.mxu0 0.0
    %2034 = vmatprep.subr.mxu0 0.0
    %2035 = vmatpush2.msra.mxu0 0.0
    %2036 = vmatprep.subr.mxu0 0.0
    %2037 = vmatpush2.msra.mxu0 0.0
    %2038 = vmatprep.subr.mxu0 0.0
    %2039 = vmatpush2.msra.mxu0 0.0
    %2040 = vmatprep.subr.mxu0 0.0
    %2041 = vmatpush2.msra.mxu0 0.0
    %2042 = vmatprep.subr.mxu0 0.0
    %2043 = vmatpush2.msra.mxu0 0.0
    %2044 = vmatprep.subr.mxu0 0.0
    %2045 = vmatpush2.msra.mxu0 0.0
    %2046 = vmatprep.subr.mxu0 0.0
    %2047 = vmatpush2.msra.mxu0 0.0
    %2048 = vmatprep.subr.mxu0 0.0
    %2049 = vmatpush2.msra.mxu0 0.0
    %2050 = vmatprep.subr.mxu0 0.0
    %2051 = vmatpush2.msra.mxu0 0.0
    %2052 = vmatprep.subr.mxu0 0.0
    %2053 = vmatpush2.msra.mxu0 0.0
    %2054 = vmatprep.subr.mxu0 0.0
    %2055 = vmatpush2.msra.mxu0 0.0
    %2056 = vmatprep.subr.mxu0 0.0
    %2057 = vmatpush2.msra.mxu0 0.0
    %2058 = vmatprep.subr.mxu0 0.0
    %2059 = vmatpush2.msra.mxu0 0.0
    %2060 = vmatprep.subr.mxu0 0.0
    %2061 = vmatpush2.msra.mxu0 0.0
    %2062 = vmatprep.mubr.f32.mxu0 0.0
    %2063 = vmatmul.mubr.f32.gmra.mxu0 %v1993
    %v2064 = vpop.f32.mrf.mxu0
    %v2065 = vadd.f32 %v1984, %v2064
    %v2066 = vpop.f32.mrf.mxu0
    %2067 = vmatprep.mubr.f32.mxu0 0.0
    %2068 = vmatmul.mubr.f32.gmra.mxu0 %v1996
    %v2069 = vpop.f32.mrf.mxu0
    %v2070 = vadd.f32 %v1989, %v2069
    %v2071 = vpop.f32.mrf.mxu0
    %2072 = vdwg.mxu0
    %v2074 = vlaneseq
    %v2075 = vshrl.u32 %v2074, 7
    %v2076 = vsub.s32 0, %v2075
    %v2077 = vrot.slane %v795, %v2076
    %v2079 = vadd.f32 %v2065, %v2077
    %v2080 = vadd.f32 %v2070, %v2077
    %2081 = vmatprep.subr.mxu0 0.0
    %2082 = vmatpush1.msra.mxu0 0.0
    %2083 = vmatprep.subr.mxu0 0.0
    %2084 = vmatpush1.msra.mxu0 0.0
    %2085 = vmatprep.subr.mxu0 0.0
    %2086 = vmatpush1.msra.mxu0 0.0
    %2087 = vmatprep.subr.mxu0 0.0
    %2088 = vmatpush1.msra.mxu0 0.0
    %2089 = vmatprep.subr.mxu0 0.0
    %2090 = vmatpush1.msra.mxu0 0.0
    %2091 = vmatprep.subr.mxu0 0.0
    %2092 = vmatpush1.msra.mxu0 0.0
    %2093 = vmatprep.subr.mxu0 0.0
    %2094 = vmatpush1.msra.mxu0 0.0
    %2095 = vmatprep.subr.mxu0 0.0
    %2096 = vmatpush1.msra.mxu0 0.0
    %2097 = vmatprep.subr.mxu0 0.0
    %2098 = vmatpush1.msra.mxu0 0.0
    %2099 = vmatprep.subr.mxu0 0.0
    %2100 = vmatpush1.msra.mxu0 0.0
    %2101 = vmatprep.subr.mxu0 0.0
    %2102 = vmatpush1.msra.mxu0 0.0
    %2103 = vmatprep.subr.mxu0 0.0
    %2104 = vmatpush1.msra.mxu0 0.0
    %2105 = vmatprep.subr.mxu0 0.0
    %2106 = vmatpush1.msra.mxu0 %v714
    %2107 = vmatprep.subr.mxu0 0.0
    %2108 = vmatpush1.msra.mxu0 %v713
    %2109 = vmatprep.subr.mxu0 0.0
    %2110 = vmatpush1.msra.mxu0 %v712
    %2111 = vmatprep.subr.mxu0 0.0
    %2112 = vmatpush1.msra.mxu0 %v711
    %2113 = vmatprep.subr.mxu0 0.0
    %2114 = vmatpush2.msra.mxu0 0.0
    %2115 = vmatprep.subr.mxu0 0.0
    %2116 = vmatpush2.msra.mxu0 0.0
    %2117 = vmatprep.subr.mxu0 0.0
    %2118 = vmatpush2.msra.mxu0 0.0
    %2119 = vmatprep.subr.mxu0 0.0
    %2120 = vmatpush2.msra.mxu0 0.0
    %2121 = vmatprep.subr.mxu0 0.0
    %2122 = vmatpush2.msra.mxu0 0.0
    %2123 = vmatprep.subr.mxu0 0.0
    %2124 = vmatpush2.msra.mxu0 0.0
    %2125 = vmatprep.subr.mxu0 0.0
    %2126 = vmatpush2.msra.mxu0 0.0
    %2127 = vmatprep.subr.mxu0 0.0
    %2128 = vmatpush2.msra.mxu0 0.0
    %2129 = vmatprep.subr.mxu0 0.0
    %2130 = vmatpush2.msra.mxu0 0.0
    %2131 = vmatprep.subr.mxu0 0.0
    %2132 = vmatpush2.msra.mxu0 0.0
    %2133 = vmatprep.subr.mxu0 0.0
    %2134 = vmatpush2.msra.mxu0 0.0
    %2135 = vmatprep.subr.mxu0 0.0
    %2136 = vmatpush2.msra.mxu0 0.0
    %2137 = vmatprep.subr.mxu0 0.0
    %2138 = vmatpush2.msra.mxu0 0.0
    %2139 = vmatprep.subr.mxu0 0.0
    %2140 = vmatpush2.msra.mxu0 0.0
    %2141 = vmatprep.subr.mxu0 0.0
    %2142 = vmatpush2.msra.mxu0 0.0
    %2143 = vmatprep.subr.mxu0 0.0
    %2144 = vmatpush2.msra.mxu0 0.0
    %2145 = vmatprep.mubr.f32.mxu0 0.0
    %2146 = vmatmul.mubr.f32.gmra.mxu0 %v1912
    %v2147 = vpop.f32.mrf.mxu0
    %v2148 = vadd.f32 0.0, %v2147
    %v2149 = vpop.f32.mrf.mxu0
    %2150 = vmatprep.mubr.f32.mxu0 0.0
    %2151 = vmatmul.mubr.f32.gmra.mxu0 %v1915
    %v2152 = vpop.f32.mrf.mxu0
    %v2153 = vadd.f32 0.0, %v2152
    %v2154 = vpop.f32.mrf.mxu0
    %2155 = vdwg.mxu0
    %2156 = vmatprep.subr.mxu0 0.0
    %2157 = vmatpush1.msra.mxu0 0.0
    %2158 = vmatprep.subr.mxu0 0.0
    %2159 = vmatpush1.msra.mxu0 0.0
    %2160 = vmatprep.subr.mxu0 0.0
    %2161 = vmatpush1.msra.mxu0 0.0
    %2162 = vmatprep.subr.mxu0 0.0
    %2163 = vmatpush1.msra.mxu0 0.0
    %2164 = vmatprep.subr.mxu0 0.0
    %2165 = vmatpush1.msra.mxu0 0.0
    %2166 = vmatprep.subr.mxu0 0.0
    %2167 = vmatpush1.msra.mxu0 0.0
    %2168 = vmatprep.subr.mxu0 0.0
    %2169 = vmatpush1.msra.mxu0 0.0
    %2170 = vmatprep.subr.mxu0 0.0
    %2171 = vmatpush1.msra.mxu0 0.0
    %2172 = vmatprep.subr.mxu0 0.0
    %2173 = vmatpush1.msra.mxu0 0.0
    %2174 = vmatprep.subr.mxu0 0.0
    %2175 = vmatpush1.msra.mxu0 0.0
    %2176 = vmatprep.subr.mxu0 0.0
    %2177 = vmatpush1.msra.mxu0 0.0
    %2178 = vmatprep.subr.mxu0 0.0
    %2179 = vmatpush1.msra.mxu0 0.0
    %2180 = vmatprep.subr.mxu0 0.0
    %2181 = vmatpush1.msra.mxu0 %v710
    %2182 = vmatprep.subr.mxu0 0.0
    %2183 = vmatpush1.msra.mxu0 %v709
    %2184 = vmatprep.subr.mxu0 0.0
    %2185 = vmatpush1.msra.mxu0 %v708
    %2186 = vmatprep.subr.mxu0 0.0
    %2187 = vmatpush1.msra.mxu0 %v707
    %2188 = vmatprep.subr.mxu0 0.0
    %2189 = vmatpush2.msra.mxu0 0.0
    %2190 = vmatprep.subr.mxu0 0.0
    %2191 = vmatpush2.msra.mxu0 0.0
    %2192 = vmatprep.subr.mxu0 0.0
    %2193 = vmatpush2.msra.mxu0 0.0
    %2194 = vmatprep.subr.mxu0 0.0
    %2195 = vmatpush2.msra.mxu0 0.0
    %2196 = vmatprep.subr.mxu0 0.0
    %2197 = vmatpush2.msra.mxu0 0.0
    %2198 = vmatprep.subr.mxu0 0.0
    %2199 = vmatpush2.msra.mxu0 0.0
    %2200 = vmatprep.subr.mxu0 0.0
    %2201 = vmatpush2.msra.mxu0 0.0
    %2202 = vmatprep.subr.mxu0 0.0
    %2203 = vmatpush2.msra.mxu0 0.0
    %2204 = vmatprep.subr.mxu0 0.0
    %2205 = vmatpush2.msra.mxu0 0.0
    %2206 = vmatprep.subr.mxu0 0.0
    %2207 = vmatpush2.msra.mxu0 0.0
    %2208 = vmatprep.subr.mxu0 0.0
    %2209 = vmatpush2.msra.mxu0 0.0
    %2210 = vmatprep.subr.mxu0 0.0
    %2211 = vmatpush2.msra.mxu0 0.0
    %2212 = vmatprep.subr.mxu0 0.0
    %2213 = vmatpush2.msra.mxu0 0.0
    %2214 = vmatprep.subr.mxu0 0.0
    %2215 = vmatpush2.msra.mxu0 0.0
    %2216 = vmatprep.subr.mxu0 0.0
    %2217 = vmatpush2.msra.mxu0 0.0
    %2218 = vmatprep.subr.mxu0 0.0
    %2219 = vmatpush2.msra.mxu0 0.0
    %2220 = vmatprep.mubr.f32.mxu0 0.0
    %2221 = vmatmul.mubr.f32.gmra.mxu0 %v1993
    %v2222 = vpop.f32.mrf.mxu0
    %v2223 = vadd.f32 %v2148, %v2222
    %v2224 = vpop.f32.mrf.mxu0
    %2225 = vmatprep.mubr.f32.mxu0 0.0
    %2226 = vmatmul.mubr.f32.gmra.mxu0 %v1996
    %v2227 = vpop.f32.mrf.mxu0
    %v2228 = vadd.f32 %v2153, %v2227
    %v2229 = vpop.f32.mrf.mxu0
    %2230 = vdwg.mxu0
    %v2232 = vsel %vm1066, %v2079, 0
    %v2235 = vsel %vm1066, %v2080, 0
    %2237 = vmatprep.subr.mxu0 0.0
    %2238 = vmatpush1.msra.mxu0 0.0
    %2239 = vmatprep.subr.mxu0 0.0
    %2240 = vmatpush1.msra.mxu0 0.0
    %2241 = vmatprep.subr.mxu0 0.0
    %2242 = vmatpush1.msra.mxu0 0.0
    %2243 = vmatprep.subr.mxu0 0.0
    %2244 = vmatpush1.msra.mxu0 0.0
    %2245 = vmatprep.subr.mxu0 0.0
    %2246 = vmatpush1.msra.mxu0 0.0
    %2247 = vmatprep.subr.mxu0 0.0
    %2248 = vmatpush1.msra.mxu0 0.0
    %2249 = vmatprep.subr.mxu0 0.0
    %2250 = vmatpush1.msra.mxu0 0.0
    %2251 = vmatprep.subr.mxu0 0.0
    %2252 = vmatpush1.msra.mxu0 0.0
    %2253 = vmatprep.subr.mxu0 0.0
    %2254 = vmatpush1.msra.mxu0 %v722
    %2255 = vmatprep.subr.mxu0 0.0
    %2256 = vmatpush1.msra.mxu0 %v721
    %2257 = vmatprep.subr.mxu0 0.0
    %2258 = vmatpush1.msra.mxu0 %v720
    %2259 = vmatprep.subr.mxu0 0.0
    %2260 = vmatpush1.msra.mxu0 %v719
    %2261 = vmatprep.subr.mxu0 0.0
    %2262 = vmatpush1.msra.mxu0 %v718
    %2263 = vmatprep.subr.mxu0 0.0
    %2264 = vmatpush1.msra.mxu0 %v717
    %2265 = vmatprep.subr.mxu0 0.0
    %2266 = vmatpush1.msra.mxu0 %v716
    %2267 = vmatprep.subr.mxu0 0.0
    %2268 = vmatpush1.msra.mxu0 %v715
    %2269 = vmatprep.subr.mxu0 0.0
    %2270 = vmatpush2.msra.mxu0 0.0
    %2271 = vmatprep.subr.mxu0 0.0
    %2272 = vmatpush2.msra.mxu0 0.0
    %2273 = vmatprep.subr.mxu0 0.0
    %2274 = vmatpush2.msra.mxu0 0.0
    %2275 = vmatprep.subr.mxu0 0.0
    %2276 = vmatpush2.msra.mxu0 0.0
    %2277 = vmatprep.subr.mxu0 0.0
    %2278 = vmatpush2.msra.mxu0 0.0
    %2279 = vmatprep.subr.mxu0 0.0
    %2280 = vmatpush2.msra.mxu0 0.0
    %2281 = vmatprep.subr.mxu0 0.0
    %2282 = vmatpush2.msra.mxu0 0.0
    %2283 = vmatprep.subr.mxu0 0.0
    %2284 = vmatpush2.msra.mxu0 0.0
    %2285 = vmatprep.subr.mxu0 0.0
    %2286 = vmatpush2.msra.mxu0 0.0
    %2287 = vmatprep.subr.mxu0 0.0
    %2288 = vmatpush2.msra.mxu0 0.0
    %2289 = vmatprep.subr.mxu0 0.0
    %2290 = vmatpush2.msra.mxu0 0.0
    %2291 = vmatprep.subr.mxu0 0.0
    %2292 = vmatpush2.msra.mxu0 0.0
    %2293 = vmatprep.subr.mxu0 0.0
    %2294 = vmatpush2.msra.mxu0 0.0
    %2295 = vmatprep.subr.mxu0 0.0
    %2296 = vmatpush2.msra.mxu0 0.0
    %2297 = vmatprep.subr.mxu0 0.0
    %2298 = vmatpush2.msra.mxu0 0.0
    %2299 = vmatprep.subr.mxu0 0.0
    %2300 = vmatpush2.msra.mxu0 0.0
    %2301 = vmatprep.mubr.f32.mxu0 0.0
    %2302 = vmatmul.mubr.f32.gmra.mxu0 %v2232
    %v2303 = vpop.f32.mrf.mxu0
    %v2304 = vadd.f32 0.0, %v2303
    %v2305 = vpop.f32.mrf.mxu0
    %2306 = vmatprep.mubr.f32.mxu0 0.0
    %2307 = vmatmul.mubr.f32.gmra.mxu0 %v2235
    %v2308 = vpop.f32.mrf.mxu0
    %v2309 = vadd.f32 0.0, %v2308
    %v2310 = vpop.f32.mrf.mxu0
    %2311 = vdwg.mxu0
    %v2312 = vadd.f32 %v2223, %v2304
    %v2313 = vadd.f32 %v2228, %v2309
    %v2315 = vlaneseq
    %v2316 = vshrl.u32 %v2315, 7
    %v2317 = vsub.s32 0, %v2316
    %v2318 = vrot.slane %v723, %v2317
    %v2320 = vadd.f32 %v2312, %v2318
    %v2321 = vadd.f32 %v2313, %v2318
    %v2322 = vmax.f32 %v2320, 0.0
    %v2323 = vmax.f32 %v2321, 0.0
    %v2325 = vlaneseq
    %v2326 = vshrl.u32 %v2325, 7
    %v2327 = vsub.s32 0, %v2326
    %v2328 = vrot.slane %v732, %v2327
    %v2331 = vsel %vm1066, %v2322, 0
    %v2334 = vsel %vm1066, %v2323, 0
    %2336 = vmatprep.subr.mxu0 0.0
    %2337 = vmatpush1.msra.mxu0 0.0
    %2338 = vmatprep.subr.mxu0 0.0
    %2339 = vmatpush1.msra.mxu0 0.0
    %2340 = vmatprep.subr.mxu0 0.0
    %2341 = vmatpush1.msra.mxu0 0.0
    %2342 = vmatprep.subr.mxu0 0.0
    %2343 = vmatpush1.msra.mxu0 0.0
    %2344 = vmatprep.subr.mxu0 0.0
    %2345 = vmatpush1.msra.mxu0 0.0
    %2346 = vmatprep.subr.mxu0 0.0
    %2347 = vmatpush1.msra.mxu0 0.0
    %2348 = vmatprep.subr.mxu0 0.0
    %2349 = vmatpush1.msra.mxu0 0.0
    %2350 = vmatprep.subr.mxu0 0.0
    %2351 = vmatpush1.msra.mxu0 0.0
    %2352 = vmatprep.subr.mxu0 0.0
    %2353 = vmatpush1.msra.mxu0 %v731
    %2354 = vmatprep.subr.mxu0 0.0
    %2355 = vmatpush1.msra.mxu0 %v730
    %2356 = vmatprep.subr.mxu0 0.0
    %2357 = vmatpush1.msra.mxu0 %v729
    %2358 = vmatprep.subr.mxu0 0.0
    %2359 = vmatpush1.msra.mxu0 %v728
    %2360 = vmatprep.subr.mxu0 0.0
    %2361 = vmatpush1.msra.mxu0 %v727
    %2362 = vmatprep.subr.mxu0 0.0
    %2363 = vmatpush1.msra.mxu0 %v726
    %2364 = vmatprep.subr.mxu0 0.0
    %2365 = vmatpush1.msra.mxu0 %v725
    %2366 = vmatprep.subr.mxu0 0.0
    %2367 = vmatpush1.msra.mxu0 %v724
    %2368 = vmatprep.subr.mxu0 0.0
    %2369 = vmatpush2.msra.mxu0 0.0
    %2370 = vmatprep.subr.mxu0 0.0
    %2371 = vmatpush2.msra.mxu0 0.0
    %2372 = vmatprep.subr.mxu0 0.0
    %2373 = vmatpush2.msra.mxu0 0.0
    %2374 = vmatprep.subr.mxu0 0.0
    %2375 = vmatpush2.msra.mxu0 0.0
    %2376 = vmatprep.subr.mxu0 0.0
    %2377 = vmatpush2.msra.mxu0 0.0
    %2378 = vmatprep.subr.mxu0 0.0
    %2379 = vmatpush2.msra.mxu0 0.0
    %2380 = vmatprep.subr.mxu0 0.0
    %2381 = vmatpush2.msra.mxu0 0.0
    %2382 = vmatprep.subr.mxu0 0.0
    %2383 = vmatpush2.msra.mxu0 0.0
    %2384 = vmatprep.subr.mxu0 0.0
    %2385 = vmatpush2.msra.mxu0 0.0
    %2386 = vmatprep.subr.mxu0 0.0
    %2387 = vmatpush2.msra.mxu0 0.0
    %2388 = vmatprep.subr.mxu0 0.0
    %2389 = vmatpush2.msra.mxu0 0.0
    %2390 = vmatprep.subr.mxu0 0.0
    %2391 = vmatpush2.msra.mxu0 0.0
    %2392 = vmatprep.subr.mxu0 0.0
    %2393 = vmatpush2.msra.mxu0 0.0
    %2394 = vmatprep.subr.mxu0 0.0
    %2395 = vmatpush2.msra.mxu0 0.0
    %2396 = vmatprep.subr.mxu0 0.0
    %2397 = vmatpush2.msra.mxu0 0.0
    %2398 = vmatprep.subr.mxu0 0.0
    %2399 = vmatpush2.msra.mxu0 0.0
    %2400 = vmatprep.mubr.f32.mxu0 0.0
    %2401 = vmatmul.mubr.f32.gmra.mxu0 %v2331
    %v2402 = vpop.f32.mrf.mxu0
    %v2403 = vadd.f32 %v2328, %v2402
    %v2404 = vpop.f32.mrf.mxu0
    %2405 = vmatprep.mubr.f32.mxu0 0.0
    %2406 = vmatmul.mubr.f32.gmra.mxu0 %v2334
    %v2407 = vpop.f32.mrf.mxu0
    %v2408 = vadd.f32 %v2328, %v2407
    %v2409 = vpop.f32.mrf.mxu0
    %2410 = vdwg.mxu0
    %v2411 = vmax.f32 %v2403, 0.0
    %v2412 = vmax.f32 %v2408, 0.0
    %v2414 = vlaneseq
    %v2415 = vshrl.u32 %v2414, 7
    %v2416 = vsub.s32 0, %v2415
    %v2417 = vrot.slane %v741, %v2416
    %v2420 = vsel %vm1066, %v2411, 0
    %v2423 = vsel %vm1066, %v2412, 0
    %2425 = vmatprep.subr.mxu0 0.0
    %2426 = vmatpush1.msra.mxu0 0.0
    %2427 = vmatprep.subr.mxu0 0.0
    %2428 = vmatpush1.msra.mxu0 0.0
    %2429 = vmatprep.subr.mxu0 0.0
    %2430 = vmatpush1.msra.mxu0 0.0
    %2431 = vmatprep.subr.mxu0 0.0
    %2432 = vmatpush1.msra.mxu0 0.0
    %2433 = vmatprep.subr.mxu0 0.0
    %2434 = vmatpush1.msra.mxu0 0.0
    %2435 = vmatprep.subr.mxu0 0.0
    %2436 = vmatpush1.msra.mxu0 0.0
    %2437 = vmatprep.subr.mxu0 0.0
    %2438 = vmatpush1.msra.mxu0 0.0
    %2439 = vmatprep.subr.mxu0 0.0
    %2440 = vmatpush1.msra.mxu0 0.0
    %2441 = vmatprep.subr.mxu0 0.0
    %2442 = vmatpush1.msra.mxu0 %v740
    %2443 = vmatprep.subr.mxu0 0.0
    %2444 = vmatpush1.msra.mxu0 %v739
    %2445 = vmatprep.subr.mxu0 0.0
    %2446 = vmatpush1.msra.mxu0 %v738
    %2447 = vmatprep.subr.mxu0 0.0
    %2448 = vmatpush1.msra.mxu0 %v737
    %2449 = vmatprep.subr.mxu0 0.0
    %2450 = vmatpush1.msra.mxu0 %v736
    %2451 = vmatprep.subr.mxu0 0.0
    %2452 = vmatpush1.msra.mxu0 %v735
    %2453 = vmatprep.subr.mxu0 0.0
    %2454 = vmatpush1.msra.mxu0 %v734
    %2455 = vmatprep.subr.mxu0 0.0
    %2456 = vmatpush1.msra.mxu0 %v733
    %2457 = vmatprep.subr.mxu0 0.0
    %2458 = vmatpush2.msra.mxu0 0.0
    %2459 = vmatprep.subr.mxu0 0.0
    %2460 = vmatpush2.msra.mxu0 0.0
    %2461 = vmatprep.subr.mxu0 0.0
    %2462 = vmatpush2.msra.mxu0 0.0
    %2463 = vmatprep.subr.mxu0 0.0
    %2464 = vmatpush2.msra.mxu0 0.0
    %2465 = vmatprep.subr.mxu0 0.0
    %2466 = vmatpush2.msra.mxu0 0.0
    %2467 = vmatprep.subr.mxu0 0.0
    %2468 = vmatpush2.msra.mxu0 0.0
    %2469 = vmatprep.subr.mxu0 0.0
    %2470 = vmatpush2.msra.mxu0 0.0
    %2471 = vmatprep.subr.mxu0 0.0
    %2472 = vmatpush2.msra.mxu0 0.0
    %2473 = vmatprep.subr.mxu0 0.0
    %2474 = vmatpush2.msra.mxu0 0.0
    %2475 = vmatprep.subr.mxu0 0.0
    %2476 = vmatpush2.msra.mxu0 0.0
    %2477 = vmatprep.subr.mxu0 0.0
    %2478 = vmatpush2.msra.mxu0 0.0
    %2479 = vmatprep.subr.mxu0 0.0
    %2480 = vmatpush2.msra.mxu0 0.0
    %2481 = vmatprep.subr.mxu0 0.0
    %2482 = vmatpush2.msra.mxu0 0.0
    %2483 = vmatprep.subr.mxu0 0.0
    %2484 = vmatpush2.msra.mxu0 0.0
    %2485 = vmatprep.subr.mxu0 0.0
    %2486 = vmatpush2.msra.mxu0 0.0
    %2487 = vmatprep.subr.mxu0 0.0
    %2488 = vmatpush2.msra.mxu0 0.0
    %2489 = vmatprep.mubr.f32.mxu0 0.0
    %2490 = vmatmul.mubr.f32.gmra.mxu0 %v2420
    %v2491 = vpop.f32.mrf.mxu0
    %v2492 = vadd.f32 %v2417, %v2491
    %v2493 = vpop.f32.mrf.mxu0
    %2494 = vmatprep.mubr.f32.mxu0 0.0
    %2495 = vmatmul.mubr.f32.gmra.mxu0 %v2423
    %v2496 = vpop.f32.mrf.mxu0
    %v2497 = vadd.f32 %v2417, %v2496
    %v2498 = vpop.f32.mrf.mxu0
    %2499 = vdwg.mxu0
    %v2501 = vsel %vm805, %v639, 0
    %v2504 = vsel %vm805, %v640, 0
    %2506 = vmatprep.subr.mxu0 0.0
    %2507 = vmatpush1.msra.mxu0 0.0
    %2508 = vmatprep.subr.mxu0 0.0
    %2509 = vmatpush1.msra.mxu0 0.0
    %2510 = vmatprep.subr.mxu0 0.0
    %2511 = vmatpush1.msra.mxu0 0.0
    %2512 = vmatprep.subr.mxu0 0.0
    %2513 = vmatpush1.msra.mxu0 0.0
    %2514 = vmatprep.subr.mxu0 0.0
    %2515 = vmatpush1.msra.mxu0 0.0
    %2516 = vmatprep.subr.mxu0 0.0
    %2517 = vmatpush1.msra.mxu0 0.0
    %2518 = vmatprep.subr.mxu0 0.0
    %2519 = vmatpush1.msra.mxu0 0.0
    %2520 = vmatprep.subr.mxu0 0.0
    %2521 = vmatpush1.msra.mxu0 0.0
    %2522 = vmatprep.subr.mxu0 0.0
    %2523 = vmatpush1.msra.mxu0 0.0
    %2524 = vmatprep.subr.mxu0 0.0
    %2525 = vmatpush1.msra.mxu0 0.0
    %2526 = vmatprep.subr.mxu0 0.0
    %2527 = vmatpush1.msra.mxu0 0.0
    %2528 = vmatprep.subr.mxu0 0.0
    %2529 = vmatpush1.msra.mxu0 0.0
    %2530 = vmatprep.subr.mxu0 0.0
    %2531 = vmatpush1.msra.mxu0 0.0
    %2532 = vmatprep.subr.mxu0 0.0
    %2533 = vmatpush1.msra.mxu0 0.0
    %2534 = vmatprep.subr.mxu0 0.0
    %2535 = vmatpush1.msra.mxu0 %v648
    %2536 = vmatprep.subr.mxu0 0.0
    %2537 = vmatpush1.msra.mxu0 %v647
    %2538 = vmatprep.subr.mxu0 0.0
    %2539 = vmatpush2.msra.mxu0 0.0
    %2540 = vmatprep.subr.mxu0 0.0
    %2541 = vmatpush2.msra.mxu0 0.0
    %2542 = vmatprep.subr.mxu0 0.0
    %2543 = vmatpush2.msra.mxu0 0.0
    %2544 = vmatprep.subr.mxu0 0.0
    %2545 = vmatpush2.msra.mxu0 0.0
    %2546 = vmatprep.subr.mxu0 0.0
    %2547 = vmatpush2.msra.mxu0 0.0
    %2548 = vmatprep.subr.mxu0 0.0
    %2549 = vmatpush2.msra.mxu0 0.0
    %2550 = vmatprep.subr.mxu0 0.0
    %2551 = vmatpush2.msra.mxu0 0.0
    %2552 = vmatprep.subr.mxu0 0.0
    %2553 = vmatpush2.msra.mxu0 0.0
    %2554 = vmatprep.subr.mxu0 0.0
    %2555 = vmatpush2.msra.mxu0 0.0
    %2556 = vmatprep.subr.mxu0 0.0
    %2557 = vmatpush2.msra.mxu0 0.0
    %2558 = vmatprep.subr.mxu0 0.0
    %2559 = vmatpush2.msra.mxu0 0.0
    %2560 = vmatprep.subr.mxu0 0.0
    %2561 = vmatpush2.msra.mxu0 0.0
    %2562 = vmatprep.subr.mxu0 0.0
    %2563 = vmatpush2.msra.mxu0 0.0
    %2564 = vmatprep.subr.mxu0 0.0
    %2565 = vmatpush2.msra.mxu0 0.0
    %2566 = vmatprep.subr.mxu0 0.0
    %2567 = vmatpush2.msra.mxu0 0.0
    %2568 = vmatprep.subr.mxu0 0.0
    %2569 = vmatpush2.msra.mxu0 0.0
    %2570 = vmatprep.mubr.f32.mxu0 0.0
    %2571 = vmatmul.mubr.f32.gmra.mxu0 %v2501
    %v2572 = vpop.f32.mrf.mxu0
    %v2573 = vadd.f32 0.0, %v2572
    %v2574 = vpop.f32.mrf.mxu0
    %2575 = vmatprep.mubr.f32.mxu0 0.0
    %2576 = vmatmul.mubr.f32.gmra.mxu0 %v2504
    %v2577 = vpop.f32.mrf.mxu0
    %v2578 = vadd.f32 0.0, %v2577
    %v2579 = vpop.f32.mrf.mxu0
    %2580 = vdwg.mxu0
    %v2582 = vsel %vm887, %v2573, 0
    %v2585 = vsel %vm887, %v2578, 0
    %2587 = vmatprep.subr.mxu0 0.0
    %2588 = vmatpush1.msra.mxu0 0.0
    %2589 = vmatprep.subr.mxu0 0.0
    %2590 = vmatpush1.msra.mxu0 0.0
    %2591 = vmatprep.subr.mxu0 0.0
    %2592 = vmatpush1.msra.mxu0 0.0
    %2593 = vmatprep.subr.mxu0 0.0
    %2594 = vmatpush1.msra.mxu0 0.0
    %2595 = vmatprep.subr.mxu0 0.0
    %2596 = vmatpush1.msra.mxu0 0.0
    %2597 = vmatprep.subr.mxu0 0.0
    %2598 = vmatpush1.msra.mxu0 0.0
    %2599 = vmatprep.subr.mxu0 0.0
    %2600 = vmatpush1.msra.mxu0 0.0
    %2601 = vmatprep.subr.mxu0 0.0
    %2602 = vmatpush1.msra.mxu0 0.0
    %2603 = vmatprep.subr.mxu0 0.0
    %2604 = vmatpush1.msra.mxu0 0.0
    %2605 = vmatprep.subr.mxu0 0.0
    %2606 = vmatpush1.msra.mxu0 0.0
    %2607 = vmatprep.subr.mxu0 0.0
    %2608 = vmatpush1.msra.mxu0 0.0
    %2609 = vmatprep.subr.mxu0 0.0
    %2610 = vmatpush1.msra.mxu0 0.0
    %2611 = vmatprep.subr.mxu0 0.0
    %2612 = vmatpush1.msra.mxu0 %v696
    %2613 = vmatprep.subr.mxu0 0.0
    %2614 = vmatpush1.msra.mxu0 %v695
    %2615 = vmatprep.subr.mxu0 0.0
    %2616 = vmatpush1.msra.mxu0 %v694
    %2617 = vmatprep.subr.mxu0 0.0
    %2618 = vmatpush1.msra.mxu0 %v693
    %2619 = vmatprep.subr.mxu0 0.0
    %2620 = vmatpush2.msra.mxu0 0.0
    %2621 = vmatprep.subr.mxu0 0.0
    %2622 = vmatpush2.msra.mxu0 0.0
    %2623 = vmatprep.subr.mxu0 0.0
    %2624 = vmatpush2.msra.mxu0 0.0
    %2625 = vmatprep.subr.mxu0 0.0
    %2626 = vmatpush2.msra.mxu0 0.0
    %2627 = vmatprep.subr.mxu0 0.0
    %2628 = vmatpush2.msra.mxu0 0.0
    %2629 = vmatprep.subr.mxu0 0.0
    %2630 = vmatpush2.msra.mxu0 0.0
    %2631 = vmatprep.subr.mxu0 0.0
    %2632 = vmatpush2.msra.mxu0 0.0
    %2633 = vmatprep.subr.mxu0 0.0
    %2634 = vmatpush2.msra.mxu0 0.0
    %2635 = vmatprep.subr.mxu0 0.0
    %2636 = vmatpush2.msra.mxu0 0.0
    %2637 = vmatprep.subr.mxu0 0.0
    %2638 = vmatpush2.msra.mxu0 0.0
    %2639 = vmatprep.subr.mxu0 0.0
    %2640 = vmatpush2.msra.mxu0 0.0
    %2641 = vmatprep.subr.mxu0 0.0
    %2642 = vmatpush2.msra.mxu0 0.0
    %2643 = vmatprep.subr.mxu0 0.0
    %2644 = vmatpush2.msra.mxu0 0.0
    %2645 = vmatprep.subr.mxu0 0.0
    %2646 = vmatpush2.msra.mxu0 0.0
    %2647 = vmatprep.subr.mxu0 0.0
    %2648 = vmatpush2.msra.mxu0 0.0
    %2649 = vmatprep.subr.mxu0 0.0
    %2650 = vmatpush2.msra.mxu0 0.0
    %2651 = vmatprep.mubr.f32.mxu0 0.0
    %2652 = vmatmul.mubr.f32.gmra.mxu0 %v2582
    %v2653 = vpop.f32.mrf.mxu0
    %v2654 = vadd.f32 0.0, %v2653
    %v2655 = vpop.f32.mrf.mxu0
    %2656 = vmatprep.mubr.f32.mxu0 0.0
    %2657 = vmatmul.mubr.f32.gmra.mxu0 %v2585
    %v2658 = vpop.f32.mrf.mxu0
    %v2659 = vadd.f32 0.0, %v2658
    %v2660 = vpop.f32.mrf.mxu0
    %2661 = vdwg.mxu0
    %v2663 = vsel %vm887, %v651, 0
    %v2666 = vsel %vm887, %v652, 0
    %2668 = vmatprep.subr.mxu0 0.0
    %2669 = vmatpush1.msra.mxu0 0.0
    %2670 = vmatprep.subr.mxu0 0.0
    %2671 = vmatpush1.msra.mxu0 0.0
    %2672 = vmatprep.subr.mxu0 0.0
    %2673 = vmatpush1.msra.mxu0 0.0
    %2674 = vmatprep.subr.mxu0 0.0
    %2675 = vmatpush1.msra.mxu0 0.0
    %2676 = vmatprep.subr.mxu0 0.0
    %2677 = vmatpush1.msra.mxu0 0.0
    %2678 = vmatprep.subr.mxu0 0.0
    %2679 = vmatpush1.msra.mxu0 0.0
    %2680 = vmatprep.subr.mxu0 0.0
    %2681 = vmatpush1.msra.mxu0 0.0
    %2682 = vmatprep.subr.mxu0 0.0
    %2683 = vmatpush1.msra.mxu0 0.0
    %2684 = vmatprep.subr.mxu0 0.0
    %2685 = vmatpush1.msra.mxu0 0.0
    %2686 = vmatprep.subr.mxu0 0.0
    %2687 = vmatpush1.msra.mxu0 0.0
    %2688 = vmatprep.subr.mxu0 0.0
    %2689 = vmatpush1.msra.mxu0 0.0
    %2690 = vmatprep.subr.mxu0 0.0
    %2691 = vmatpush1.msra.mxu0 0.0
    %2692 = vmatprep.subr.mxu0 0.0
    %2693 = vmatpush1.msra.mxu0 %v692
    %2694 = vmatprep.subr.mxu0 0.0
    %2695 = vmatpush1.msra.mxu0 %v691
    %2696 = vmatprep.subr.mxu0 0.0
    %2697 = vmatpush1.msra.mxu0 %v690
    %2698 = vmatprep.subr.mxu0 0.0
    %2699 = vmatpush1.msra.mxu0 %v689
    %2700 = vmatprep.subr.mxu0 0.0
    %2701 = vmatpush2.msra.mxu0 0.0
    %2702 = vmatprep.subr.mxu0 0.0
    %2703 = vmatpush2.msra.mxu0 0.0
    %2704 = vmatprep.subr.mxu0 0.0
    %2705 = vmatpush2.msra.mxu0 0.0
    %2706 = vmatprep.subr.mxu0 0.0
    %2707 = vmatpush2.msra.mxu0 0.0
    %2708 = vmatprep.subr.mxu0 0.0
    %2709 = vmatpush2.msra.mxu0 0.0
    %2710 = vmatprep.subr.mxu0 0.0
    %2711 = vmatpush2.msra.mxu0 0.0
    %2712 = vmatprep.subr.mxu0 0.0
    %2713 = vmatpush2.msra.mxu0 0.0
    %2714 = vmatprep.subr.mxu0 0.0
    %2715 = vmatpush2.msra.mxu0 0.0
    %2716 = vmatprep.subr.mxu0 0.0
    %2717 = vmatpush2.msra.mxu0 0.0
    %2718 = vmatprep.subr.mxu0 0.0
    %2719 = vmatpush2.msra.mxu0 0.0
    %2720 = vmatprep.subr.mxu0 0.0
    %2721 = vmatpush2.msra.mxu0 0.0
    %2722 = vmatprep.subr.mxu0 0.0
    %2723 = vmatpush2.msra.mxu0 0.0
    %2724 = vmatprep.subr.mxu0 0.0
    %2725 = vmatpush2.msra.mxu0 0.0
    %2726 = vmatprep.subr.mxu0 0.0
    %2727 = vmatpush2.msra.mxu0 0.0
    %2728 = vmatprep.subr.mxu0 0.0
    %2729 = vmatpush2.msra.mxu0 0.0
    %2730 = vmatprep.subr.mxu0 0.0
    %2731 = vmatpush2.msra.mxu0 0.0
    %2732 = vmatprep.mubr.f32.mxu0 0.0
    %2733 = vmatmul.mubr.f32.gmra.mxu0 %v2663
    %v2734 = vpop.f32.mrf.mxu0
    %v2735 = vadd.f32 %v2654, %v2734
    %v2736 = vpop.f32.mrf.mxu0
    %2737 = vmatprep.mubr.f32.mxu0 0.0
    %2738 = vmatmul.mubr.f32.gmra.mxu0 %v2666
    %v2739 = vpop.f32.mrf.mxu0
    %v2740 = vadd.f32 %v2659, %v2739
    %v2741 = vpop.f32.mrf.mxu0
    %2742 = vdwg.mxu0
    %v2743 = vadd.f32 %v2735, %v1735
    %v2744 = vadd.f32 %v2740, %v1735
    %v2745 = vmax.f32 %v2743, 0.0
    %v2746 = vmax.f32 %v2744, 0.0
    %v2748 = vsel %vm1066, %v2745, 0
    %v2751 = vsel %vm1066, %v2746, 0
    %2753 = vmatprep.subr.mxu0 0.0
    %2754 = vmatpush1.msra.mxu0 0.0
    %2755 = vmatprep.subr.mxu0 0.0
    %2756 = vmatpush1.msra.mxu0 0.0
    %2757 = vmatprep.subr.mxu0 0.0
    %2758 = vmatpush1.msra.mxu0 0.0
    %2759 = vmatprep.subr.mxu0 0.0
    %2760 = vmatpush1.msra.mxu0 0.0
    %2761 = vmatprep.subr.mxu0 0.0
    %2762 = vmatpush1.msra.mxu0 0.0
    %2763 = vmatprep.subr.mxu0 0.0
    %2764 = vmatpush1.msra.mxu0 0.0
    %2765 = vmatprep.subr.mxu0 0.0
    %2766 = vmatpush1.msra.mxu0 0.0
    %2767 = vmatprep.subr.mxu0 0.0
    %2768 = vmatpush1.msra.mxu0 0.0
    %2769 = vmatprep.subr.mxu0 0.0
    %2770 = vmatpush1.msra.mxu0 %v705
    %2771 = vmatprep.subr.mxu0 0.0
    %2772 = vmatpush1.msra.mxu0 %v704
    %2773 = vmatprep.subr.mxu0 0.0
    %2774 = vmatpush1.msra.mxu0 %v703
    %2775 = vmatprep.subr.mxu0 0.0
    %2776 = vmatpush1.msra.mxu0 %v702
    %2777 = vmatprep.subr.mxu0 0.0
    %2778 = vmatpush1.msra.mxu0 %v701
    %2779 = vmatprep.subr.mxu0 0.0
    %2780 = vmatpush1.msra.mxu0 %v700
    %2781 = vmatprep.subr.mxu0 0.0
    %2782 = vmatpush1.msra.mxu0 %v699
    %2783 = vmatprep.subr.mxu0 0.0
    %2784 = vmatpush1.msra.mxu0 %v698
    %2785 = vmatprep.subr.mxu0 0.0
    %2786 = vmatpush2.msra.mxu0 0.0
    %2787 = vmatprep.subr.mxu0 0.0
    %2788 = vmatpush2.msra.mxu0 0.0
    %2789 = vmatprep.subr.mxu0 0.0
    %2790 = vmatpush2.msra.mxu0 0.0
    %2791 = vmatprep.subr.mxu0 0.0
    %2792 = vmatpush2.msra.mxu0 0.0
    %2793 = vmatprep.subr.mxu0 0.0
    %2794 = vmatpush2.msra.mxu0 0.0
    %2795 = vmatprep.subr.mxu0 0.0
    %2796 = vmatpush2.msra.mxu0 0.0
    %2797 = vmatprep.subr.mxu0 0.0
    %2798 = vmatpush2.msra.mxu0 0.0
    %2799 = vmatprep.subr.mxu0 0.0
    %2800 = vmatpush2.msra.mxu0 0.0
    %2801 = vmatprep.subr.mxu0 0.0
    %2802 = vmatpush2.msra.mxu0 0.0
    %2803 = vmatprep.subr.mxu0 0.0
    %2804 = vmatpush2.msra.mxu0 0.0
    %2805 = vmatprep.subr.mxu0 0.0
    %2806 = vmatpush2.msra.mxu0 0.0
    %2807 = vmatprep.subr.mxu0 0.0
    %2808 = vmatpush2.msra.mxu0 0.0
    %2809 = vmatprep.subr.mxu0 0.0
    %2810 = vmatpush2.msra.mxu0 0.0
    %2811 = vmatprep.subr.mxu0 0.0
    %2812 = vmatpush2.msra.mxu0 0.0
    %2813 = vmatprep.subr.mxu0 0.0
    %2814 = vmatpush2.msra.mxu0 0.0
    %2815 = vmatprep.subr.mxu0 0.0
    %2816 = vmatpush2.msra.mxu0 0.0
    %2817 = vmatprep.mubr.f32.mxu0 0.0
    %2818 = vmatmul.mubr.f32.gmra.mxu0 %v2748
    %v2819 = vpop.f32.mrf.mxu0
    %v2820 = vadd.f32 %v1745, %v2819
    %v2821 = vpop.f32.mrf.mxu0
    %2822 = vmatprep.mubr.f32.mxu0 0.0
    %2823 = vmatmul.mubr.f32.gmra.mxu0 %v2751
    %v2824 = vpop.f32.mrf.mxu0
    %v2825 = vadd.f32 %v1745, %v2824
    %v2826 = vpop.f32.mrf.mxu0
    %2827 = vdwg.mxu0
    %v2828 = vmax.f32 %v2820, 0.0
    %v2829 = vmax.f32 %v2825, 0.0
    %v2831 = vsel %vm805, %v641, 0
    %v2834 = vsel %vm805, %v642, 0
    %2836 = vmatprep.subr.mxu0 0.0
    %2837 = vmatpush1.msra.mxu0 0.0
    %2838 = vmatprep.subr.mxu0 0.0
    %2839 = vmatpush1.msra.mxu0 0.0
    %2840 = vmatprep.subr.mxu0 0.0
    %2841 = vmatpush1.msra.mxu0 0.0
    %2842 = vmatprep.subr.mxu0 0.0
    %2843 = vmatpush1.msra.mxu0 0.0
    %2844 = vmatprep.subr.mxu0 0.0
    %2845 = vmatpush1.msra.mxu0 0.0
    %2846 = vmatprep.subr.mxu0 0.0
    %2847 = vmatpush1.msra.mxu0 0.0
    %2848 = vmatprep.subr.mxu0 0.0
    %2849 = vmatpush1.msra.mxu0 0.0
    %2850 = vmatprep.subr.mxu0 0.0
    %2851 = vmatpush1.msra.mxu0 0.0
    %2852 = vmatprep.subr.mxu0 0.0
    %2853 = vmatpush1.msra.mxu0 0.0
    %2854 = vmatprep.subr.mxu0 0.0
    %2855 = vmatpush1.msra.mxu0 0.0
    %2856 = vmatprep.subr.mxu0 0.0
    %2857 = vmatpush1.msra.mxu0 0.0
    %2858 = vmatprep.subr.mxu0 0.0
    %2859 = vmatpush1.msra.mxu0 0.0
    %2860 = vmatprep.subr.mxu0 0.0
    %2861 = vmatpush1.msra.mxu0 0.0
    %2862 = vmatprep.subr.mxu0 0.0
    %2863 = vmatpush1.msra.mxu0 0.0
    %2864 = vmatprep.subr.mxu0 0.0
    %2865 = vmatpush1.msra.mxu0 %v2829
    %2866 = vmatprep.subr.mxu0 0.0
    %2867 = vmatpush1.msra.mxu0 %v2828
    %2868 = vmatprep.subr.mxu0 0.0
    %2869 = vmatpush2.msra.mxu0 0.0
    %2870 = vmatprep.subr.mxu0 0.0
    %2871 = vmatpush2.msra.mxu0 0.0
    %2872 = vmatprep.subr.mxu0 0.0
    %2873 = vmatpush2.msra.mxu0 0.0
    %2874 = vmatprep.subr.mxu0 0.0
    %2875 = vmatpush2.msra.mxu0 0.0
    %2876 = vmatprep.subr.mxu0 0.0
    %2877 = vmatpush2.msra.mxu0 0.0
    %2878 = vmatprep.subr.mxu0 0.0
    %2879 = vmatpush2.msra.mxu0 0.0
    %2880 = vmatprep.subr.mxu0 0.0
    %2881 = vmatpush2.msra.mxu0 0.0
    %2882 = vmatprep.subr.mxu0 0.0
    %2883 = vmatpush2.msra.mxu0 0.0
    %2884 = vmatprep.subr.mxu0 0.0
    %2885 = vmatpush2.msra.mxu0 0.0
    %2886 = vmatprep.subr.mxu0 0.0
    %2887 = vmatpush2.msra.mxu0 0.0
    %2888 = vmatprep.subr.mxu0 0.0
    %2889 = vmatpush2.msra.mxu0 0.0
    %2890 = vmatprep.subr.mxu0 0.0
    %2891 = vmatpush2.msra.mxu0 0.0
    %2892 = vmatprep.subr.mxu0 0.0
    %2893 = vmatpush2.msra.mxu0 0.0
    %2894 = vmatprep.subr.mxu0 0.0
    %2895 = vmatpush2.msra.mxu0 0.0
    %2896 = vmatprep.subr.mxu0 0.0
    %2897 = vmatpush2.msra.mxu0 0.0
    %2898 = vmatprep.subr.mxu0 0.0
    %2899 = vmatpush2.msra.mxu0 0.0
    %2900 = vmatprep.mubr.f32.mxu0 0.0
    %2901 = vmatmul.mubr.f32.gmra.mxu0 %v2831
    %v2902 = vpop.f32.mrf.mxu0
    %v2903 = vadd.f32 0.0, %v2902
    %v2904 = vpop.f32.mrf.mxu0
    %2905 = vmatprep.mubr.f32.mxu0 0.0
    %2906 = vmatmul.mubr.f32.gmra.mxu0 %v2834
    %v2907 = vpop.f32.mrf.mxu0
    %v2908 = vadd.f32 0.0, %v2907
    %v2909 = vpop.f32.mrf.mxu0
    %2910 = vdwg.mxu0
    %v2912 = vsel %vm887, %v2903, 0
    %v2915 = vsel %vm887, %v2908, 0
    %2917 = vmatprep.subr.mxu0 0.0
    %2918 = vmatpush1.msra.mxu0 0.0
    %2919 = vmatprep.subr.mxu0 0.0
    %2920 = vmatpush1.msra.mxu0 0.0
    %2921 = vmatprep.subr.mxu0 0.0
    %2922 = vmatpush1.msra.mxu0 0.0
    %2923 = vmatprep.subr.mxu0 0.0
    %2924 = vmatpush1.msra.mxu0 0.0
    %2925 = vmatprep.subr.mxu0 0.0
    %2926 = vmatpush1.msra.mxu0 0.0
    %2927 = vmatprep.subr.mxu0 0.0
    %2928 = vmatpush1.msra.mxu0 0.0
    %2929 = vmatprep.subr.mxu0 0.0
    %2930 = vmatpush1.msra.mxu0 0.0
    %2931 = vmatprep.subr.mxu0 0.0
    %2932 = vmatpush1.msra.mxu0 0.0
    %2933 = vmatprep.subr.mxu0 0.0
    %2934 = vmatpush1.msra.mxu0 0.0
    %2935 = vmatprep.subr.mxu0 0.0
    %2936 = vmatpush1.msra.mxu0 0.0
    %2937 = vmatprep.subr.mxu0 0.0
    %2938 = vmatpush1.msra.mxu0 0.0
    %2939 = vmatprep.subr.mxu0 0.0
    %2940 = vmatpush1.msra.mxu0 0.0
    %2941 = vmatprep.subr.mxu0 0.0
    %2942 = vmatpush1.msra.mxu0 %v803
    %2943 = vmatprep.subr.mxu0 0.0
    %2944 = vmatpush1.msra.mxu0 %v802
    %2945 = vmatprep.subr.mxu0 0.0
    %2946 = vmatpush1.msra.mxu0 %v801
    %2947 = vmatprep.subr.mxu0 0.0
    %2948 = vmatpush1.msra.mxu0 %v800
    %2949 = vmatprep.subr.mxu0 0.0
    %2950 = vmatpush2.msra.mxu0 0.0
    %2951 = vmatprep.subr.mxu0 0.0
    %2952 = vmatpush2.msra.mxu0 0.0
    %2953 = vmatprep.subr.mxu0 0.0
    %2954 = vmatpush2.msra.mxu0 0.0
    %2955 = vmatprep.subr.mxu0 0.0
    %2956 = vmatpush2.msra.mxu0 0.0
    %2957 = vmatprep.subr.mxu0 0.0
    %2958 = vmatpush2.msra.mxu0 0.0
    %2959 = vmatprep.subr.mxu0 0.0
    %2960 = vmatpush2.msra.mxu0 0.0
    %2961 = vmatprep.subr.mxu0 0.0
    %2962 = vmatpush2.msra.mxu0 0.0
    %2963 = vmatprep.subr.mxu0 0.0
    %2964 = vmatpush2.msra.mxu0 0.0
    %2965 = vmatprep.subr.mxu0 0.0
    %2966 = vmatpush2.msra.mxu0 0.0
    %2967 = vmatprep.subr.mxu0 0.0
    %2968 = vmatpush2.msra.mxu0 0.0
    %2969 = vmatprep.subr.mxu0 0.0
    %2970 = vmatpush2.msra.mxu0 0.0
    %2971 = vmatprep.subr.mxu0 0.0
    %2972 = vmatpush2.msra.mxu0 0.0
    %2973 = vmatprep.subr.mxu0 0.0
    %2974 = vmatpush2.msra.mxu0 0.0
    %2975 = vmatprep.subr.mxu0 0.0
    %2976 = vmatpush2.msra.mxu0 0.0
    %2977 = vmatprep.subr.mxu0 0.0
    %2978 = vmatpush2.msra.mxu0 0.0
    %2979 = vmatprep.subr.mxu0 0.0
    %2980 = vmatpush2.msra.mxu0 0.0
    %2981 = vmatprep.mubr.f32.mxu0 0.0
    %2982 = vmatmul.mubr.f32.gmra.mxu0 %v2912
    %v2983 = vpop.f32.mrf.mxu0
    %v2984 = vadd.f32 0.0, %v2983
    %v2985 = vpop.f32.mrf.mxu0
    %2986 = vmatprep.mubr.f32.mxu0 0.0
    %2987 = vmatmul.mubr.f32.gmra.mxu0 %v2915
    %v2988 = vpop.f32.mrf.mxu0
    %v2989 = vadd.f32 0.0, %v2988
    %v2990 = vpop.f32.mrf.mxu0
    %2991 = vdwg.mxu0
    %v2993 = vsel %vm887, %v2828, 0
    %v2996 = vsel %vm887, %v2829, 0
    %2998 = vmatprep.subr.mxu0 0.0
    %2999 = vmatpush1.msra.mxu0 0.0
    %3000 = vmatprep.subr.mxu0 0.0
    %3001 = vmatpush1.msra.mxu0 0.0
    %3002 = vmatprep.subr.mxu0 0.0
    %3003 = vmatpush1.msra.mxu0 0.0
    %3004 = vmatprep.subr.mxu0 0.0
    %3005 = vmatpush1.msra.mxu0 0.0
    %3006 = vmatprep.subr.mxu0 0.0
    %3007 = vmatpush1.msra.mxu0 0.0
    %3008 = vmatprep.subr.mxu0 0.0
    %3009 = vmatpush1.msra.mxu0 0.0
    %3010 = vmatprep.subr.mxu0 0.0
    %3011 = vmatpush1.msra.mxu0 0.0
    %3012 = vmatprep.subr.mxu0 0.0
    %3013 = vmatpush1.msra.mxu0 0.0
    %3014 = vmatprep.subr.mxu0 0.0
    %3015 = vmatpush1.msra.mxu0 0.0
    %3016 = vmatprep.subr.mxu0 0.0
    %3017 = vmatpush1.msra.mxu0 0.0
    %3018 = vmatprep.subr.mxu0 0.0
    %3019 = vmatpush1.msra.mxu0 0.0
    %3020 = vmatprep.subr.mxu0 0.0
    %3021 = vmatpush1.msra.mxu0 0.0
    %3022 = vmatprep.subr.mxu0 0.0
    %3023 = vmatpush1.msra.mxu0 %v799
    %3024 = vmatprep.subr.mxu0 0.0
    %3025 = vmatpush1.msra.mxu0 %v798
    %3026 = vmatprep.subr.mxu0 0.0
    %3027 = vmatpush1.msra.mxu0 %v797
    %3028 = vmatprep.subr.mxu0 0.0
    %3029 = vmatpush1.msra.mxu0 %v796
    %3030 = vmatprep.subr.mxu0 0.0
    %3031 = vmatpush2.msra.mxu0 0.0
    %3032 = vmatprep.subr.mxu0 0.0
    %3033 = vmatpush2.msra.mxu0 0.0
    %3034 = vmatprep.subr.mxu0 0.0
    %3035 = vmatpush2.msra.mxu0 0.0
    %3036 = vmatprep.subr.mxu0 0.0
    %3037 = vmatpush2.msra.mxu0 0.0
    %3038 = vmatprep.subr.mxu0 0.0
    %3039 = vmatpush2.msra.mxu0 0.0
    %3040 = vmatprep.subr.mxu0 0.0
    %3041 = vmatpush2.msra.mxu0 0.0
    %3042 = vmatprep.subr.mxu0 0.0
    %3043 = vmatpush2.msra.mxu0 0.0
    %3044 = vmatprep.subr.mxu0 0.0
    %3045 = vmatpush2.msra.mxu0 0.0
    %3046 = vmatprep.subr.mxu0 0.0
    %3047 = vmatpush2.msra.mxu0 0.0
    %3048 = vmatprep.subr.mxu0 0.0
    %3049 = vmatpush2.msra.mxu0 0.0
    %3050 = vmatprep.subr.mxu0 0.0
    %3051 = vmatpush2.msra.mxu0 0.0
    %3052 = vmatprep.subr.mxu0 0.0
    %3053 = vmatpush2.msra.mxu0 0.0
    %3054 = vmatprep.subr.mxu0 0.0
    %3055 = vmatpush2.msra.mxu0 0.0
    %3056 = vmatprep.subr.mxu0 0.0
    %3057 = vmatpush2.msra.mxu0 0.0
    %3058 = vmatprep.subr.mxu0 0.0
    %3059 = vmatpush2.msra.mxu0 0.0
    %3060 = vmatprep.subr.mxu0 0.0
    %3061 = vmatpush2.msra.mxu0 0.0
    %3062 = vmatprep.mubr.f32.mxu0 0.0
    %3063 = vmatmul.mubr.f32.gmra.mxu0 %v2993
    %v3064 = vpop.f32.mrf.mxu0
    %v3065 = vadd.f32 %v2984, %v3064
    %v3066 = vpop.f32.mrf.mxu0
    %3067 = vmatprep.mubr.f32.mxu0 0.0
    %3068 = vmatmul.mubr.f32.gmra.mxu0 %v2996
    %v3069 = vpop.f32.mrf.mxu0
    %v3070 = vadd.f32 %v2989, %v3069
    %v3071 = vpop.f32.mrf.mxu0
    %3072 = vdwg.mxu0
    %v3074 = vlaneseq
    %v3075 = vshrl.u32 %v3074, 7
    %v3076 = vsub.s32 0, %v3075
    %v3077 = vrot.slane %v804, %v3076
    %v3079 = vadd.f32 %v3065, %v3077
    %v3080 = vadd.f32 %v3070, %v3077
    %3081 = vmatprep.subr.mxu0 0.0
    %3082 = vmatpush1.msra.mxu0 0.0
    %3083 = vmatprep.subr.mxu0 0.0
    %3084 = vmatpush1.msra.mxu0 0.0
    %3085 = vmatprep.subr.mxu0 0.0
    %3086 = vmatpush1.msra.mxu0 0.0
    %3087 = vmatprep.subr.mxu0 0.0
    %3088 = vmatpush1.msra.mxu0 0.0
    %3089 = vmatprep.subr.mxu0 0.0
    %3090 = vmatpush1.msra.mxu0 0.0
    %3091 = vmatprep.subr.mxu0 0.0
    %3092 = vmatpush1.msra.mxu0 0.0
    %3093 = vmatprep.subr.mxu0 0.0
    %3094 = vmatpush1.msra.mxu0 0.0
    %3095 = vmatprep.subr.mxu0 0.0
    %3096 = vmatpush1.msra.mxu0 0.0
    %3097 = vmatprep.subr.mxu0 0.0
    %3098 = vmatpush1.msra.mxu0 0.0
    %3099 = vmatprep.subr.mxu0 0.0
    %3100 = vmatpush1.msra.mxu0 0.0
    %3101 = vmatprep.subr.mxu0 0.0
    %3102 = vmatpush1.msra.mxu0 0.0
    %3103 = vmatprep.subr.mxu0 0.0
    %3104 = vmatpush1.msra.mxu0 0.0
    %3105 = vmatprep.subr.mxu0 0.0
    %3106 = vmatpush1.msra.mxu0 %v714
    %3107 = vmatprep.subr.mxu0 0.0
    %3108 = vmatpush1.msra.mxu0 %v713
    %3109 = vmatprep.subr.mxu0 0.0
    %3110 = vmatpush1.msra.mxu0 %v712
    %3111 = vmatprep.subr.mxu0 0.0
    %3112 = vmatpush1.msra.mxu0 %v711
    %3113 = vmatprep.subr.mxu0 0.0
    %3114 = vmatpush2.msra.mxu0 0.0
    %3115 = vmatprep.subr.mxu0 0.0
    %3116 = vmatpush2.msra.mxu0 0.0
    %3117 = vmatprep.subr.mxu0 0.0
    %3118 = vmatpush2.msra.mxu0 0.0
    %3119 = vmatprep.subr.mxu0 0.0
    %3120 = vmatpush2.msra.mxu0 0.0
    %3121 = vmatprep.subr.mxu0 0.0
    %3122 = vmatpush2.msra.mxu0 0.0
    %3123 = vmatprep.subr.mxu0 0.0
    %3124 = vmatpush2.msra.mxu0 0.0
    %3125 = vmatprep.subr.mxu0 0.0
    %3126 = vmatpush2.msra.mxu0 0.0
    %3127 = vmatprep.subr.mxu0 0.0
    %3128 = vmatpush2.msra.mxu0 0.0
    %3129 = vmatprep.subr.mxu0 0.0
    %3130 = vmatpush2.msra.mxu0 0.0
    %3131 = vmatprep.subr.mxu0 0.0
    %3132 = vmatpush2.msra.mxu0 0.0
    %3133 = vmatprep.subr.mxu0 0.0
    %3134 = vmatpush2.msra.mxu0 0.0
    %3135 = vmatprep.subr.mxu0 0.0
    %3136 = vmatpush2.msra.mxu0 0.0
    %3137 = vmatprep.subr.mxu0 0.0
    %3138 = vmatpush2.msra.mxu0 0.0
    %3139 = vmatprep.subr.mxu0 0.0
    %3140 = vmatpush2.msra.mxu0 0.0
    %3141 = vmatprep.subr.mxu0 0.0
    %3142 = vmatpush2.msra.mxu0 0.0
    %3143 = vmatprep.subr.mxu0 0.0
    %3144 = vmatpush2.msra.mxu0 0.0
    %3145 = vmatprep.mubr.f32.mxu0 0.0
    %3146 = vmatmul.mubr.f32.gmra.mxu0 %v2912
    %v3147 = vpop.f32.mrf.mxu0
    %v3148 = vadd.f32 0.0, %v3147
    %v3149 = vpop.f32.mrf.mxu0
    %3150 = vmatprep.mubr.f32.mxu0 0.0
    %3151 = vmatmul.mubr.f32.gmra.mxu0 %v2915
    %v3152 = vpop.f32.mrf.mxu0
    %v3153 = vadd.f32 0.0, %v3152
    %v3154 = vpop.f32.mrf.mxu0
    %3155 = vdwg.mxu0
    %3156 = vmatprep.subr.mxu0 0.0
    %3157 = vmatpush1.msra.mxu0 0.0
    %3158 = vmatprep.subr.mxu0 0.0
    %3159 = vmatpush1.msra.mxu0 0.0
    %3160 = vmatprep.subr.mxu0 0.0
    %3161 = vmatpush1.msra.mxu0 0.0
    %3162 = vmatprep.subr.mxu0 0.0
    %3163 = vmatpush1.msra.mxu0 0.0
    %3164 = vmatprep.subr.mxu0 0.0
    %3165 = vmatpush1.msra.mxu0 0.0
    %3166 = vmatprep.subr.mxu0 0.0
    %3167 = vmatpush1.msra.mxu0 0.0
    %3168 = vmatprep.subr.mxu0 0.0
    %3169 = vmatpush1.msra.mxu0 0.0
    %3170 = vmatprep.subr.mxu0 0.0
    %3171 = vmatpush1.msra.mxu0 0.0
    %3172 = vmatprep.subr.mxu0 0.0
    %3173 = vmatpush1.msra.mxu0 0.0
    %3174 = vmatprep.subr.mxu0 0.0
    %3175 = vmatpush1.msra.mxu0 0.0
    %3176 = vmatprep.subr.mxu0 0.0
    %3177 = vmatpush1.msra.mxu0 0.0
    %3178 = vmatprep.subr.mxu0 0.0
    %3179 = vmatpush1.msra.mxu0 0.0
    %3180 = vmatprep.subr.mxu0 0.0
    %3181 = vmatpush1.msra.mxu0 %v710
    %3182 = vmatprep.subr.mxu0 0.0
    %3183 = vmatpush1.msra.mxu0 %v709
    %3184 = vmatprep.subr.mxu0 0.0
    %3185 = vmatpush1.msra.mxu0 %v708
    %3186 = vmatprep.subr.mxu0 0.0
    %3187 = vmatpush1.msra.mxu0 %v707
    %3188 = vmatprep.subr.mxu0 0.0
    %3189 = vmatpush2.msra.mxu0 0.0
    %3190 = vmatprep.subr.mxu0 0.0
    %3191 = vmatpush2.msra.mxu0 0.0
    %3192 = vmatprep.subr.mxu0 0.0
    %3193 = vmatpush2.msra.mxu0 0.0
    %3194 = vmatprep.subr.mxu0 0.0
    %3195 = vmatpush2.msra.mxu0 0.0
    %3196 = vmatprep.subr.mxu0 0.0
    %3197 = vmatpush2.msra.mxu0 0.0
    %3198 = vmatprep.subr.mxu0 0.0
    %3199 = vmatpush2.msra.mxu0 0.0
    %3200 = vmatprep.subr.mxu0 0.0
    %3201 = vmatpush2.msra.mxu0 0.0
    %3202 = vmatprep.subr.mxu0 0.0
    %3203 = vmatpush2.msra.mxu0 0.0
    %3204 = vmatprep.subr.mxu0 0.0
    %3205 = vmatpush2.msra.mxu0 0.0
    %3206 = vmatprep.subr.mxu0 0.0
    %3207 = vmatpush2.msra.mxu0 0.0
    %3208 = vmatprep.subr.mxu0 0.0
    %3209 = vmatpush2.msra.mxu0 0.0
    %3210 = vmatprep.subr.mxu0 0.0
    %3211 = vmatpush2.msra.mxu0 0.0
    %3212 = vmatprep.subr.mxu0 0.0
    %3213 = vmatpush2.msra.mxu0 0.0
    %3214 = vmatprep.subr.mxu0 0.0
    %3215 = vmatpush2.msra.mxu0 0.0
    %3216 = vmatprep.subr.mxu0 0.0
    %3217 = vmatpush2.msra.mxu0 0.0
    %3218 = vmatprep.subr.mxu0 0.0
    %3219 = vmatpush2.msra.mxu0 0.0
    %3220 = vmatprep.mubr.f32.mxu0 0.0
    %3221 = vmatmul.mubr.f32.gmra.mxu0 %v2993
    %v3222 = vpop.f32.mrf.mxu0
    %v3223 = vadd.f32 %v3148, %v3222
    %v3224 = vpop.f32.mrf.mxu0
    %3225 = vmatprep.mubr.f32.mxu0 0.0
    %3226 = vmatmul.mubr.f32.gmra.mxu0 %v2996
    %v3227 = vpop.f32.mrf.mxu0
    %v3228 = vadd.f32 %v3153, %v3227
    %v3229 = vpop.f32.mrf.mxu0
    %3230 = vdwg.mxu0
    %v3232 = vsel %vm1066, %v3079, 0
    %v3235 = vsel %vm1066, %v3080, 0
    %3237 = vmatprep.subr.mxu0 0.0
    %3238 = vmatpush1.msra.mxu0 0.0
    %3239 = vmatprep.subr.mxu0 0.0
    %3240 = vmatpush1.msra.mxu0 0.0
    %3241 = vmatprep.subr.mxu0 0.0
    %3242 = vmatpush1.msra.mxu0 0.0
    %3243 = vmatprep.subr.mxu0 0.0
    %3244 = vmatpush1.msra.mxu0 0.0
    %3245 = vmatprep.subr.mxu0 0.0
    %3246 = vmatpush1.msra.mxu0 0.0
    %3247 = vmatprep.subr.mxu0 0.0
    %3248 = vmatpush1.msra.mxu0 0.0
    %3249 = vmatprep.subr.mxu0 0.0
    %3250 = vmatpush1.msra.mxu0 0.0
    %3251 = vmatprep.subr.mxu0 0.0
    %3252 = vmatpush1.msra.mxu0 0.0
    %3253 = vmatprep.subr.mxu0 0.0
    %3254 = vmatpush1.msra.mxu0 %v722
    %3255 = vmatprep.subr.mxu0 0.0
    %3256 = vmatpush1.msra.mxu0 %v721
    %3257 = vmatprep.subr.mxu0 0.0
    %3258 = vmatpush1.msra.mxu0 %v720
    %3259 = vmatprep.subr.mxu0 0.0
    %3260 = vmatpush1.msra.mxu0 %v719
    %3261 = vmatprep.subr.mxu0 0.0
    %3262 = vmatpush1.msra.mxu0 %v718
    %3263 = vmatprep.subr.mxu0 0.0
    %3264 = vmatpush1.msra.mxu0 %v717
    %3265 = vmatprep.subr.mxu0 0.0
    %3266 = vmatpush1.msra.mxu0 %v716
    %3267 = vmatprep.subr.mxu0 0.0
    %3268 = vmatpush1.msra.mxu0 %v715
    %3269 = vmatprep.subr.mxu0 0.0
    %3270 = vmatpush2.msra.mxu0 0.0
    %3271 = vmatprep.subr.mxu0 0.0
    %3272 = vmatpush2.msra.mxu0 0.0
    %3273 = vmatprep.subr.mxu0 0.0
    %3274 = vmatpush2.msra.mxu0 0.0
    %3275 = vmatprep.subr.mxu0 0.0
    %3276 = vmatpush2.msra.mxu0 0.0
    %3277 = vmatprep.subr.mxu0 0.0
    %3278 = vmatpush2.msra.mxu0 0.0
    %3279 = vmatprep.subr.mxu0 0.0
    %3280 = vmatpush2.msra.mxu0 0.0
    %3281 = vmatprep.subr.mxu0 0.0
    %3282 = vmatpush2.msra.mxu0 0.0
    %3283 = vmatprep.subr.mxu0 0.0
    %3284 = vmatpush2.msra.mxu0 0.0
    %3285 = vmatprep.subr.mxu0 0.0
    %3286 = vmatpush2.msra.mxu0 0.0
    %3287 = vmatprep.subr.mxu0 0.0
    %3288 = vmatpush2.msra.mxu0 0.0
    %3289 = vmatprep.subr.mxu0 0.0
    %3290 = vmatpush2.msra.mxu0 0.0
    %3291 = vmatprep.subr.mxu0 0.0
    %3292 = vmatpush2.msra.mxu0 0.0
    %3293 = vmatprep.subr.mxu0 0.0
    %3294 = vmatpush2.msra.mxu0 0.0
    %3295 = vmatprep.subr.mxu0 0.0
    %3296 = vmatpush2.msra.mxu0 0.0
    %3297 = vmatprep.subr.mxu0 0.0
    %3298 = vmatpush2.msra.mxu0 0.0
    %3299 = vmatprep.subr.mxu0 0.0
    %3300 = vmatpush2.msra.mxu0 0.0
    %3301 = vmatprep.mubr.f32.mxu0 0.0
    %3302 = vmatmul.mubr.f32.gmra.mxu0 %v3232
    %v3303 = vpop.f32.mrf.mxu0
    %v3304 = vadd.f32 0.0, %v3303
    %v3305 = vpop.f32.mrf.mxu0
    %3306 = vmatprep.mubr.f32.mxu0 0.0
    %3307 = vmatmul.mubr.f32.gmra.mxu0 %v3235
    %v3308 = vpop.f32.mrf.mxu0
    %v3309 = vadd.f32 0.0, %v3308
    %v3310 = vpop.f32.mrf.mxu0
    %3311 = vdwg.mxu0
    %v3312 = vadd.f32 %v3223, %v3304
    %v3313 = vadd.f32 %v3228, %v3309
    %v3314 = vadd.f32 %v3312, %v2318
    %v3315 = vadd.f32 %v3313, %v2318
    %v3316 = vmax.f32 %v3314, 0.0
    %v3317 = vmax.f32 %v3315, 0.0
    %v3319 = vsel %vm1066, %v3316, 0
    %v3322 = vsel %vm1066, %v3317, 0
    %3324 = vmatprep.subr.mxu0 0.0
    %3325 = vmatpush1.msra.mxu0 0.0
    %3326 = vmatprep.subr.mxu0 0.0
    %3327 = vmatpush1.msra.mxu0 0.0
    %3328 = vmatprep.subr.mxu0 0.0
    %3329 = vmatpush1.msra.mxu0 0.0
    %3330 = vmatprep.subr.mxu0 0.0
    %3331 = vmatpush1.msra.mxu0 0.0
    %3332 = vmatprep.subr.mxu0 0.0
    %3333 = vmatpush1.msra.mxu0 0.0
    %3334 = vmatprep.subr.mxu0 0.0
    %3335 = vmatpush1.msra.mxu0 0.0
    %3336 = vmatprep.subr.mxu0 0.0
    %3337 = vmatpush1.msra.mxu0 0.0
    %3338 = vmatprep.subr.mxu0 0.0
    %3339 = vmatpush1.msra.mxu0 0.0
    %3340 = vmatprep.subr.mxu0 0.0
    %3341 = vmatpush1.msra.mxu0 %v731
    %3342 = vmatprep.subr.mxu0 0.0
    %3343 = vmatpush1.msra.mxu0 %v730
    %3344 = vmatprep.subr.mxu0 0.0
    %3345 = vmatpush1.msra.mxu0 %v729
    %3346 = vmatprep.subr.mxu0 0.0
    %3347 = vmatpush1.msra.mxu0 %v728
    %3348 = vmatprep.subr.mxu0 0.0
    %3349 = vmatpush1.msra.mxu0 %v727
    %3350 = vmatprep.subr.mxu0 0.0
    %3351 = vmatpush1.msra.mxu0 %v726
    %3352 = vmatprep.subr.mxu0 0.0
    %3353 = vmatpush1.msra.mxu0 %v725
    %3354 = vmatprep.subr.mxu0 0.0
    %3355 = vmatpush1.msra.mxu0 %v724
    %3356 = vmatprep.subr.mxu0 0.0
    %3357 = vmatpush2.msra.mxu0 0.0
    %3358 = vmatprep.subr.mxu0 0.0
    %3359 = vmatpush2.msra.mxu0 0.0
    %3360 = vmatprep.subr.mxu0 0.0
    %3361 = vmatpush2.msra.mxu0 0.0
    %3362 = vmatprep.subr.mxu0 0.0
    %3363 = vmatpush2.msra.mxu0 0.0
    %3364 = vmatprep.subr.mxu0 0.0
    %3365 = vmatpush2.msra.mxu0 0.0
    %3366 = vmatprep.subr.mxu0 0.0
    %3367 = vmatpush2.msra.mxu0 0.0
    %3368 = vmatprep.subr.mxu0 0.0
    %3369 = vmatpush2.msra.mxu0 0.0
    %3370 = vmatprep.subr.mxu0 0.0
    %3371 = vmatpush2.msra.mxu0 0.0
    %3372 = vmatprep.subr.mxu0 0.0
    %3373 = vmatpush2.msra.mxu0 0.0
    %3374 = vmatprep.subr.mxu0 0.0
    %3375 = vmatpush2.msra.mxu0 0.0
    %3376 = vmatprep.subr.mxu0 0.0
    %3377 = vmatpush2.msra.mxu0 0.0
    %3378 = vmatprep.subr.mxu0 0.0
    %3379 = vmatpush2.msra.mxu0 0.0
    %3380 = vmatprep.subr.mxu0 0.0
    %3381 = vmatpush2.msra.mxu0 0.0
    %3382 = vmatprep.subr.mxu0 0.0
    %3383 = vmatpush2.msra.mxu0 0.0
    %3384 = vmatprep.subr.mxu0 0.0
    %3385 = vmatpush2.msra.mxu0 0.0
    %3386 = vmatprep.subr.mxu0 0.0
    %3387 = vmatpush2.msra.mxu0 0.0
    %3388 = vmatprep.mubr.f32.mxu0 0.0
    %3389 = vmatmul.mubr.f32.gmra.mxu0 %v3319
    %v3390 = vpop.f32.mrf.mxu0
    %v3391 = vadd.f32 %v2328, %v3390
    %v3392 = vpop.f32.mrf.mxu0
    %3393 = vmatprep.mubr.f32.mxu0 0.0
    %3394 = vmatmul.mubr.f32.gmra.mxu0 %v3322
    %v3395 = vpop.f32.mrf.mxu0
    %v3396 = vadd.f32 %v2328, %v3395
    %v3397 = vpop.f32.mrf.mxu0
    %3398 = vdwg.mxu0
    %v3399 = vmax.f32 %v3391, 0.0
    %v3400 = vmax.f32 %v3396, 0.0
    %v3402 = vsel %vm1066, %v3399, 0
    %v3405 = vsel %vm1066, %v3400, 0
    %3407 = vmatprep.subr.mxu0 0.0
    %3408 = vmatpush1.msra.mxu0 0.0
    %3409 = vmatprep.subr.mxu0 0.0
    %3410 = vmatpush1.msra.mxu0 0.0
    %3411 = vmatprep.subr.mxu0 0.0
    %3412 = vmatpush1.msra.mxu0 0.0
    %3413 = vmatprep.subr.mxu0 0.0
    %3414 = vmatpush1.msra.mxu0 0.0
    %3415 = vmatprep.subr.mxu0 0.0
    %3416 = vmatpush1.msra.mxu0 0.0
    %3417 = vmatprep.subr.mxu0 0.0
    %3418 = vmatpush1.msra.mxu0 0.0
    %3419 = vmatprep.subr.mxu0 0.0
    %3420 = vmatpush1.msra.mxu0 0.0
    %3421 = vmatprep.subr.mxu0 0.0
    %3422 = vmatpush1.msra.mxu0 0.0
    %3423 = vmatprep.subr.mxu0 0.0
    %3424 = vmatpush1.msra.mxu0 %v740
    %3425 = vmatprep.subr.mxu0 0.0
    %3426 = vmatpush1.msra.mxu0 %v739
    %3427 = vmatprep.subr.mxu0 0.0
    %3428 = vmatpush1.msra.mxu0 %v738
    %3429 = vmatprep.subr.mxu0 0.0
    %3430 = vmatpush1.msra.mxu0 %v737
    %3431 = vmatprep.subr.mxu0 0.0
    %3432 = vmatpush1.msra.mxu0 %v736
    %3433 = vmatprep.subr.mxu0 0.0
    %3434 = vmatpush1.msra.mxu0 %v735
    %3435 = vmatprep.subr.mxu0 0.0
    %3436 = vmatpush1.msra.mxu0 %v734
    %3437 = vmatprep.subr.mxu0 0.0
    %3438 = vmatpush1.msra.mxu0 %v733
    %3439 = vmatprep.subr.mxu0 0.0
    %3440 = vmatpush2.msra.mxu0 0.0
    %3441 = vmatprep.subr.mxu0 0.0
    %3442 = vmatpush2.msra.mxu0 0.0
    %3443 = vmatprep.subr.mxu0 0.0
    %3444 = vmatpush2.msra.mxu0 0.0
    %3445 = vmatprep.subr.mxu0 0.0
    %3446 = vmatpush2.msra.mxu0 0.0
    %3447 = vmatprep.subr.mxu0 0.0
    %3448 = vmatpush2.msra.mxu0 0.0
    %3449 = vmatprep.subr.mxu0 0.0
    %3450 = vmatpush2.msra.mxu0 0.0
    %3451 = vmatprep.subr.mxu0 0.0
    %3452 = vmatpush2.msra.mxu0 0.0
    %3453 = vmatprep.subr.mxu0 0.0
    %3454 = vmatpush2.msra.mxu0 0.0
    %3455 = vmatprep.subr.mxu0 0.0
    %3456 = vmatpush2.msra.mxu0 0.0
    %3457 = vmatprep.subr.mxu0 0.0
    %3458 = vmatpush2.msra.mxu0 0.0
    %3459 = vmatprep.subr.mxu0 0.0
    %3460 = vmatpush2.msra.mxu0 0.0
    %3461 = vmatprep.subr.mxu0 0.0
    %3462 = vmatpush2.msra.mxu0 0.0
    %3463 = vmatprep.subr.mxu0 0.0
    %3464 = vmatpush2.msra.mxu0 0.0
    %3465 = vmatprep.subr.mxu0 0.0
    %3466 = vmatpush2.msra.mxu0 0.0
    %3467 = vmatprep.subr.mxu0 0.0
    %3468 = vmatpush2.msra.mxu0 0.0
    %3469 = vmatprep.subr.mxu0 0.0
    %3470 = vmatpush2.msra.mxu0 0.0
    %3471 = vmatprep.mubr.f32.mxu0 0.0
    %3472 = vmatmul.mubr.f32.gmra.mxu0 %v3402
    %v3473 = vpop.f32.mrf.mxu0
    %v3474 = vadd.f32 %v2417, %v3473
    %v3475 = vpop.f32.mrf.mxu0
    %3476 = vmatprep.mubr.f32.mxu0 0.0
    %3477 = vmatmul.mubr.f32.gmra.mxu0 %v3405
    %v3478 = vpop.f32.mrf.mxu0
    %v3479 = vadd.f32 %v2417, %v3478
    %v3480 = vpop.f32.mrf.mxu0
    %3481 = vdwg.mxu0
    %v3483 = vsel %vm805, %v643, 0
    %v3486 = vsel %vm805, %v644, 0
    %3488 = vmatprep.subr.mxu0 0.0
    %3489 = vmatpush1.msra.mxu0 0.0
    %3490 = vmatprep.subr.mxu0 0.0
    %3491 = vmatpush1.msra.mxu0 0.0
    %3492 = vmatprep.subr.mxu0 0.0
    %3493 = vmatpush1.msra.mxu0 0.0
    %3494 = vmatprep.subr.mxu0 0.0
    %3495 = vmatpush1.msra.mxu0 0.0
    %3496 = vmatprep.subr.mxu0 0.0
    %3497 = vmatpush1.msra.mxu0 0.0
    %3498 = vmatprep.subr.mxu0 0.0
    %3499 = vmatpush1.msra.mxu0 0.0
    %3500 = vmatprep.subr.mxu0 0.0
    %3501 = vmatpush1.msra.mxu0 0.0
    %3502 = vmatprep.subr.mxu0 0.0
    %3503 = vmatpush1.msra.mxu0 0.0
    %3504 = vmatprep.subr.mxu0 0.0
    %3505 = vmatpush1.msra.mxu0 0.0
    %3506 = vmatprep.subr.mxu0 0.0
    %3507 = vmatpush1.msra.mxu0 0.0
    %3508 = vmatprep.subr.mxu0 0.0
    %3509 = vmatpush1.msra.mxu0 0.0
    %3510 = vmatprep.subr.mxu0 0.0
    %3511 = vmatpush1.msra.mxu0 0.0
    %3512 = vmatprep.subr.mxu0 0.0
    %3513 = vmatpush1.msra.mxu0 0.0
    %3514 = vmatprep.subr.mxu0 0.0
    %3515 = vmatpush1.msra.mxu0 0.0
    %3516 = vmatprep.subr.mxu0 0.0
    %3517 = vmatpush1.msra.mxu0 %v3479
    %3518 = vmatprep.subr.mxu0 0.0
    %3519 = vmatpush1.msra.mxu0 %v3474
    %3520 = vmatprep.subr.mxu0 0.0
    %3521 = vmatpush2.msra.mxu0 0.0
    %3522 = vmatprep.subr.mxu0 0.0
    %3523 = vmatpush2.msra.mxu0 0.0
    %3524 = vmatprep.subr.mxu0 0.0
    %3525 = vmatpush2.msra.mxu0 0.0
    %3526 = vmatprep.subr.mxu0 0.0
    %3527 = vmatpush2.msra.mxu0 0.0
    %3528 = vmatprep.subr.mxu0 0.0
    %3529 = vmatpush2.msra.mxu0 0.0
    %3530 = vmatprep.subr.mxu0 0.0
    %3531 = vmatpush2.msra.mxu0 0.0
    %3532 = vmatprep.subr.mxu0 0.0
    %3533 = vmatpush2.msra.mxu0 0.0
    %3534 = vmatprep.subr.mxu0 0.0
    %3535 = vmatpush2.msra.mxu0 0.0
    %3536 = vmatprep.subr.mxu0 0.0
    %3537 = vmatpush2.msra.mxu0 0.0
    %3538 = vmatprep.subr.mxu0 0.0
    %3539 = vmatpush2.msra.mxu0 0.0
    %3540 = vmatprep.subr.mxu0 0.0
    %3541 = vmatpush2.msra.mxu0 0.0
    %3542 = vmatprep.subr.mxu0 0.0
    %3543 = vmatpush2.msra.mxu0 0.0
    %3544 = vmatprep.subr.mxu0 0.0
    %3545 = vmatpush2.msra.mxu0 0.0
    %3546 = vmatprep.subr.mxu0 0.0
    %3547 = vmatpush2.msra.mxu0 0.0
    %3548 = vmatprep.subr.mxu0 0.0
    %3549 = vmatpush2.msra.mxu0 0.0
    %3550 = vmatprep.subr.mxu0 0.0
    %3551 = vmatpush2.msra.mxu0 0.0
    %3552 = vmatprep.mubr.f32.mxu0 0.0
    %3553 = vmatmul.mubr.f32.gmra.mxu0 %v3483
    %v3554 = vpop.f32.mrf.mxu0
    %v3555 = vadd.f32 0.0, %v3554
    %v3556 = vpop.f32.mrf.mxu0
    %3557 = vmatprep.mubr.f32.mxu0 0.0
    %3558 = vmatmul.mubr.f32.gmra.mxu0 %v3486
    %v3559 = vpop.f32.mrf.mxu0
    %v3560 = vadd.f32 0.0, %v3559
    %v3561 = vpop.f32.mrf.mxu0
    %3562 = vdwg.mxu0
    %v3564 = vsel %vm805, %v637, 0
    %v3567 = vsel %vm805, %v638, 0
    %3569 = vmatprep.subr.mxu0 0.0
    %3570 = vmatpush1.msra.mxu0 0.0
    %3571 = vmatprep.subr.mxu0 0.0
    %3572 = vmatpush1.msra.mxu0 0.0
    %3573 = vmatprep.subr.mxu0 0.0
    %3574 = vmatpush1.msra.mxu0 0.0
    %3575 = vmatprep.subr.mxu0 0.0
    %3576 = vmatpush1.msra.mxu0 0.0
    %3577 = vmatprep.subr.mxu0 0.0
    %3578 = vmatpush1.msra.mxu0 0.0
    %3579 = vmatprep.subr.mxu0 0.0
    %3580 = vmatpush1.msra.mxu0 0.0
    %3581 = vmatprep.subr.mxu0 0.0
    %3582 = vmatpush1.msra.mxu0 0.0
    %3583 = vmatprep.subr.mxu0 0.0
    %3584 = vmatpush1.msra.mxu0 0.0
    %3585 = vmatprep.subr.mxu0 0.0
    %3586 = vmatpush1.msra.mxu0 0.0
    %3587 = vmatprep.subr.mxu0 0.0
    %3588 = vmatpush1.msra.mxu0 0.0
    %3589 = vmatprep.subr.mxu0 0.0
    %3590 = vmatpush1.msra.mxu0 0.0
    %3591 = vmatprep.subr.mxu0 0.0
    %3592 = vmatpush1.msra.mxu0 0.0
    %3593 = vmatprep.subr.mxu0 0.0
    %3594 = vmatpush1.msra.mxu0 0.0
    %3595 = vmatprep.subr.mxu0 0.0
    %3596 = vmatpush1.msra.mxu0 0.0
    %3597 = vmatprep.subr.mxu0 0.0
    %3598 = vmatpush1.msra.mxu0 %v2497
    %3599 = vmatprep.subr.mxu0 0.0
    %3600 = vmatpush1.msra.mxu0 %v2492
    %3601 = vmatprep.subr.mxu0 0.0
    %3602 = vmatpush2.msra.mxu0 0.0
    %3603 = vmatprep.subr.mxu0 0.0
    %3604 = vmatpush2.msra.mxu0 0.0
    %3605 = vmatprep.subr.mxu0 0.0
    %3606 = vmatpush2.msra.mxu0 0.0
    %3607 = vmatprep.subr.mxu0 0.0
    %3608 = vmatpush2.msra.mxu0 0.0
    %3609 = vmatprep.subr.mxu0 0.0
    %3610 = vmatpush2.msra.mxu0 0.0
    %3611 = vmatprep.subr.mxu0 0.0
    %3612 = vmatpush2.msra.mxu0 0.0
    %3613 = vmatprep.subr.mxu0 0.0
    %3614 = vmatpush2.msra.mxu0 0.0
    %3615 = vmatprep.subr.mxu0 0.0
    %3616 = vmatpush2.msra.mxu0 0.0
    %3617 = vmatprep.subr.mxu0 0.0
    %3618 = vmatpush2.msra.mxu0 0.0
    %3619 = vmatprep.subr.mxu0 0.0
    %3620 = vmatpush2.msra.mxu0 0.0
    %3621 = vmatprep.subr.mxu0 0.0
    %3622 = vmatpush2.msra.mxu0 0.0
    %3623 = vmatprep.subr.mxu0 0.0
    %3624 = vmatpush2.msra.mxu0 0.0
    %3625 = vmatprep.subr.mxu0 0.0
    %3626 = vmatpush2.msra.mxu0 0.0
    %3627 = vmatprep.subr.mxu0 0.0
    %3628 = vmatpush2.msra.mxu0 0.0
    %3629 = vmatprep.subr.mxu0 0.0
    %3630 = vmatpush2.msra.mxu0 0.0
    %3631 = vmatprep.subr.mxu0 0.0
    %3632 = vmatpush2.msra.mxu0 0.0
    %3633 = vmatprep.mubr.f32.mxu0 0.0
    %3634 = vmatmul.mubr.f32.gmra.mxu0 %v3564
    %v3635 = vpop.f32.mrf.mxu0
    %v3636 = vadd.f32 %v3555, %v3635
    %v3637 = vpop.f32.mrf.mxu0
    %3638 = vmatprep.mubr.f32.mxu0 0.0
    %3639 = vmatmul.mubr.f32.gmra.mxu0 %v3567
    %v3640 = vpop.f32.mrf.mxu0
    %v3641 = vadd.f32 %v3560, %v3640
    %v3642 = vpop.f32.mrf.mxu0
    %3643 = vdwg.mxu0
    %v3645 = vsel %vm887, %v3636, 0
    %v3648 = vsel %vm887, %v3641, 0
    %3650 = vmatprep.subr.mxu0 0.0
    %3651 = vmatpush1.msra.mxu0 0.0
    %3652 = vmatprep.subr.mxu0 0.0
    %3653 = vmatpush1.msra.mxu0 0.0
    %3654 = vmatprep.subr.mxu0 0.0
    %3655 = vmatpush1.msra.mxu0 0.0
    %3656 = vmatprep.subr.mxu0 0.0
    %3657 = vmatpush1.msra.mxu0 0.0
    %3658 = vmatprep.subr.mxu0 0.0
    %3659 = vmatpush1.msra.mxu0 0.0
    %3660 = vmatprep.subr.mxu0 0.0
    %3661 = vmatpush1.msra.mxu0 0.0
    %3662 = vmatprep.subr.mxu0 0.0
    %3663 = vmatpush1.msra.mxu0 0.0
    %3664 = vmatprep.subr.mxu0 0.0
    %3665 = vmatpush1.msra.mxu0 0.0
    %3666 = vmatprep.subr.mxu0 0.0
    %3667 = vmatpush1.msra.mxu0 0.0
    %3668 = vmatprep.subr.mxu0 0.0
    %3669 = vmatpush1.msra.mxu0 0.0
    %3670 = vmatprep.subr.mxu0 0.0
    %3671 = vmatpush1.msra.mxu0 0.0
    %3672 = vmatprep.subr.mxu0 0.0
    %3673 = vmatpush1.msra.mxu0 0.0
    %3674 = vmatprep.subr.mxu0 0.0
    %3675 = vmatpush1.msra.mxu0 %v749
    %3676 = vmatprep.subr.mxu0 0.0
    %3677 = vmatpush1.msra.mxu0 %v748
    %3678 = vmatprep.subr.mxu0 0.0
    %3679 = vmatpush1.msra.mxu0 %v747
    %3680 = vmatprep.subr.mxu0 0.0
    %3681 = vmatpush1.msra.mxu0 %v746
    %3682 = vmatprep.subr.mxu0 0.0
    %3683 = vmatpush2.msra.mxu0 0.0
    %3684 = vmatprep.subr.mxu0 0.0
    %3685 = vmatpush2.msra.mxu0 0.0
    %3686 = vmatprep.subr.mxu0 0.0
    %3687 = vmatpush2.msra.mxu0 0.0
    %3688 = vmatprep.subr.mxu0 0.0
    %3689 = vmatpush2.msra.mxu0 0.0
    %3690 = vmatprep.subr.mxu0 0.0
    %3691 = vmatpush2.msra.mxu0 0.0
    %3692 = vmatprep.subr.mxu0 0.0
    %3693 = vmatpush2.msra.mxu0 0.0
    %3694 = vmatprep.subr.mxu0 0.0
    %3695 = vmatpush2.msra.mxu0 0.0
    %3696 = vmatprep.subr.mxu0 0.0
    %3697 = vmatpush2.msra.mxu0 0.0
    %3698 = vmatprep.subr.mxu0 0.0
    %3699 = vmatpush2.msra.mxu0 0.0
    %3700 = vmatprep.subr.mxu0 0.0
    %3701 = vmatpush2.msra.mxu0 0.0
    %3702 = vmatprep.subr.mxu0 0.0
    %3703 = vmatpush2.msra.mxu0 0.0
    %3704 = vmatprep.subr.mxu0 0.0
    %3705 = vmatpush2.msra.mxu0 0.0
    %3706 = vmatprep.subr.mxu0 0.0
    %3707 = vmatpush2.msra.mxu0 0.0
    %3708 = vmatprep.subr.mxu0 0.0
    %3709 = vmatpush2.msra.mxu0 0.0
    %3710 = vmatprep.subr.mxu0 0.0
    %3711 = vmatpush2.msra.mxu0 0.0
    %3712 = vmatprep.subr.mxu0 0.0
    %3713 = vmatpush2.msra.mxu0 0.0
    %3714 = vmatprep.mubr.f32.mxu0 0.0
    %3715 = vmatmul.mubr.f32.gmra.mxu0 %v3645
    %v3716 = vpop.f32.mrf.mxu0
    %v3717 = vadd.f32 0.0, %v3716
    %v3718 = vpop.f32.mrf.mxu0
    %3719 = vmatprep.mubr.f32.mxu0 0.0
    %3720 = vmatmul.mubr.f32.gmra.mxu0 %v3648
    %v3721 = vpop.f32.mrf.mxu0
    %v3722 = vadd.f32 0.0, %v3721
    %v3723 = vpop.f32.mrf.mxu0
    %3724 = vdwg.mxu0
    %3725 = vmatprep.subr.mxu0 0.0
    %3726 = vmatpush1.msra.mxu0 0.0
    %3727 = vmatprep.subr.mxu0 0.0
    %3728 = vmatpush1.msra.mxu0 0.0
    %3729 = vmatprep.subr.mxu0 0.0
    %3730 = vmatpush1.msra.mxu0 0.0
    %3731 = vmatprep.subr.mxu0 0.0
    %3732 = vmatpush1.msra.mxu0 0.0
    %3733 = vmatprep.subr.mxu0 0.0
    %3734 = vmatpush1.msra.mxu0 0.0
    %3735 = vmatprep.subr.mxu0 0.0
    %3736 = vmatpush1.msra.mxu0 0.0
    %3737 = vmatprep.subr.mxu0 0.0
    %3738 = vmatpush1.msra.mxu0 0.0
    %3739 = vmatprep.subr.mxu0 0.0
    %3740 = vmatpush1.msra.mxu0 0.0
    %3741 = vmatprep.subr.mxu0 0.0
    %3742 = vmatpush1.msra.mxu0 0.0
    %3743 = vmatprep.subr.mxu0 0.0
    %3744 = vmatpush1.msra.mxu0 0.0
    %3745 = vmatprep.subr.mxu0 0.0
    %3746 = vmatpush1.msra.mxu0 0.0
    %3747 = vmatprep.subr.mxu0 0.0
    %3748 = vmatpush1.msra.mxu0 0.0
    %3749 = vmatprep.subr.mxu0 0.0
    %3750 = vmatpush1.msra.mxu0 %v745
    %3751 = vmatprep.subr.mxu0 0.0
    %3752 = vmatpush1.msra.mxu0 %v744
    %3753 = vmatprep.subr.mxu0 0.0
    %3754 = vmatpush1.msra.mxu0 %v743
    %3755 = vmatprep.subr.mxu0 0.0
    %3756 = vmatpush1.msra.mxu0 %v742
    %3757 = vmatprep.subr.mxu0 0.0
    %3758 = vmatpush2.msra.mxu0 0.0
    %3759 = vmatprep.subr.mxu0 0.0
    %3760 = vmatpush2.msra.mxu0 0.0
    %3761 = vmatprep.subr.mxu0 0.0
    %3762 = vmatpush2.msra.mxu0 0.0
    %3763 = vmatprep.subr.mxu0 0.0
    %3764 = vmatpush2.msra.mxu0 0.0
    %3765 = vmatprep.subr.mxu0 0.0
    %3766 = vmatpush2.msra.mxu0 0.0
    %3767 = vmatprep.subr.mxu0 0.0
    %3768 = vmatpush2.msra.mxu0 0.0
    %3769 = vmatprep.subr.mxu0 0.0
    %3770 = vmatpush2.msra.mxu0 0.0
    %3771 = vmatprep.subr.mxu0 0.0
    %3772 = vmatpush2.msra.mxu0 0.0
    %3773 = vmatprep.subr.mxu0 0.0
    %3774 = vmatpush2.msra.mxu0 0.0
    %3775 = vmatprep.subr.mxu0 0.0
    %3776 = vmatpush2.msra.mxu0 0.0
    %3777 = vmatprep.subr.mxu0 0.0
    %3778 = vmatpush2.msra.mxu0 0.0
    %3779 = vmatprep.subr.mxu0 0.0
    %3780 = vmatpush2.msra.mxu0 0.0
    %3781 = vmatprep.subr.mxu0 0.0
    %3782 = vmatpush2.msra.mxu0 0.0
    %3783 = vmatprep.subr.mxu0 0.0
    %3784 = vmatpush2.msra.mxu0 0.0
    %3785 = vmatprep.subr.mxu0 0.0
    %3786 = vmatpush2.msra.mxu0 0.0
    %3787 = vmatprep.subr.mxu0 0.0
    %3788 = vmatpush2.msra.mxu0 0.0
    %3789 = vmatprep.mubr.f32.mxu0 0.0
    %3790 = vmatmul.mubr.f32.gmra.mxu0 %v970
    %v3791 = vpop.f32.mrf.mxu0
    %v3792 = vadd.f32 %v3717, %v3791
    %v3793 = vpop.f32.mrf.mxu0
    %3794 = vmatprep.mubr.f32.mxu0 0.0
    %3795 = vmatmul.mubr.f32.gmra.mxu0 %v973
    %v3796 = vpop.f32.mrf.mxu0
    %v3797 = vadd.f32 %v3722, %v3796
    %v3798 = vpop.f32.mrf.mxu0
    %3799 = vdwg.mxu0
    %v3801 = vlaneseq
    %v3802 = vshrl.u32 %v3801, 7
    %v3803 = vsub.s32 0, %v3802
    %v3804 = vrot.slane %v750, %v3803
    %v3806 = vadd.f32 %v3792, %v3804
    %v3807 = vadd.f32 %v3797, %v3804
    %v3808 = vmax.f32 %v3806, 0.0
    %v3809 = vmax.f32 %v3807, 0.0
    %v3811 = vlaneseq
    %v3812 = vshrl.u32 %v3811, 7
    %v3813 = vsub.s32 0, %v3812
    %v3814 = vrot.slane %v759, %v3813
    %v3817 = vsel %vm1066, %v3808, 0
    %v3820 = vsel %vm1066, %v3809, 0
    %3822 = vmatprep.subr.mxu0 0.0
    %3823 = vmatpush1.msra.mxu0 0.0
    %3824 = vmatprep.subr.mxu0 0.0
    %3825 = vmatpush1.msra.mxu0 0.0
    %3826 = vmatprep.subr.mxu0 0.0
    %3827 = vmatpush1.msra.mxu0 0.0
    %3828 = vmatprep.subr.mxu0 0.0
    %3829 = vmatpush1.msra.mxu0 0.0
    %3830 = vmatprep.subr.mxu0 0.0
    %3831 = vmatpush1.msra.mxu0 0.0
    %3832 = vmatprep.subr.mxu0 0.0
    %3833 = vmatpush1.msra.mxu0 0.0
    %3834 = vmatprep.subr.mxu0 0.0
    %3835 = vmatpush1.msra.mxu0 0.0
    %3836 = vmatprep.subr.mxu0 0.0
    %3837 = vmatpush1.msra.mxu0 0.0
    %3838 = vmatprep.subr.mxu0 0.0
    %3839 = vmatpush1.msra.mxu0 %v758
    %3840 = vmatprep.subr.mxu0 0.0
    %3841 = vmatpush1.msra.mxu0 %v757
    %3842 = vmatprep.subr.mxu0 0.0
    %3843 = vmatpush1.msra.mxu0 %v756
    %3844 = vmatprep.subr.mxu0 0.0
    %3845 = vmatpush1.msra.mxu0 %v755
    %3846 = vmatprep.subr.mxu0 0.0
    %3847 = vmatpush1.msra.mxu0 %v754
    %3848 = vmatprep.subr.mxu0 0.0
    %3849 = vmatpush1.msra.mxu0 %v753
    %3850 = vmatprep.subr.mxu0 0.0
    %3851 = vmatpush1.msra.mxu0 %v752
    %3852 = vmatprep.subr.mxu0 0.0
    %3853 = vmatpush1.msra.mxu0 %v751
    %3854 = vmatprep.subr.mxu0 0.0
    %3855 = vmatpush2.msra.mxu0 0.0
    %3856 = vmatprep.subr.mxu0 0.0
    %3857 = vmatpush2.msra.mxu0 0.0
    %3858 = vmatprep.subr.mxu0 0.0
    %3859 = vmatpush2.msra.mxu0 0.0
    %3860 = vmatprep.subr.mxu0 0.0
    %3861 = vmatpush2.msra.mxu0 0.0
    %3862 = vmatprep.subr.mxu0 0.0
    %3863 = vmatpush2.msra.mxu0 0.0
    %3864 = vmatprep.subr.mxu0 0.0
    %3865 = vmatpush2.msra.mxu0 0.0
    %3866 = vmatprep.subr.mxu0 0.0
    %3867 = vmatpush2.msra.mxu0 0.0
    %3868 = vmatprep.subr.mxu0 0.0
    %3869 = vmatpush2.msra.mxu0 0.0
    %3870 = vmatprep.subr.mxu0 0.0
    %3871 = vmatpush2.msra.mxu0 0.0
    %3872 = vmatprep.subr.mxu0 0.0
    %3873 = vmatpush2.msra.mxu0 0.0
    %3874 = vmatprep.subr.mxu0 0.0
    %3875 = vmatpush2.msra.mxu0 0.0
    %3876 = vmatprep.subr.mxu0 0.0
    %3877 = vmatpush2.msra.mxu0 0.0
    %3878 = vmatprep.subr.mxu0 0.0
    %3879 = vmatpush2.msra.mxu0 0.0
    %3880 = vmatprep.subr.mxu0 0.0
    %3881 = vmatpush2.msra.mxu0 0.0
    %3882 = vmatprep.subr.mxu0 0.0
    %3883 = vmatpush2.msra.mxu0 0.0
    %3884 = vmatprep.subr.mxu0 0.0
    %3885 = vmatpush2.msra.mxu0 0.0
    %3886 = vmatprep.mubr.f32.mxu0 0.0
    %3887 = vmatmul.mubr.f32.gmra.mxu0 %v3817
    %v3888 = vpop.f32.mrf.mxu0
    %v3889 = vadd.f32 %v3814, %v3888
    %v3890 = vpop.f32.mrf.mxu0
    %3891 = vmatprep.mubr.f32.mxu0 0.0
    %3892 = vmatmul.mubr.f32.gmra.mxu0 %v3820
    %v3893 = vpop.f32.mrf.mxu0
    %v3894 = vadd.f32 %v3814, %v3893
    %v3895 = vpop.f32.mrf.mxu0
    %3896 = vdwg.mxu0
    %v3898 = vsel %vm887, %v3889, 0
    %v3901 = vsel %vm887, %v3894, 0
    %3903 = vmatprep.subr.mxu0 0.0
    %3904 = vmatpush1.msra.mxu0 0.0
    %3905 = vmatprep.subr.mxu0 0.0
    %3906 = vmatpush1.msra.mxu0 0.0
    %3907 = vmatprep.subr.mxu0 0.0
    %3908 = vmatpush1.msra.mxu0 0.0
    %3909 = vmatprep.subr.mxu0 0.0
    %3910 = vmatpush1.msra.mxu0 0.0
    %3911 = vmatprep.subr.mxu0 0.0
    %3912 = vmatpush1.msra.mxu0 0.0
    %3913 = vmatprep.subr.mxu0 0.0
    %3914 = vmatpush1.msra.mxu0 0.0
    %3915 = vmatprep.subr.mxu0 0.0
    %3916 = vmatpush1.msra.mxu0 0.0
    %3917 = vmatprep.subr.mxu0 0.0
    %3918 = vmatpush1.msra.mxu0 0.0
    %3919 = vmatprep.subr.mxu0 0.0
    %3920 = vmatpush1.msra.mxu0 0.0
    %3921 = vmatprep.subr.mxu0 0.0
    %3922 = vmatpush1.msra.mxu0 0.0
    %3923 = vmatprep.subr.mxu0 0.0
    %3924 = vmatpush1.msra.mxu0 0.0
    %3925 = vmatprep.subr.mxu0 0.0
    %3926 = vmatpush1.msra.mxu0 0.0
    %3927 = vmatprep.subr.mxu0 0.0
    %3928 = vmatpush1.msra.mxu0 %v767
    %3929 = vmatprep.subr.mxu0 0.0
    %3930 = vmatpush1.msra.mxu0 %v766
    %3931 = vmatprep.subr.mxu0 0.0
    %3932 = vmatpush1.msra.mxu0 %v765
    %3933 = vmatprep.subr.mxu0 0.0
    %3934 = vmatpush1.msra.mxu0 %v764
    %3935 = vmatprep.subr.mxu0 0.0
    %3936 = vmatpush2.msra.mxu0 0.0
    %3937 = vmatprep.subr.mxu0 0.0
    %3938 = vmatpush2.msra.mxu0 0.0
    %3939 = vmatprep.subr.mxu0 0.0
    %3940 = vmatpush2.msra.mxu0 0.0
    %3941 = vmatprep.subr.mxu0 0.0
    %3942 = vmatpush2.msra.mxu0 0.0
    %3943 = vmatprep.subr.mxu0 0.0
    %3944 = vmatpush2.msra.mxu0 0.0
    %3945 = vmatprep.subr.mxu0 0.0
    %3946 = vmatpush2.msra.mxu0 0.0
    %3947 = vmatprep.subr.mxu0 0.0
    %3948 = vmatpush2.msra.mxu0 0.0
    %3949 = vmatprep.subr.mxu0 0.0
    %3950 = vmatpush2.msra.mxu0 0.0
    %3951 = vmatprep.subr.mxu0 0.0
    %3952 = vmatpush2.msra.mxu0 0.0
    %3953 = vmatprep.subr.mxu0 0.0
    %3954 = vmatpush2.msra.mxu0 0.0
    %3955 = vmatprep.subr.mxu0 0.0
    %3956 = vmatpush2.msra.mxu0 0.0
    %3957 = vmatprep.subr.mxu0 0.0
    %3958 = vmatpush2.msra.mxu0 0.0
    %3959 = vmatprep.subr.mxu0 0.0
    %3960 = vmatpush2.msra.mxu0 0.0
    %3961 = vmatprep.subr.mxu0 0.0
    %3962 = vmatpush2.msra.mxu0 0.0
    %3963 = vmatprep.subr.mxu0 0.0
    %3964 = vmatpush2.msra.mxu0 0.0
    %3965 = vmatprep.subr.mxu0 0.0
    %3966 = vmatpush2.msra.mxu0 0.0
    %3967 = vmatprep.mubr.f32.mxu0 0.0
    %3968 = vmatmul.mubr.f32.gmra.mxu0 %v3898
    %v3969 = vpop.f32.mrf.mxu0
    %v3970 = vadd.f32 0.0, %v3969
    %v3971 = vpop.f32.mrf.mxu0
    %3972 = vmatprep.mubr.f32.mxu0 0.0
    %3973 = vmatmul.mubr.f32.gmra.mxu0 %v3901
    %v3974 = vpop.f32.mrf.mxu0
    %v3975 = vadd.f32 0.0, %v3974
    %v3976 = vpop.f32.mrf.mxu0
    %3977 = vdwg.mxu0
    %v3979 = vsel %vm887, %v1140, 0
    %v3982 = vsel %vm887, %v1145, 0
    %3984 = vmatprep.subr.mxu0 0.0
    %3985 = vmatpush1.msra.mxu0 0.0
    %3986 = vmatprep.subr.mxu0 0.0
    %3987 = vmatpush1.msra.mxu0 0.0
    %3988 = vmatprep.subr.mxu0 0.0
    %3989 = vmatpush1.msra.mxu0 0.0
    %3990 = vmatprep.subr.mxu0 0.0
    %3991 = vmatpush1.msra.mxu0 0.0
    %3992 = vmatprep.subr.mxu0 0.0
    %3993 = vmatpush1.msra.mxu0 0.0
    %3994 = vmatprep.subr.mxu0 0.0
    %3995 = vmatpush1.msra.mxu0 0.0
    %3996 = vmatprep.subr.mxu0 0.0
    %3997 = vmatpush1.msra.mxu0 0.0
    %3998 = vmatprep.subr.mxu0 0.0
    %3999 = vmatpush1.msra.mxu0 0.0
    %4000 = vmatprep.subr.mxu0 0.0
    %4001 = vmatpush1.msra.mxu0 0.0
    %4002 = vmatprep.subr.mxu0 0.0
    %4003 = vmatpush1.msra.mxu0 0.0
    %4004 = vmatprep.subr.mxu0 0.0
    %4005 = vmatpush1.msra.mxu0 0.0
    %4006 = vmatprep.subr.mxu0 0.0
    %4007 = vmatpush1.msra.mxu0 0.0
    %4008 = vmatprep.subr.mxu0 0.0
    %4009 = vmatpush1.msra.mxu0 %v763
    %4010 = vmatprep.subr.mxu0 0.0
    %4011 = vmatpush1.msra.mxu0 %v762
    %4012 = vmatprep.subr.mxu0 0.0
    %4013 = vmatpush1.msra.mxu0 %v761
    %4014 = vmatprep.subr.mxu0 0.0
    %4015 = vmatpush1.msra.mxu0 %v760
    %4016 = vmatprep.subr.mxu0 0.0
    %4017 = vmatpush2.msra.mxu0 0.0
    %4018 = vmatprep.subr.mxu0 0.0
    %4019 = vmatpush2.msra.mxu0 0.0
    %4020 = vmatprep.subr.mxu0 0.0
    %4021 = vmatpush2.msra.mxu0 0.0
    %4022 = vmatprep.subr.mxu0 0.0
    %4023 = vmatpush2.msra.mxu0 0.0
    %4024 = vmatprep.subr.mxu0 0.0
    %4025 = vmatpush2.msra.mxu0 0.0
    %4026 = vmatprep.subr.mxu0 0.0
    %4027 = vmatpush2.msra.mxu0 0.0
    %4028 = vmatprep.subr.mxu0 0.0
    %4029 = vmatpush2.msra.mxu0 0.0
    %4030 = vmatprep.subr.mxu0 0.0
    %4031 = vmatpush2.msra.mxu0 0.0
    %4032 = vmatprep.subr.mxu0 0.0
    %4033 = vmatpush2.msra.mxu0 0.0
    %4034 = vmatprep.subr.mxu0 0.0
    %4035 = vmatpush2.msra.mxu0 0.0
    %4036 = vmatprep.subr.mxu0 0.0
    %4037 = vmatpush2.msra.mxu0 0.0
    %4038 = vmatprep.subr.mxu0 0.0
    %4039 = vmatpush2.msra.mxu0 0.0
    %4040 = vmatprep.subr.mxu0 0.0
    %4041 = vmatpush2.msra.mxu0 0.0
    %4042 = vmatprep.subr.mxu0 0.0
    %4043 = vmatpush2.msra.mxu0 0.0
    %4044 = vmatprep.subr.mxu0 0.0
    %4045 = vmatpush2.msra.mxu0 0.0
    %4046 = vmatprep.subr.mxu0 0.0
    %4047 = vmatpush2.msra.mxu0 0.0
    %4048 = vmatprep.mubr.f32.mxu0 0.0
    %4049 = vmatmul.mubr.f32.gmra.mxu0 %v3979
    %v4050 = vpop.f32.mrf.mxu0
    %v4051 = vadd.f32 %v3970, %v4050
    %v4052 = vpop.f32.mrf.mxu0
    %4053 = vmatprep.mubr.f32.mxu0 0.0
    %4054 = vmatmul.mubr.f32.gmra.mxu0 %v3982
    %v4055 = vpop.f32.mrf.mxu0
    %v4056 = vadd.f32 %v3975, %v4055
    %v4057 = vpop.f32.mrf.mxu0
    %4058 = vdwg.mxu0
    %v4060 = vlaneseq
    %v4061 = vshrl.u32 %v4060, 7
    %v4062 = vsub.s32 0, %v4061
    %v4063 = vrot.slane %v768, %v4062
    %v4065 = vadd.f32 %v4051, %v4063
    %v4066 = vadd.f32 %v4056, %v4063
    %v4067 = vmax.f32 %v4065, 0.0
    %v4068 = vmax.f32 %v4066, 0.0
    %v4070 = vlaneseq
    %v4071 = vshrl.u32 %v4070, 7
    %v4072 = vsub.s32 0, %v4071
    %v4073 = vrot.slane %v777, %v4072
    %v4076 = vsel %vm1066, %v4067, 0
    %v4079 = vsel %vm1066, %v4068, 0
    %4081 = vmatprep.subr.mxu0 0.0
    %4082 = vmatpush1.msra.mxu0 0.0
    %4083 = vmatprep.subr.mxu0 0.0
    %4084 = vmatpush1.msra.mxu0 0.0
    %4085 = vmatprep.subr.mxu0 0.0
    %4086 = vmatpush1.msra.mxu0 0.0
    %4087 = vmatprep.subr.mxu0 0.0
    %4088 = vmatpush1.msra.mxu0 0.0
    %4089 = vmatprep.subr.mxu0 0.0
    %4090 = vmatpush1.msra.mxu0 0.0
    %4091 = vmatprep.subr.mxu0 0.0
    %4092 = vmatpush1.msra.mxu0 0.0
    %4093 = vmatprep.subr.mxu0 0.0
    %4094 = vmatpush1.msra.mxu0 0.0
    %4095 = vmatprep.subr.mxu0 0.0
    %4096 = vmatpush1.msra.mxu0 0.0
    %4097 = vmatprep.subr.mxu0 0.0
    %4098 = vmatpush1.msra.mxu0 %v776
    %4099 = vmatprep.subr.mxu0 0.0
    %4100 = vmatpush1.msra.mxu0 %v775
    %4101 = vmatprep.subr.mxu0 0.0
    %4102 = vmatpush1.msra.mxu0 %v774
    %4103 = vmatprep.subr.mxu0 0.0
    %4104 = vmatpush1.msra.mxu0 %v773
    %4105 = vmatprep.subr.mxu0 0.0
    %4106 = vmatpush1.msra.mxu0 %v772
    %4107 = vmatprep.subr.mxu0 0.0
    %4108 = vmatpush1.msra.mxu0 %v771
    %4109 = vmatprep.subr.mxu0 0.0
    %4110 = vmatpush1.msra.mxu0 %v770
    %4111 = vmatprep.subr.mxu0 0.0
    %4112 = vmatpush1.msra.mxu0 %v769
    %4113 = vmatprep.subr.mxu0 0.0
    %4114 = vmatpush2.msra.mxu0 0.0
    %4115 = vmatprep.subr.mxu0 0.0
    %4116 = vmatpush2.msra.mxu0 0.0
    %4117 = vmatprep.subr.mxu0 0.0
    %4118 = vmatpush2.msra.mxu0 0.0
    %4119 = vmatprep.subr.mxu0 0.0
    %4120 = vmatpush2.msra.mxu0 0.0
    %4121 = vmatprep.subr.mxu0 0.0
    %4122 = vmatpush2.msra.mxu0 0.0
    %4123 = vmatprep.subr.mxu0 0.0
    %4124 = vmatpush2.msra.mxu0 0.0
    %4125 = vmatprep.subr.mxu0 0.0
    %4126 = vmatpush2.msra.mxu0 0.0
    %4127 = vmatprep.subr.mxu0 0.0
    %4128 = vmatpush2.msra.mxu0 0.0
    %4129 = vmatprep.subr.mxu0 0.0
    %4130 = vmatpush2.msra.mxu0 0.0
    %4131 = vmatprep.subr.mxu0 0.0
    %4132 = vmatpush2.msra.mxu0 0.0
    %4133 = vmatprep.subr.mxu0 0.0
    %4134 = vmatpush2.msra.mxu0 0.0
    %4135 = vmatprep.subr.mxu0 0.0
    %4136 = vmatpush2.msra.mxu0 0.0
    %4137 = vmatprep.subr.mxu0 0.0
    %4138 = vmatpush2.msra.mxu0 0.0
    %4139 = vmatprep.subr.mxu0 0.0
    %4140 = vmatpush2.msra.mxu0 0.0
    %4141 = vmatprep.subr.mxu0 0.0
    %4142 = vmatpush2.msra.mxu0 0.0
    %4143 = vmatprep.subr.mxu0 0.0
    %4144 = vmatpush2.msra.mxu0 0.0
    %4145 = vmatprep.mubr.f32.mxu0 0.0
    %4146 = vmatmul.mubr.f32.gmra.mxu0 %v4076
    %v4147 = vpop.f32.mrf.mxu0
    %v4148 = vadd.f32 %v4073, %v4147
    %v4149 = vpop.f32.mrf.mxu0
    %4150 = vmatprep.mubr.f32.mxu0 0.0
    %4151 = vmatmul.mubr.f32.gmra.mxu0 %v4079
    %v4152 = vpop.f32.mrf.mxu0
    %v4153 = vadd.f32 %v4073, %v4152
    %v4154 = vpop.f32.mrf.mxu0
    %4155 = vdwg.mxu0
    %v4156 = vmax.f32 %v4148, 0.0
    %v4157 = vmax.f32 %v4153, 0.0
    %v4159 = vlaneseq
    %v4160 = vshrl.u32 %v4159, 7
    %v4161 = vsub.s32 0, %v4160
    %v4162 = vrot.slane %v786, %v4161
    %v4165 = vsel %vm1066, %v4156, 0
    %v4168 = vsel %vm1066, %v4157, 0
    %4170 = vmatprep.subr.mxu0 0.0
    %4171 = vmatpush1.msra.mxu0 0.0
    %4172 = vmatprep.subr.mxu0 0.0
    %4173 = vmatpush1.msra.mxu0 0.0
    %4174 = vmatprep.subr.mxu0 0.0
    %4175 = vmatpush1.msra.mxu0 0.0
    %4176 = vmatprep.subr.mxu0 0.0
    %4177 = vmatpush1.msra.mxu0 0.0
    %4178 = vmatprep.subr.mxu0 0.0
    %4179 = vmatpush1.msra.mxu0 0.0
    %4180 = vmatprep.subr.mxu0 0.0
    %4181 = vmatpush1.msra.mxu0 0.0
    %4182 = vmatprep.subr.mxu0 0.0
    %4183 = vmatpush1.msra.mxu0 0.0
    %4184 = vmatprep.subr.mxu0 0.0
    %4185 = vmatpush1.msra.mxu0 0.0
    %4186 = vmatprep.subr.mxu0 0.0
    %4187 = vmatpush1.msra.mxu0 %v785
    %4188 = vmatprep.subr.mxu0 0.0
    %4189 = vmatpush1.msra.mxu0 %v784
    %4190 = vmatprep.subr.mxu0 0.0
    %4191 = vmatpush1.msra.mxu0 %v783
    %4192 = vmatprep.subr.mxu0 0.0
    %4193 = vmatpush1.msra.mxu0 %v782
    %4194 = vmatprep.subr.mxu0 0.0
    %4195 = vmatpush1.msra.mxu0 %v781
    %4196 = vmatprep.subr.mxu0 0.0
    %4197 = vmatpush1.msra.mxu0 %v780
    %4198 = vmatprep.subr.mxu0 0.0
    %4199 = vmatpush1.msra.mxu0 %v779
    %4200 = vmatprep.subr.mxu0 0.0
    %4201 = vmatpush1.msra.mxu0 %v778
    %4202 = vmatprep.subr.mxu0 0.0
    %4203 = vmatpush2.msra.mxu0 0.0
    %4204 = vmatprep.subr.mxu0 0.0
    %4205 = vmatpush2.msra.mxu0 0.0
    %4206 = vmatprep.subr.mxu0 0.0
    %4207 = vmatpush2.msra.mxu0 0.0
    %4208 = vmatprep.subr.mxu0 0.0
    %4209 = vmatpush2.msra.mxu0 0.0
    %4210 = vmatprep.subr.mxu0 0.0
    %4211 = vmatpush2.msra.mxu0 0.0
    %4212 = vmatprep.subr.mxu0 0.0
    %4213 = vmatpush2.msra.mxu0 0.0
    %4214 = vmatprep.subr.mxu0 0.0
    %4215 = vmatpush2.msra.mxu0 0.0
    %4216 = vmatprep.subr.mxu0 0.0
    %4217 = vmatpush2.msra.mxu0 0.0
    %4218 = vmatprep.subr.mxu0 0.0
    %4219 = vmatpush2.msra.mxu0 0.0
    %4220 = vmatprep.subr.mxu0 0.0
    %4221 = vmatpush2.msra.mxu0 0.0
    %4222 = vmatprep.subr.mxu0 0.0
    %4223 = vmatpush2.msra.mxu0 0.0
    %4224 = vmatprep.subr.mxu0 0.0
    %4225 = vmatpush2.msra.mxu0 0.0
    %4226 = vmatprep.subr.mxu0 0.0
    %4227 = vmatpush2.msra.mxu0 0.0
    %4228 = vmatprep.subr.mxu0 0.0
    %4229 = vmatpush2.msra.mxu0 0.0
    %4230 = vmatprep.subr.mxu0 0.0
    %4231 = vmatpush2.msra.mxu0 0.0
    %4232 = vmatprep.subr.mxu0 0.0
    %4233 = vmatpush2.msra.mxu0 0.0
    %4234 = vmatprep.mubr.f32.mxu0 0.0
    %4235 = vmatmul.mubr.f32.gmra.mxu0 %v4165
    %v4236 = vpop.f32.mrf.mxu0
    %v4237 = vadd.f32 %v4162, %v4236
    %v4238 = vpop.f32.mrf.mxu0
    %4239 = vmatprep.mubr.f32.mxu0 0.0
    %4240 = vmatmul.mubr.f32.gmra.mxu0 %v4168
    %v4241 = vpop.f32.mrf.mxu0
    %v4242 = vadd.f32 %v4162, %v4241
    %v4243 = vpop.f32.mrf.mxu0
    %4244 = vdwg.mxu0
    %4247 = vrot.lane.b32.xlu0 %v4237, 32
    %v4248 = vpop.permute.xlu0 %4247
    %4249 = vrot.lane.b32.xlu0 %v4242, 32
    %v4250 = vpop.permute.xlu0 %4249
    %4255 = vrot.lane.b32.xlu0 %v2492, 64
    %v4256 = vpop.permute.xlu0 %4255
    %4257 = vrot.lane.b32.xlu0 %v2497, 64
    %v4258 = vpop.permute.xlu0 %4257
    %4263 = vrot.lane.b32.xlu0 %v3474, 96
    %v4264 = vpop.permute.xlu0 %4263
    %4265 = vrot.lane.b32.xlu0 %v3479, 96
    %v4266 = vpop.permute.xlu0 %4265
    %v4269 = vsel %vm887, %v1480, %v4248
    %v4270 = vsel %vm887, %v1485, %v4250
    %v4271 = vsel %vm1066, %v4269, %v4256
    %v4272 = vsel %vm1066, %v4270, %v4258
    %vm4273 = vcmask 785408
    %v4274 = vsel %vm4273, %v4271, %v4264
    %v4275 = vsel %vm4273, %v4272, %v4266
    %4276 = vst [vmem:[%s89] sm:$0xff] %v4274
    %4277 = vst [vmem:[%s89 + $0x8] sm:$0xff] %v4275
    // Predicated region
    $region318: #{forward.1} parent=1 // pred_check
      _
    $region319: #{forward.1} parent=1 // pred_check_branch
      %4279 = sbr.rel (0) target = $region321
    $region320: #{forward.1} parent=1 // pred_region
      _
    $region321: #{forward.1} parent=1 // pred_fallthru
      _
    // Predicated region
    $region322: #{forward.1} parent=1 // pred_check
      _
    $region323: #{forward.1} parent=1 // pred_check_branch
      %4281 = sbr.rel (0) target = $region325
    $region324: #{forward.1} parent=1 // pred_region
      _
    $region325: #{forward.1} parent=1 // pred_fallthru
      _
    %4282 = vsyncpa [#allocation3], 1
    %4283 = vsyncpa [#allocation5], 1
    %4284 = vsyncpa [#allocation8], 1
    %4285 = vsyncpa [#allocation11], 1
    %4286 = vsyncpa [#allocation14], 1
    %4287 = vsyncpa [#allocation17], 1
    %4288 = vsyncpa [#allocation20], 1
    %4289 = vsyncpa [#allocation23], 1
    %4290 = vsyncpa [#allocation26], 1
    %4291 = vsyncpa [#allocation29], 1
    %4292 = vsyncpa [#allocation32], 1
    %4293 = vsyncpa [#allocation35], 1
    %4294 = vsyncpa [#allocation38], 1
    %4295 = vsyncpa [#allocation41], 1
    %4296 = vsyncpa [#allocation44], 1
    %4297 = vsyncpa [#allocation47], 1
    %4298 = vsyncpa [#allocation50], 1
    %4299 = vsyncpa [#allocation53], 1

</llo_original>
